<compile_context>
chip_gen: v7x
topology: tpu7x:2x2x1
jax: 0.10.0
libtpu: 0.0.40
codegen_flags: <defaults>
</compile_context>

<pallas_src>
import jax
import jax.numpy as jnp
from jax import lax
from jax.experimental import pallas as pl
from jax.experimental.pallas import tpu as pltpu

NC = 1
NGF = 8
NZ = 32
KERNELS = [4, 4, 4, 4, 4, 4]
STRIDES = [1, 2, 2, 2, 2, 2]
PADS = [0, 1, 1, 1, 1, 1]
EPS = 1e-5
CHANNELS = [NZ, NGF * 16, NGF * 8, NGF * 4, NGF * 2, NGF, NC]

VMEM_LIMIT_BYTES = 32 * 1024 * 1024      # safe on v5e/v6e (128 MiB) and v7x (64 MiB)
TILE_BUDGET_BYTES = 4 * 1024 * 1024      # per-tile footprint cap


# ---------------------------------------------------------------------------
# Pallas kernels
# ---------------------------------------------------------------------------
def _bn_relu_matmul_kernel(x_ref, scale_ref, shift_ref, w_ref, o_ref):
    """Previous layer's BN affine + ReLU fused on the input tile, then bf16 MXU matmul."""
    x = jnp.maximum(x_ref[...] * scale_ref[...] + shift_ref[...], 0.0)
    o_ref[...] = jnp.dot(x.astype(jnp.bfloat16), w_ref[...],
                         preferred_element_type=jnp.float32)


def _bn_relu_matmul_t_kernel(xt_ref, scale_ref, shift_ref, wt_ref, o_ref):
    """Transposed variant for the last layer: lane-dense out[kout, m], f32 matmul."""
    x = jnp.maximum(xt_ref[...] * scale_ref[...] + shift_ref[...], 0.0)   # [Cin, tile]
    o_ref[...] = jnp.dot(wt_ref[...], x, preferred_element_type=jnp.float32)


# ---------------------------------------------------------------------------
# Tiling helper + pallas_call wrappers
# ---------------------------------------------------------------------------
def _pick_tm(m, row_bytes):
    """Row tile: >=2 grid steps on big layers (v7x megacore) and bounded VMEM tile."""
    tm = m
    if m >= 512:
        tm = m // 2                       # let ("parallel",) shard across 2 TensorCores
    while tm * row_bytes > TILE_BUDGET_BYTES and tm % 16 == 0:
        tm //= 2
    assert m % tm == 0 and (tm == m or tm % 8 == 0), (m, tm)
    assert tm * row_bytes <= TILE_BUDGET_BYTES or tm == m, (m, tm, row_bytes)
    return tm


def bn_relu_matmul(x_flat, scale, shift, wmat_bf16):
    """relu(x*scale+shift) @ W  with W bf16 resident in VMEM.  Output [M, k*k*Cout] f32."""
    m, cin = x_flat.shape
    _, kout = wmat_bf16.shape
    row_bytes = 4 * cin + 2 * cin + 4 * kout          # f32 in + bf16 copy + f32 out
    tm = _pick_tm(m, row_bytes)
    return pl.pallas_call(
        _bn_relu_matmul_kernel,
        out_shape=jax.ShapeDtypeStruct((m, kout), jnp.float32),
        grid=(m // tm,),
        in_specs=[pl.BlockSpec((tm, cin), lambda i: (i, 0)),
                  pl.BlockSpec((1, cin), lambda i: (0, 0)),
                  pl.BlockSpec((1, cin), lambda i: (0, 0)),
                  pl.BlockSpec((cin, kout), lambda i: (0, 0))],     # weight resident
        out_specs=pl.BlockSpec((tm, kout), lambda i: (i, 0)),
        compiler_params=pltpu.CompilerParams(
            dimension_semantics=("parallel",),
            vmem_limit_bytes=VMEM_LIMIT_BYTES),
    )(x_flat, scale, shift, wmat_bf16)


def bn_relu_matmul_t(xt, scale_col, shift_col, wt_f32):
    """Last layer, lane-dense: out[kout, m] = W_T @ relu(x_T*scale+shift).  f32."""
    cin, m = xt.shape
    kout, _ = wt_f32.shape
    tn = m // 2 if (m >= 1024 and m % 256 == 0) else m    # 2 lane tiles for v7x megacore
    return pl.pallas_call(
        _bn_relu_matmul_t_kernel,
        out_shape=jax.ShapeDtypeStruct((kout, m), jnp.float32),
        grid=(m // tn,),
        in_specs=[pl.BlockSpec((cin, tn), lambda j: (0, j)),
                  pl.BlockSpec((cin, 1), lambda j: (0, 0)),
                  pl.BlockSpec((cin, 1), lambda j: (0, 0)),
                  pl.BlockSpec((kout, cin), lambda j: (0, 0))],
        out_specs=pl.BlockSpec((kout, tn), lambda j: (0, j)),
        compiler_params=pltpu.CompilerParams(
            dimension_semantics=("parallel",),
            vmem_limit_bytes=VMEM_LIMIT_BYTES),
    )(xt, scale_col, shift_col, wt_f32)


# ---------------------------------------------------------------------------
# Scatter-free col2im (k=4, s=2, p=1) + BN-stat / layer-0 XLA glue
# ---------------------------------------------------------------------------
def _shift2d(a, dy, dx):
    """b[n, r, c, :] = a[n, r+dy, c+dx, :] with zero padding; dy, dx in {-1, 0, 1}."""
    sl_h = slice(1, None) if dy == 1 else (slice(None, -1) if dy == -1 else slice(None))
    sl_w = slice(1, None) if dx == 1 else (slice(None, -1) if dx == -1 else slice(None))
    pads = [(0, 0), (max(-dy, 0), max(dy, 0)), (max(-dx, 0), max(dx, 0)), (0, 0)]
    return jnp.pad(a[:, sl_h, sl_w, :], pads)


# output row 2r+dy receives taps:  dy=0 -> (ky=1, shift 0), (ky=3, shift -1)
#                                  dy=1 -> (ky=0, shift +1), (ky=2, shift 0)
_PHASE_TAPS = {0: ((1, 0), (3, -1)), 1: ((0, 1), (2, 0))}


def col2im_s2_k4_p1(taps, n, h, w, c):
    """taps: list of 16 arrays [N,H,W,C] (index ky*4+kx).  Returns [N, 2H, 2W, C]."""
    rows = []
    for dy in (0, 1):
        cols = []
        for dx in (0, 1):
            acc = jnp.zeros((n, h, w, c), jnp.float32)
            for ky, sy in _PHASE_TAPS[dy]:
                for kx, sx in _PHASE_TAPS[dx]:
                    acc = acc + _shift2d(taps[ky * 4 + kx], sy, sx)
            cols.append(acc)
        rows.append(jnp.stack(cols, axis=3))          # [N, H, W, 2, C]
    out = jnp.stack(rows, axis=2)                     # [N, H, 2, W, 2, C]
    return out.reshape(n, 2 * h, 2 * w, c)


def bn_scale_shift(y, gamma, beta):
    """Training-mode BatchNorm batch stats (biased var) folded into scale/shift."""
    cnt = y.shape[0] * y.shape[1] * y.shape[2]
    s1 = jnp.sum(y, axis=(0, 1, 2))
    s2 = jnp.sum(y * y, axis=(0, 1, 2))               # single fused sum/sumsq pass
    mean = s1 / cnt
    var = s2 / cnt - mean * mean
    scale = gamma * lax.rsqrt(var + EPS)
    return scale, beta - mean * scale


def prepare_weights(weights):
    """torch ConvTranspose2d weights [Cin, Cout, k, k] -> matmul matrices (done once)."""
    mats = []
    for w in weights:
        cin, cout, k, _ = w.shape
        mats.append(jnp.transpose(w, (0, 2, 3, 1)).reshape(cin, k * k * cout))
    return {"w0": mats[0].astype(jnp.float32),                    # layer 0: XLA f32 matmul
            "w_mid": [m.astype(jnp.bfloat16) for m in mats[1:5]],  # layers 1-4: bf16 MXU
            "w5_t": mats[5].T.astype(jnp.float32)}                 # layer 5: [16, Cin] f32


# ---------------------------------------------------------------------------
# Full _netG forward (Pallas path) and a pure-JAX reference
# ---------------------------------------------------------------------------
def netG_forward(x_nchw, params, prep=None):
    if prep is None:
        prep = prepare_weights(params["weights"])
    n = x_nchw.shape[0]
    z = x_nchw.astype(jnp.float32).reshape(n, NZ)

    # layer 0: 1x1 spatial ConvTranspose == plain matmul (negligible FLOPs -> XLA)
    k0 = KERNELS[0]
    y = jnp.dot(z, prep["w0"], precision=lax.Precision.HIGHEST)
    y = y.reshape(n, k0, k0, CHANNELS[1])                        # NHWC, (ky,kx,co) order

    # layers 1..4: fused BN+ReLU+matmul Pallas kernel, scatter-free XLA col2im epilogue
    for i in range(1, 5):
        assert (KERNELS[i], STRIDES[i], PADS[i]) == (4, 2, 1)
        _, h, w, cin = y.shape
        cout = CHANNELS[i + 1]
        scale, shift = bn_scale_shift(y, params["gammas"][i - 1], params["betas"][i - 1])
        y_cols = bn_relu_matmul(y.reshape(n * h * w, cin),
                                scale[None, :], shift[None, :], prep["w_mid"][i - 1])
        y6 = y_cols.reshape(n, h, w, 16, cout)
        y = col2im_s2_k4_p1([y6[:, :, :, t, :] for t in range(16)], n, h, w, cout)

    # layer 5: transposed (lane-dense) matmul kernel, col2im + tanh epilogue
    assert (KERNELS[5], STRIDES[5], PADS[5]) == (4, 2, 1)
    _, h, w, cin = y.shape
    scale, shift = bn_scale_shift(y, params["gammas"][4], params["betas"][4])
    xt = y.reshape(n * h * w, cin).T                              # [Cin, M]
    y_cols_t = bn_relu_matmul_t(xt, scale[:, None], shift[:, None], prep["w5_t"])
    taps = [y_cols_t[t].reshape(n, h, w, NC) for t in range(16)]
    out = jnp.tanh(col2im_s2_k4_p1(taps, n, h, w, NC))            # [N, 2H, 2W, nc]
    return jnp.transpose(out, (0, 3, 1, 2))                       # back to NCHW


def netG_reference(x_nchw, params):
    x = jnp.transpose(x_nchw, (0, 2, 3, 1)).astype(jnp.float32)
    n_layers = len(params["weights"])
    for i in range(n_layers):
        w = params["weights"][i]
        k, s, p = KERNELS[i], STRIDES[i], PADS[i]
        rhs = jnp.transpose(jnp.flip(w, (2, 3)), (2, 3, 0, 1))    # HWIO
        y = jax.lax.conv_general_dilated(
            x, rhs, window_strides=(1, 1),
            padding=[(k - 1 - p,) * 2, (k - 1 - p,) * 2],
            lhs_dilation=(s, s),
            dimension_numbers=("NHWC", "HWIO", "NHWC"),
            precision=jax.lax.Precision.HIGHEST)
        if i < n_layers - 1:
            mean = jnp.mean(y, axis=(0, 1, 2))
            var = jnp.mean(y * y, axis=(0, 1, 2)) - mean * mean
            yn = (y - mean) / jnp.sqrt(var + EPS) * params["gammas"][i] + params["betas"][i]
            x = jnp.maximum(yn, 0.0)
        else:
            x = jnp.tanh(y)
    return jnp.transpose(x, (0, 3, 1, 2))


def init_params(key):
    weights, gammas, betas = [], [], []
    for i in range(6):
        key, sub = jax.random.split(key)
        # torch ConvTranspose2d weight layout: [Cin, Cout, k, k]  (DCGAN 0.02 init)
        w = 0.02 * jax.random.normal(
            sub, (CHANNELS[i], CHANNELS[i + 1], KERNELS[i], KERNELS[i]), jnp.float32)
        weights.append(w)
        if i < 5:
            gammas.append(jnp.ones((CHANNELS[i + 1],), jnp.float32))   # torch BN init
            betas.append(jnp.zeros((CHANNELS[i + 1],), jnp.float32))
    return {"weights": weights, "gammas": gammas, "betas": betas}


if __name__ == "__main__":
    key = jax.random.PRNGKey(0)
    kp, kx = jax.random.split(key)
    params = init_params(kp)
    prep = prepare_weights(params["weights"])          # weight prep once, not per forward
    x = jax.random.normal(kx, (2, NZ, 1, 1), jnp.float32)   # batch=2, nz=32, 1x1

    fwd = jax.jit(netG_forward)
    out = jax.block_until_ready(fwd(x, params, prep))

    assert out.shape == (2, NC, 128, 128), out.shape
    assert bool(jnp.all(jnp.isfinite(out)))

    ref = jax.block_until_ready(netG_reference(x, params))
    assert bool(jnp.allclose(out, ref, rtol=5e-2, atol=5e-2)), (
        float(jnp.max(jnp.abs(out - ref))))

    print("KERNEL_OK")
</pallas_src>

<mosaic_0001>
module attributes {stable_mosaic.version = 11 : i64} {
  func.func @_bn_relu_matmul_kernel(%arg0: i32, %arg1: memref<32x128xf32, #tpu.memory_space<vmem>>, %arg2: memref<1x128xf32, #tpu.memory_space<vmem>>, %arg3: memref<1x128xf32, #tpu.memory_space<vmem>>, %arg4: memref<128x1024xbf16, #tpu.memory_space<vmem>>, %arg5: memref<32x1024xf32, #tpu.memory_space<vmem>>) attributes {dimension_semantics = [#tpu.dimension_semantics<parallel>], iteration_bounds = array<i64: 1>, scalar_prefetch = 0 : i64, scratch_operands = 0 : i64, tpu.core_type = #tpu.core_type<tc>, window_params = [{transform_indices = @transform_0, window_bounds = array<i64: 32, 128>}, {pipeline_mode = #tpu.pipeline_mode<synchronous>, transform_indices = @transform_1, window_bounds = array<i64: 1, 128>}, {pipeline_mode = #tpu.pipeline_mode<synchronous>, transform_indices = @transform_2, window_bounds = array<i64: 1, 128>}, {pipeline_mode = #tpu.pipeline_mode<synchronous>, transform_indices = @transform_3, window_bounds = array<i64: 128, 1024>}, {transform_indices = @transform_4, window_bounds = array<i64: 32, 1024>}]} {
    %c0 = arith.constant 0 : index
    %c0_0 = arith.constant 0 : index
    %0 = vector.load %arg1[%c0, %c0_0] : memref<32x128xf32, #tpu.memory_space<vmem>>, vector<32x128xf32>
    %c0_1 = arith.constant 0 : index
    %c0_2 = arith.constant 0 : index
    %1 = vector.load %arg2[%c0_1, %c0_2] : memref<1x128xf32, #tpu.memory_space<vmem>>, vector<1x128xf32>
    %2 = vector.broadcast %1 : vector<1x128xf32> to vector<32x128xf32>
    %3 = arith.mulf %0, %2 : vector<32x128xf32>
    %c0_3 = arith.constant 0 : index
    %c0_4 = arith.constant 0 : index
    %4 = vector.load %arg3[%c0_3, %c0_4] : memref<1x128xf32, #tpu.memory_space<vmem>>, vector<1x128xf32>
    %5 = vector.broadcast %4 : vector<1x128xf32> to vector<32x128xf32>
    %6 = arith.addf %3, %5 : vector<32x128xf32>
    %cst = arith.constant 0.000000e+00 : f32
    %7 = vector.broadcast %cst : f32 to vector<32x128xf32>
    %8 = arith.maximumf %6, %7 : vector<32x128xf32>
    %9 = arith.truncf %8 : vector<32x128xf32> to vector<32x128xbf16>
    %c0_5 = arith.constant 0 : index
    %c0_6 = arith.constant 0 : index
    %10 = vector.load %arg4[%c0_5, %c0_6] : memref<128x1024xbf16, #tpu.memory_space<vmem>>, vector<128x1024xbf16>
    %cst_7 = arith.constant dense<0.000000e+00> : vector<32x1024xf32>
    %11 = tpu.matmul %9, %10, %cst_7 {dimension_numbers = #tpu.dot_dimension_numbers<[1], [0], [0], [1], [0, 0, 1, 1], [], []>} : vector<32x128xbf16>, vector<128x1024xbf16>, vector<32x1024xf32> -> vector<32x1024xf32>
    %c0_8 = arith.constant 0 : index
    %c0_9 = arith.constant 0 : index
    %12 = vector.load %arg5[%c0_8, %c0_9] : memref<32x1024xf32, #tpu.memory_space<vmem>>, vector<32x1024xf32>
    tpu.vector_store %arg5[%c0_8, %c0_9], %11 {strides = array<i32>} : memref<32x1024xf32, #tpu.memory_space<vmem>>, vector<32x1024xf32>,
    return
  }
  func.func @transform_0(%arg0: i32) -> (i32, i32) {
    %c0_i32 = arith.constant 0 : i32
    %c0_i32_0 = arith.constant 0 : i32
    return %arg0, %c0_i32 : i32, i32
  }
  func.func @transform_1(%arg0: i32) -> (i32, i32) {
    %c0_i32 = arith.constant 0 : i32
    %c0_i32_0 = arith.constant 0 : i32
    %c0_i32_1 = arith.constant 0 : i32
    return %c0_i32, %c0_i32_0 : i32, i32
  }
  func.func @transform_2(%arg0: i32) -> (i32, i32) {
    %c0_i32 = arith.constant 0 : i32
    %c0_i32_0 = arith.constant 0 : i32
    %c0_i32_1 = arith.constant 0 : i32
    return %c0_i32, %c0_i32_0 : i32, i32
  }
  func.func @transform_3(%arg0: i32) -> (i32, i32) {
    %c0_i32 = arith.constant 0 : i32
    %c0_i32_0 = arith.constant 0 : i32
    %c0_i32_1 = arith.constant 0 : i32
    return %c0_i32, %c0_i32_0 : i32, i32
  }
  func.func @transform_4(%arg0: i32) -> (i32, i32) {
    %c0_i32 = arith.constant 0 : i32
    %c0_i32_0 = arith.constant 0 : i32
    return %arg0, %c0_i32 : i32, i32
  }
}

module attributes {stable_mosaic.version = 11 : i64} {
  func.func @_bn_relu_matmul_kernel(%arg0: i32, %arg1: memref<128x64xf32, #tpu.memory_space<vmem>>, %arg2: memref<1x64xf32, #tpu.memory_space<vmem>>, %arg3: memref<1x64xf32, #tpu.memory_space<vmem>>, %arg4: memref<64x512xbf16, #tpu.memory_space<vmem>>, %arg5: memref<128x512xf32, #tpu.memory_space<vmem>>) attributes {dimension_semantics = [#tpu.dimension_semantics<parallel>], iteration_bounds = array<i64: 1>, scalar_prefetch = 0 : i64, scratch_operands = 0 : i64, tpu.core_type = #tpu.core_type<tc>, window_params = [{transform_indices = @transform_0, window_bounds = array<i64: 128, 64>}, {pipeline_mode = #tpu.pipeline_mode<synchronous>, transform_indices = @transform_1, window_bounds = array<i64: 1, 64>}, {pipeline_mode = #tpu.pipeline_mode<synchronous>, transform_indices = @transform_2, window_bounds = array<i64: 1, 64>}, {pipeline_mode = #tpu.pipeline_mode<synchronous>, transform_indices = @transform_3, window_bounds = array<i64: 64, 512>}, {transform_indices = @transform_4, window_bounds = array<i64: 128, 512>}]} {
    %c0 = arith.constant 0 : index
    %c0_0 = arith.constant 0 : index
    %0 = vector.load %arg1[%c0, %c0_0] : memref<128x64xf32, #tpu.memory_space<vmem>>, vector<128x64xf32>
    %c0_1 = arith.constant 0 : index
    %c0_2 = arith.constant 0 : index
    %1 = vector.load %arg2[%c0_1, %c0_2] : memref<1x64xf32, #tpu.memory_space<vmem>>, vector<1x64xf32>
    %2 = vector.broadcast %1 : vector<1x64xf32> to vector<128x64xf32>
    %3 = arith.mulf %0, %2 : vector<128x64xf32>
    %c0_3 = arith.constant 0 : index
    %c0_4 = arith.constant 0 : index
    %4 = vector.load %arg3[%c0_3, %c0_4] : memref<1x64xf32, #tpu.memory_space<vmem>>, vector<1x64xf32>
    %5 = vector.broadcast %4 : vector<1x64xf32> to vector<128x64xf32>
    %6 = arith.addf %3, %5 : vector<128x64xf32>
    %cst = arith.constant 0.000000e+00 : f32
    %7 = vector.broadcast %cst : f32 to vector<128x64xf32>
    %8 = arith.maximumf %6, %7 : vector<128x64xf32>
    %9 = arith.truncf %8 : vector<128x64xf32> to vector<128x64xbf16>
    %c0_5 = arith.constant 0 : index
    %c0_6 = arith.constant 0 : index
    %10 = vector.load %arg4[%c0_5, %c0_6] : memref<64x512xbf16, #tpu.memory_space<vmem>>, vector<64x512xbf16>
    %cst_7 = arith.constant dense<0.000000e+00> : vector<128x512xf32>
    %11 = tpu.matmul %9, %10, %cst_7 {dimension_numbers = #tpu.dot_dimension_numbers<[1], [0], [0], [1], [0, 0, 1, 1], [], []>} : vector<128x64xbf16>, vector<64x512xbf16>, vector<128x512xf32> -> vector<128x512xf32>
    %c0_8 = arith.constant 0 : index
    %c0_9 = arith.constant 0 : index
    %12 = vector.load %arg5[%c0_8, %c0_9] : memref<128x512xf32, #tpu.memory_space<vmem>>, vector<128x512xf32>
    tpu.vector_store %arg5[%c0_8, %c0_9], %11 {strides = array<i32>} : memref<128x512xf32, #tpu.memory_space<vmem>>, vector<128x512xf32>,
    return
  }
  func.func @transform_0(%arg0: i32) -> (i32, i32) {
    %c0_i32 = arith.constant 0 : i32
    %c0_i32_0 = arith.constant 0 : i32
    return %arg0, %c0_i32 : i32, i32
  }
  func.func @transform_1(%arg0: i32) -> (i32, i32) {
    %c0_i32 = arith.constant 0 : i32
    %c0_i32_0 = arith.constant 0 : i32
    %c0_i32_1 = arith.constant 0 : i32
    return %c0_i32, %c0_i32_0 : i32, i32
  }
  func.func @transform_2(%arg0: i32) -> (i32, i32) {
    %c0_i32 = arith.constant 0 : i32
    %c0_i32_0 = arith.constant 0 : i32
    %c0_i32_1 = arith.constant 0 : i32
    return %c0_i32, %c0_i32_0 : i32, i32
  }
  func.func @transform_3(%arg0: i32) -> (i32, i32) {
    %c0_i32 = arith.constant 0 : i32
    %c0_i32_0 = arith.constant 0 : i32
    %c0_i32_1 = arith.constant 0 : i32
    return %c0_i32, %c0_i32_0 : i32, i32
  }
  func.func @transform_4(%arg0: i32) -> (i32, i32) {
    %c0_i32 = arith.constant 0 : i32
    %c0_i32_0 = arith.constant 0 : i32
    return %arg0, %c0_i32 : i32, i32
  }
}

module attributes {stable_mosaic.version = 11 : i64} {
  func.func @_bn_relu_matmul_kernel(%arg0: i32, %arg1: memref<256x32xf32, #tpu.memory_space<vmem>>, %arg2: memref<1x32xf32, #tpu.memory_space<vmem>>, %arg3: memref<1x32xf32, #tpu.memory_space<vmem>>, %arg4: memref<32x256xbf16, #tpu.memory_space<vmem>>, %arg5: memref<256x256xf32, #tpu.memory_space<vmem>>) attributes {dimension_semantics = [#tpu.dimension_semantics<parallel>], iteration_bounds = array<i64: 2>, scalar_prefetch = 0 : i64, scratch_operands = 0 : i64, tpu.core_type = #tpu.core_type<tc>, window_params = [{transform_indices = @transform_0, window_bounds = array<i64: 256, 32>}, {pipeline_mode = #tpu.pipeline_mode<synchronous>, transform_indices = @transform_1, window_bounds = array<i64: 1, 32>}, {pipeline_mode = #tpu.pipeline_mode<synchronous>, transform_indices = @transform_2, window_bounds = array<i64: 1, 32>}, {pipeline_mode = #tpu.pipeline_mode<synchronous>, transform_indices = @transform_3, window_bounds = array<i64: 32, 256>}, {transform_indices = @transform_4, window_bounds = array<i64: 256, 256>}]} {
    %c0 = arith.constant 0 : index
    %c0_0 = arith.constant 0 : index
    %0 = vector.load %arg1[%c0, %c0_0] : memref<256x32xf32, #tpu.memory_space<vmem>>, vector<256x32xf32>
    %c0_1 = arith.constant 0 : index
    %c0_2 = arith.constant 0 : index
    %1 = vector.load %arg2[%c0_1, %c0_2] : memref<1x32xf32, #tpu.memory_space<vmem>>, vector<1x32xf32>
    %2 = vector.broadcast %1 : vector<1x32xf32> to vector<256x32xf32>
    %3 = arith.mulf %0, %2 : vector<256x32xf32>
    %c0_3 = arith.constant 0 : index
    %c0_4 = arith.constant 0 : index
    %4 = vector.load %arg3[%c0_3, %c0_4] : memref<1x32xf32, #tpu.memory_space<vmem>>, vector<1x32xf32>
    %5 = vector.broadcast %4 : vector<1x32xf32> to vector<256x32xf32>
    %6 = arith.addf %3, %5 : vector<256x32xf32>
    %cst = arith.constant 0.000000e+00 : f32
    %7 = vector.broadcast %cst : f32 to vector<256x32xf32>
    %8 = arith.maximumf %6, %7 : vector<256x32xf32>
    %9 = arith.truncf %8 : vector<256x32xf32> to vector<256x32xbf16>
    %c0_5 = arith.constant 0 : index
    %c0_6 = arith.constant 0 : index
    %10 = vector.load %arg4[%c0_5, %c0_6] : memref<32x256xbf16, #tpu.memory_space<vmem>>, vector<32x256xbf16>
    %cst_7 = arith.constant dense<0.000000e+00> : vector<256x256xf32>
    %11 = tpu.matmul %9, %10, %cst_7 {dimension_numbers = #tpu.dot_dimension_numbers<[1], [0], [0], [1], [0, 0, 1, 1], [], []>} : vector<256x32xbf16>, vector<32x256xbf16>, vector<256x256xf32> -> vector<256x256xf32>
    %c0_8 = arith.constant 0 : index
    %c0_9 = arith.constant 0 : index
    %12 = vector.load %arg5[%c0_8, %c0_9] : memref<256x256xf32, #tpu.memory_space<vmem>>, vector<256x256xf32>
    tpu.vector_store %arg5[%c0_8, %c0_9], %11 {strides = array<i32>} : memref<256x256xf32, #tpu.memory_space<vmem>>, vector<256x256xf32>,
    return
  }
  func.func @transform_0(%arg0: i32) -> (i32, i32) {
    %c0_i32 = arith.constant 0 : i32
    %c0_i32_0 = arith.constant 0 : i32
    return %arg0, %c0_i32 : i32, i32
  }
  func.func @transform_1(%arg0: i32) -> (i32, i32) {
    %c0_i32 = arith.constant 0 : i32
    %c0_i32_0 = arith.constant 0 : i32
    %c0_i32_1 = arith.constant 0 : i32
    return %c0_i32, %c0_i32_0 : i32, i32
  }
  func.func @transform_2(%arg0: i32) -> (i32, i32) {
    %c0_i32 = arith.constant 0 : i32
    %c0_i32_0 = arith.constant 0 : i32
    %c0_i32_1 = arith.constant 0 : i32
    return %c0_i32, %c0_i32_0 : i32, i32
  }
  func.func @transform_3(%arg0: i32) -> (i32, i32) {
    %c0_i32 = arith.constant 0 : i32
    %c0_i32_0 = arith.constant 0 : i32
    %c0_i32_1 = arith.constant 0 : i32
    return %c0_i32, %c0_i32_0 : i32, i32
  }
  func.func @transform_4(%arg0: i32) -> (i32, i32) {
    %c0_i32 = arith.constant 0 : i32
    %c0_i32_0 = arith.constant 0 : i32
    return %arg0, %c0_i32 : i32, i32
  }
}

module attributes {stable_mosaic.version = 11 : i64} {
  func.func @_bn_relu_matmul_kernel(%arg0: i32, %arg1: memref<1024x16xf32, #tpu.memory_space<vmem>>, %arg2: memref<1x16xf32, #tpu.memory_space<vmem>>, %arg3: memref<1x16xf32, #tpu.memory_space<vmem>>, %arg4: memref<16x128xbf16, #tpu.memory_space<vmem>>, %arg5: memref<1024x128xf32, #tpu.memory_space<vmem>>) attributes {dimension_semantics = [#tpu.dimension_semantics<parallel>], iteration_bounds = array<i64: 2>, scalar_prefetch = 0 : i64, scratch_operands = 0 : i64, tpu.core_type = #tpu.core_type<tc>, window_params = [{transform_indices = @transform_0, window_bounds = array<i64: 1024, 16>}, {pipeline_mode = #tpu.pipeline_mode<synchronous>, transform_indices = @transform_1, window_bounds = array<i64: 1, 16>}, {pipeline_mode = #tpu.pipeline_mode<synchronous>, transform_indices = @transform_2, window_bounds = array<i64: 1, 16>}, {pipeline_mode = #tpu.pipeline_mode<synchronous>, transform_indices = @transform_3, window_bounds = array<i64: 16, 128>}, {transform_indices = @transform_4, window_bounds = array<i64: 1024, 128>}]} {
    %c0 = arith.constant 0 : index
    %c0_0 = arith.constant 0 : index
    %0 = vector.load %arg1[%c0, %c0_0] : memref<1024x16xf32, #tpu.memory_space<vmem>>, vector<1024x16xf32>
    %c0_1 = arith.constant 0 : index
    %c0_2 = arith.constant 0 : index
    %1 = vector.load %arg2[%c0_1, %c0_2] : memref<1x16xf32, #tpu.memory_space<vmem>>, vector<1x16xf32>
    %2 = vector.broadcast %1 : vector<1x16xf32> to vector<1024x16xf32>
    %3 = arith.mulf %0, %2 : vector<1024x16xf32>
    %c0_3 = arith.constant 0 : index
    %c0_4 = arith.constant 0 : index
    %4 = vector.load %arg3[%c0_3, %c0_4] : memref<1x16xf32, #tpu.memory_space<vmem>>, vector<1x16xf32>
    %5 = vector.broadcast %4 : vector<1x16xf32> to vector<1024x16xf32>
    %6 = arith.addf %3, %5 : vector<1024x16xf32>
    %cst = arith.constant 0.000000e+00 : f32
    %7 = vector.broadcast %cst : f32 to vector<1024x16xf32>
    %8 = arith.maximumf %6, %7 : vector<1024x16xf32>
    %9 = arith.truncf %8 : vector<1024x16xf32> to vector<1024x16xbf16>
    %c0_5 = arith.constant 0 : index
    %c0_6 = arith.constant 0 : index
    %10 = vector.load %arg4[%c0_5, %c0_6] : memref<16x128xbf16, #tpu.memory_space<vmem>>, vector<16x128xbf16>
    %cst_7 = arith.constant dense<0.000000e+00> : vector<1024x128xf32>
    %11 = tpu.matmul %9, %10, %cst_7 {dimension_numbers = #tpu.dot_dimension_numbers<[1], [0], [0], [1], [0, 0, 1, 1], [], []>} : vector<1024x16xbf16>, vector<16x128xbf16>, vector<1024x128xf32> -> vector<1024x128xf32>
    %c0_8 = arith.constant 0 : index
    %c0_9 = arith.constant 0 : index
    %12 = vector.load %arg5[%c0_8, %c0_9] : memref<1024x128xf32, #tpu.memory_space<vmem>>, vector<1024x128xf32>
    tpu.vector_store %arg5[%c0_8, %c0_9], %11 {strides = array<i32>} : memref<1024x128xf32, #tpu.memory_space<vmem>>, vector<1024x128xf32>,
    return
  }
  func.func @transform_0(%arg0: i32) -> (i32, i32) {
    %c0_i32 = arith.constant 0 : i32
    %c0_i32_0 = arith.constant 0 : i32
    return %arg0, %c0_i32 : i32, i32
  }
  func.func @transform_1(%arg0: i32) -> (i32, i32) {
    %c0_i32 = arith.constant 0 : i32
    %c0_i32_0 = arith.constant 0 : i32
    %c0_i32_1 = arith.constant 0 : i32
    return %c0_i32, %c0_i32_0 : i32, i32
  }
  func.func @transform_2(%arg0: i32) -> (i32, i32) {
    %c0_i32 = arith.constant 0 : i32
    %c0_i32_0 = arith.constant 0 : i32
    %c0_i32_1 = arith.constant 0 : i32
    return %c0_i32, %c0_i32_0 : i32, i32
  }
  func.func @transform_3(%arg0: i32) -> (i32, i32) {
    %c0_i32 = arith.constant 0 : i32
    %c0_i32_0 = arith.constant 0 : i32
    %c0_i32_1 = arith.constant 0 : i32
    return %c0_i32, %c0_i32_0 : i32, i32
  }
  func.func @transform_4(%arg0: i32) -> (i32, i32) {
    %c0_i32 = arith.constant 0 : i32
    %c0_i32_0 = arith.constant 0 : i32
    return %arg0, %c0_i32 : i32, i32
  }
}

module attributes {stable_mosaic.version = 11 : i64} {
  func.func @_bn_relu_matmul_t_kernel(%arg0: i32, %arg1: memref<8x4096xf32, #tpu.memory_space<vmem>>, %arg2: memref<8x1xf32, #tpu.memory_space<vmem>>, %arg3: memref<8x1xf32, #tpu.memory_space<vmem>>, %arg4: memref<16x8xf32, #tpu.memory_space<vmem>>, %arg5: memref<16x4096xf32, #tpu.memory_space<vmem>>) attributes {dimension_semantics = [#tpu.dimension_semantics<parallel>], iteration_bounds = array<i64: 2>, scalar_prefetch = 0 : i64, scratch_operands = 0 : i64, tpu.core_type = #tpu.core_type<tc>, window_params = [{transform_indices = @transform_0, window_bounds = array<i64: 8, 4096>}, {pipeline_mode = #tpu.pipeline_mode<synchronous>, transform_indices = @transform_1, window_bounds = array<i64: 8, 1>}, {pipeline_mode = #tpu.pipeline_mode<synchronous>, transform_indices = @transform_2, window_bounds = array<i64: 8, 1>}, {pipeline_mode = #tpu.pipeline_mode<synchronous>, transform_indices = @transform_3, window_bounds = array<i64: 16, 8>}, {transform_indices = @transform_4, window_bounds = array<i64: 16, 4096>}]} {
    %c0 = arith.constant 0 : index
    %c0_0 = arith.constant 0 : index
    %0 = vector.load %arg1[%c0, %c0_0] : memref<8x4096xf32, #tpu.memory_space<vmem>>, vector<8x4096xf32>
    %c0_1 = arith.constant 0 : index
    %c0_2 = arith.constant 0 : index
    %1 = vector.load %arg2[%c0_1, %c0_2] : memref<8x1xf32, #tpu.memory_space<vmem>>, vector<8x1xf32>
    %2 = vector.broadcast %1 : vector<8x1xf32> to vector<8x4096xf32>
    %3 = arith.mulf %0, %2 : vector<8x4096xf32>
    %c0_3 = arith.constant 0 : index
    %c0_4 = arith.constant 0 : index
    %4 = vector.load %arg3[%c0_3, %c0_4] : memref<8x1xf32, #tpu.memory_space<vmem>>, vector<8x1xf32>
    %5 = vector.broadcast %4 : vector<8x1xf32> to vector<8x4096xf32>
    %6 = arith.addf %3, %5 : vector<8x4096xf32>
    %cst = arith.constant 0.000000e+00 : f32
    %7 = vector.broadcast %cst : f32 to vector<8x4096xf32>
    %8 = arith.maximumf %6, %7 : vector<8x4096xf32>
    %c0_5 = arith.constant 0 : index
    %c0_6 = arith.constant 0 : index
    %9 = vector.load %arg4[%c0_5, %c0_6] : memref<16x8xf32, #tpu.memory_space<vmem>>, vector<16x8xf32>
    %cst_7 = arith.constant dense<0.000000e+00> : vector<16x4096xf32>
    %10 = tpu.matmul %9, %8, %cst_7 {dimension_numbers = #tpu.dot_dimension_numbers<[1], [0], [0], [1], [0, 0, 1, 1], [], []>} : vector<16x8xf32>, vector<8x4096xf32>, vector<16x4096xf32> -> vector<16x4096xf32>
    %c0_8 = arith.constant 0 : index
    %c0_9 = arith.constant 0 : index
    %11 = vector.load %arg5[%c0_8, %c0_9] : memref<16x4096xf32, #tpu.memory_space<vmem>>, vector<16x4096xf32>
    tpu.vector_store %arg5[%c0_8, %c0_9], %10 {strides = array<i32>} : memref<16x4096xf32, #tpu.memory_space<vmem>>, vector<16x4096xf32>,
    return
  }
  func.func @transform_0(%arg0: i32) -> (i32, i32) {
    %c0_i32 = arith.constant 0 : i32
    %c0_i32_0 = arith.constant 0 : i32
    return %c0_i32, %arg0 : i32, i32
  }
  func.func @transform_1(%arg0: i32) -> (i32, i32) {
    %c0_i32 = arith.constant 0 : i32
    %c0_i32_0 = arith.constant 0 : i32
    %c0_i32_1 = arith.constant 0 : i32
    return %c0_i32, %c0_i32_0 : i32, i32
  }
  func.func @transform_2(%arg0: i32) -> (i32, i32) {
    %c0_i32 = arith.constant 0 : i32
    %c0_i32_0 = arith.constant 0 : i32
    %c0_i32_1 = arith.constant 0 : i32
    return %c0_i32, %c0_i32_0 : i32, i32
  }
  func.func @transform_3(%arg0: i32) -> (i32, i32) {
    %c0_i32 = arith.constant 0 : i32
    %c0_i32_0 = arith.constant 0 : i32
    %c0_i32_1 = arith.constant 0 : i32
    return %c0_i32, %c0_i32_0 : i32, i32
  }
  func.func @transform_4(%arg0: i32) -> (i32, i32) {
    %c0_i32 = arith.constant 0 : i32
    %c0_i32_0 = arith.constant 0 : i32
    return %c0_i32, %arg0 : i32, i32
  }
}

</mosaic_0001>

<llo_original>
// kernel: netG_forward.5
$region0: #{netG_forward.5}
  #allocation0 [shape = 'u32[]', space=smem, size = 0x4, offset = 0x4, fixed_abs, tag = 'smem constant byte address 0x4 - core index']
  #allocation1 [shape = 'u32[144,128]{1,0:T(1,128)}', space=vmem, size = 0x12000, scoped, tag = 'internal scratch']
  %s0 = inlined_call_operand.vmem [shape: f32[32,128], index: 0, kind: input, shape index: {}]
  %s1 = inlined_call_operand.vmem [shape: f32[1,128], index: 1, kind: input, shape index: {}]
  %s2 = inlined_call_operand.vmem [shape: f32[1,128], index: 2, kind: input, shape index: {}]
  %s3 = inlined_call_operand.hbm [shape: bf16[128,1024], index: 3, kind: input, shape index: {}]
  %s4 = inlined_call_operand.vmem [shape: f32[32,1024], index: 4, kind: output, shape index: {}]
  %s5 = sld [smem:[#allocation0]]
  $region30: #{netG_forward.5} parent=0
    _
  %s7 = ssub.s32 1, %s5
  %s8 = scalar_select 0, %s7, %s5
  $region1: #{netG_forward.5} parent=0
    #allocation2 [shape = 'u8[262144]{0}', space=vmem, size = 0x40000, scoped, tag = 'input window, operand 3, single buffered']
    #allocation3 [shape = 's32[1]{0}', space=sflag, size = 0x4, scoped, tag = 'scoped memory for netG_forward.5']
    %9 = vsyncpa [#allocation3], 0
    // Predicated region
    $region2: #{netG_forward.5} parent=1 // pred_check
      _
    $region3: #{netG_forward.5} parent=1 // pred_check_branch
      %11 = sbr.rel (0) target = $region5
    $region4: #{netG_forward.5} parent=1 // pred_region
      _
    $region5: #{netG_forward.5} parent=1 // pred_fallthru
      _
    // Predicated region
    $region6: #{netG_forward.5} parent=1 // pred_check
      _
    $region7: #{netG_forward.5} parent=1 // pred_check_branch
      %13 = sbr.rel (0) target = $region9
    $region8: #{netG_forward.5} parent=1 // pred_region
      _
    $region9: #{netG_forward.5} parent=1 // pred_fallthru
      _
    // Predicated region
    $region10: #{netG_forward.5} parent=1 // pred_check
      _
    $region11: #{netG_forward.5} parent=1 // pred_check_branch
      %15 = sbr.rel (0) target = $region13
    $region12: #{netG_forward.5} parent=1 // pred_region
      _
    $region13: #{netG_forward.5} parent=1 // pred_fallthru
      _
    // Predicated region
    $region14: #{netG_forward.5} parent=1 // pred_check
      _
    $region15: #{netG_forward.5} parent=1 // pred_check_branch
      %17 = sbr.rel (0) target = $region17
    $region16: #{netG_forward.5} parent=1 // pred_region
      %s19 = ssub.s32 8192, 8192
      %20 = vsyncadd [#allocation3], %s19
      %s21 = sshll.u32 [#allocation2], 4
      %s22 = int_to_ptr.vmem [resolvable:$true] %s21
      %27 = dma.hbm_to_vmem [thread:$0]  %s3, 8192, %s22, [#allocation3], 512, 512, 32
    $region17: #{netG_forward.5} parent=1 // pred_fallthru
      _
    // Predicated region
    $region18: #{netG_forward.5} parent=1 // pred_check
      _
    $region19: #{netG_forward.5} parent=1 // pred_check_branch
      %29 = sbr.rel (0) target = $region21
    $region20: #{netG_forward.5} parent=1 // pred_region
      %30 = dma.done [#allocation3], 8192
    $region21: #{netG_forward.5} parent=1 // pred_fallthru
      _
    %v32 = vld [vmem:[%s0] sm:$0xff]
    %v33 = vld [vmem:[%s0 + $0x8] sm:$0xff]
    %v34 = vld [vmem:[%s0 + $0x10] sm:$0xff]
    %v35 = vld [vmem:[%s0 + $0x18] sm:$0xff]
    %v36 = vld [vmem:[%s1] sm:$0x1]
    %v38 = vlaneseq
    %v39 = vshrl.u32 %v38, 7
    %v40 = vsub.s32 0, %v39
    %v41 = vrot.slane %v36, %v40
    %v43 = vmul.f32 %v32, %v41
    %v44 = vmul.f32 %v33, %v41
    %v45 = vmul.f32 %v34, %v41
    %v46 = vmul.f32 %v35, %v41
    %v47 = vld [vmem:[%s2] sm:$0x1]
    %v49 = vlaneseq
    %v50 = vshrl.u32 %v49, 7
    %v51 = vsub.s32 0, %v50
    %v52 = vrot.slane %v47, %v51
    %v54 = vadd.f32 %v43, %v52
    %v55 = vadd.f32 %v44, %v52
    %v56 = vadd.f32 %v45, %v52
    %v57 = vadd.f32 %v46, %v52
    %v58 = vmax.f32 %v54, 0.0
    %v59 = vmax.f32 %v55, 0.0
    %v60 = vmax.f32 %v56, 0.0
    %v61 = vmax.f32 %v57, 0.0
    %v62 = vpack.c.bf16 %v59, %v58
    %v63 = vpack.c.bf16 %v61, %v60
    %v64 = vld [vmem:[#allocation2] sm:$0xff]
    %v65 = vld [vmem:[#allocation2 + $0x8] sm:$0xff]
    %v66 = vld [vmem:[#allocation2 + $0x10] sm:$0xff]
    %v67 = vld [vmem:[#allocation2 + $0x18] sm:$0xff]
    %v68 = vld [vmem:[#allocation2 + $0x20] sm:$0xff]
    %v69 = vld [vmem:[#allocation2 + $0x28] sm:$0xff]
    %v70 = vld [vmem:[#allocation2 + $0x30] sm:$0xff]
    %v71 = vld [vmem:[#allocation2 + $0x38] sm:$0xff]
    %v72 = vld [vmem:[#allocation2 + $0x40] sm:$0xff]
    %v73 = vld [vmem:[#allocation2 + $0x48] sm:$0xff]
    %v74 = vld [vmem:[#allocation2 + $0x50] sm:$0xff]
    %v75 = vld [vmem:[#allocation2 + $0x58] sm:$0xff]
    %v76 = vld [vmem:[#allocation2 + $0x60] sm:$0xff]
    %v77 = vld [vmem:[#allocation2 + $0x68] sm:$0xff]
    %v78 = vld [vmem:[#allocation2 + $0x70] sm:$0xff]
    %v79 = vld [vmem:[#allocation2 + $0x78] sm:$0xff]
    %v80 = vld [vmem:[#allocation2 + $0x80] sm:$0xff]
    %v81 = vld [vmem:[#allocation2 + $0x88] sm:$0xff]
    %v82 = vld [vmem:[#allocation2 + $0x90] sm:$0xff]
    %v83 = vld [vmem:[#allocation2 + $0x98] sm:$0xff]
    %v84 = vld [vmem:[#allocation2 + $0xa0] sm:$0xff]
    %v85 = vld [vmem:[#allocation2 + $0xa8] sm:$0xff]
    %v86 = vld [vmem:[#allocation2 + $0xb0] sm:$0xff]
    %v87 = vld [vmem:[#allocation2 + $0xb8] sm:$0xff]
    %v88 = vld [vmem:[#allocation2 + $0xc0] sm:$0xff]
    %v89 = vld [vmem:[#allocation2 + $0xc8] sm:$0xff]
    %v90 = vld [vmem:[#allocation2 + $0xd0] sm:$0xff]
    %v91 = vld [vmem:[#allocation2 + $0xd8] sm:$0xff]
    %v92 = vld [vmem:[#allocation2 + $0xe0] sm:$0xff]
    %v93 = vld [vmem:[#allocation2 + $0xe8] sm:$0xff]
    %v94 = vld [vmem:[#allocation2 + $0xf0] sm:$0xff]
    %v95 = vld [vmem:[#allocation2 + $0xf8] sm:$0xff]
    %v96 = vld [vmem:[#allocation2 + $0x100] sm:$0xff]
    %v97 = vld [vmem:[#allocation2 + $0x108] sm:$0xff]
    %v98 = vld [vmem:[#allocation2 + $0x110] sm:$0xff]
    %v99 = vld [vmem:[#allocation2 + $0x118] sm:$0xff]
    %v100 = vld [vmem:[#allocation2 + $0x120] sm:$0xff]
    %v101 = vld [vmem:[#allocation2 + $0x128] sm:$0xff]
    %v102 = vld [vmem:[#allocation2 + $0x130] sm:$0xff]
    %v103 = vld [vmem:[#allocation2 + $0x138] sm:$0xff]
    %v104 = vld [vmem:[#allocation2 + $0x140] sm:$0xff]
    %v105 = vld [vmem:[#allocation2 + $0x148] sm:$0xff]
    %v106 = vld [vmem:[#allocation2 + $0x150] sm:$0xff]
    %v107 = vld [vmem:[#allocation2 + $0x158] sm:$0xff]
    %v108 = vld [vmem:[#allocation2 + $0x160] sm:$0xff]
    %v109 = vld [vmem:[#allocation2 + $0x168] sm:$0xff]
    %v110 = vld [vmem:[#allocation2 + $0x170] sm:$0xff]
    %v111 = vld [vmem:[#allocation2 + $0x178] sm:$0xff]
    %v112 = vld [vmem:[#allocation2 + $0x180] sm:$0xff]
    %v113 = vld [vmem:[#allocation2 + $0x188] sm:$0xff]
    %v114 = vld [vmem:[#allocation2 + $0x190] sm:$0xff]
    %v115 = vld [vmem:[#allocation2 + $0x198] sm:$0xff]
    %v116 = vld [vmem:[#allocation2 + $0x1a0] sm:$0xff]
    %v117 = vld [vmem:[#allocation2 + $0x1a8] sm:$0xff]
    %v118 = vld [vmem:[#allocation2 + $0x1b0] sm:$0xff]
    %v119 = vld [vmem:[#allocation2 + $0x1b8] sm:$0xff]
    %v120 = vld [vmem:[#allocation2 + $0x1c0] sm:$0xff]
    %v121 = vld [vmem:[#allocation2 + $0x1c8] sm:$0xff]
    %v122 = vld [vmem:[#allocation2 + $0x1d0] sm:$0xff]
    %v123 = vld [vmem:[#allocation2 + $0x1d8] sm:$0xff]
    %v124 = vld [vmem:[#allocation2 + $0x1e0] sm:$0xff]
    %v125 = vld [vmem:[#allocation2 + $0x1e8] sm:$0xff]
    %v126 = vld [vmem:[#allocation2 + $0x1f0] sm:$0xff]
    %v127 = vld [vmem:[#allocation2 + $0x1f8] sm:$0xff]
    %v192 = vunpack.c.l.b16 %v64
    %v193 = vunpack.c.h.b16 %v64
    %v194 = vunpack.c.l.b16 %v65
    %v195 = vunpack.c.h.b16 %v65
    %v196 = vunpack.c.l.b16 %v66
    %v197 = vunpack.c.h.b16 %v66
    %v198 = vunpack.c.l.b16 %v67
    %v199 = vunpack.c.h.b16 %v67
    %v200 = vunpack.c.l.b16 %v68
    %v201 = vunpack.c.h.b16 %v68
    %v202 = vunpack.c.l.b16 %v69
    %v203 = vunpack.c.h.b16 %v69
    %v204 = vunpack.c.l.b16 %v70
    %v205 = vunpack.c.h.b16 %v70
    %v206 = vunpack.c.l.b16 %v71
    %v207 = vunpack.c.h.b16 %v71
    %v208 = vunpack.c.l.b16 %v72
    %v209 = vunpack.c.h.b16 %v72
    %v210 = vunpack.c.l.b16 %v73
    %v211 = vunpack.c.h.b16 %v73
    %v212 = vunpack.c.l.b16 %v74
    %v213 = vunpack.c.h.b16 %v74
    %v214 = vunpack.c.l.b16 %v75
    %v215 = vunpack.c.h.b16 %v75
    %v216 = vunpack.c.l.b16 %v76
    %v217 = vunpack.c.h.b16 %v76
    %v218 = vunpack.c.l.b16 %v77
    %v219 = vunpack.c.h.b16 %v77
    %v220 = vunpack.c.l.b16 %v78
    %v221 = vunpack.c.h.b16 %v78
    %v222 = vunpack.c.l.b16 %v79
    %v223 = vunpack.c.h.b16 %v79
    %v224 = vunpack.c.l.b16 %v80
    %v225 = vunpack.c.h.b16 %v80
    %v226 = vunpack.c.l.b16 %v81
    %v227 = vunpack.c.h.b16 %v81
    %v228 = vunpack.c.l.b16 %v82
    %v229 = vunpack.c.h.b16 %v82
    %v230 = vunpack.c.l.b16 %v83
    %v231 = vunpack.c.h.b16 %v83
    %v232 = vunpack.c.l.b16 %v84
    %v233 = vunpack.c.h.b16 %v84
    %v234 = vunpack.c.l.b16 %v85
    %v235 = vunpack.c.h.b16 %v85
    %v236 = vunpack.c.l.b16 %v86
    %v237 = vunpack.c.h.b16 %v86
    %v238 = vunpack.c.l.b16 %v87
    %v239 = vunpack.c.h.b16 %v87
    %v240 = vunpack.c.l.b16 %v88
    %v241 = vunpack.c.h.b16 %v88
    %v242 = vunpack.c.l.b16 %v89
    %v243 = vunpack.c.h.b16 %v89
    %v244 = vunpack.c.l.b16 %v90
    %v245 = vunpack.c.h.b16 %v90
    %v246 = vunpack.c.l.b16 %v91
    %v247 = vunpack.c.h.b16 %v91
    %v248 = vunpack.c.l.b16 %v92
    %v249 = vunpack.c.h.b16 %v92
    %v250 = vunpack.c.l.b16 %v93
    %v251 = vunpack.c.h.b16 %v93
    %v252 = vunpack.c.l.b16 %v94
    %v253 = vunpack.c.h.b16 %v94
    %v254 = vunpack.c.l.b16 %v95
    %v255 = vunpack.c.h.b16 %v95
    %v256 = vunpack.c.l.b16 %v96
    %v257 = vunpack.c.h.b16 %v96
    %v258 = vunpack.c.l.b16 %v97
    %v259 = vunpack.c.h.b16 %v97
    %v260 = vunpack.c.l.b16 %v98
    %v261 = vunpack.c.h.b16 %v98
    %v262 = vunpack.c.l.b16 %v99
    %v263 = vunpack.c.h.b16 %v99
    %v264 = vunpack.c.l.b16 %v100
    %v265 = vunpack.c.h.b16 %v100
    %v266 = vunpack.c.l.b16 %v101
    %v267 = vunpack.c.h.b16 %v101
    %v268 = vunpack.c.l.b16 %v102
    %v269 = vunpack.c.h.b16 %v102
    %v270 = vunpack.c.l.b16 %v103
    %v271 = vunpack.c.h.b16 %v103
    %v272 = vunpack.c.l.b16 %v104
    %v273 = vunpack.c.h.b16 %v104
    %v274 = vunpack.c.l.b16 %v105
    %v275 = vunpack.c.h.b16 %v105
    %v276 = vunpack.c.l.b16 %v106
    %v277 = vunpack.c.h.b16 %v106
    %v278 = vunpack.c.l.b16 %v107
    %v279 = vunpack.c.h.b16 %v107
    %v280 = vunpack.c.l.b16 %v108
    %v281 = vunpack.c.h.b16 %v108
    %v282 = vunpack.c.l.b16 %v109
    %v283 = vunpack.c.h.b16 %v109
    %v284 = vunpack.c.l.b16 %v110
    %v285 = vunpack.c.h.b16 %v110
    %v286 = vunpack.c.l.b16 %v111
    %v287 = vunpack.c.h.b16 %v111
    %v288 = vunpack.c.l.b16 %v112
    %v289 = vunpack.c.h.b16 %v112
    %v290 = vunpack.c.l.b16 %v113
    %v291 = vunpack.c.h.b16 %v113
    %v292 = vunpack.c.l.b16 %v114
    %v293 = vunpack.c.h.b16 %v114
    %v294 = vunpack.c.l.b16 %v115
    %v295 = vunpack.c.h.b16 %v115
    %v296 = vunpack.c.l.b16 %v116
    %v297 = vunpack.c.h.b16 %v116
    %v298 = vunpack.c.l.b16 %v117
    %v299 = vunpack.c.h.b16 %v117
    %v300 = vunpack.c.l.b16 %v118
    %v301 = vunpack.c.h.b16 %v118
    %v302 = vunpack.c.l.b16 %v119
    %v303 = vunpack.c.h.b16 %v119
    %v304 = vunpack.c.l.b16 %v120
    %v305 = vunpack.c.h.b16 %v120
    %v306 = vunpack.c.l.b16 %v121
    %v307 = vunpack.c.h.b16 %v121
    %v308 = vunpack.c.l.b16 %v122
    %v309 = vunpack.c.h.b16 %v122
    %v310 = vunpack.c.l.b16 %v123
    %v311 = vunpack.c.h.b16 %v123
    %v312 = vunpack.c.l.b16 %v124
    %v313 = vunpack.c.h.b16 %v124
    %v314 = vunpack.c.l.b16 %v125
    %v315 = vunpack.c.h.b16 %v125
    %v316 = vunpack.c.l.b16 %v126
    %v317 = vunpack.c.h.b16 %v126
    %v318 = vunpack.c.l.b16 %v127
    %v319 = vunpack.c.h.b16 %v127
    %v320 = vpack.c.b16 %v200, %v192
    %v321 = vpack.c.b16 %v201, %v193
    %v322 = vpack.c.b16 %v202, %v194
    %v323 = vpack.c.b16 %v203, %v195
    %v324 = vpack.c.b16 %v204, %v196
    %v325 = vpack.c.b16 %v205, %v197
    %v326 = vpack.c.b16 %v206, %v198
    %v327 = vpack.c.b16 %v207, %v199
    %v328 = vpack.c.b16 %v216, %v208
    %v329 = vpack.c.b16 %v217, %v209
    %v330 = vpack.c.b16 %v218, %v210
    %v331 = vpack.c.b16 %v219, %v211
    %v332 = vpack.c.b16 %v220, %v212
    %v333 = vpack.c.b16 %v221, %v213
    %v334 = vpack.c.b16 %v222, %v214
    %v335 = vpack.c.b16 %v223, %v215
    %v336 = vpack.c.b16 %v232, %v224
    %v337 = vpack.c.b16 %v233, %v225
    %v338 = vpack.c.b16 %v234, %v226
    %v339 = vpack.c.b16 %v235, %v227
    %v340 = vpack.c.b16 %v236, %v228
    %v341 = vpack.c.b16 %v237, %v229
    %v342 = vpack.c.b16 %v238, %v230
    %v343 = vpack.c.b16 %v239, %v231
    %v344 = vpack.c.b16 %v248, %v240
    %v345 = vpack.c.b16 %v249, %v241
    %v346 = vpack.c.b16 %v250, %v242
    %v347 = vpack.c.b16 %v251, %v243
    %v348 = vpack.c.b16 %v252, %v244
    %v349 = vpack.c.b16 %v253, %v245
    %v350 = vpack.c.b16 %v254, %v246
    %v351 = vpack.c.b16 %v255, %v247
    %v352 = vpack.c.b16 %v264, %v256
    %v353 = vpack.c.b16 %v265, %v257
    %v354 = vpack.c.b16 %v266, %v258
    %v355 = vpack.c.b16 %v267, %v259
    %v356 = vpack.c.b16 %v268, %v260
    %v357 = vpack.c.b16 %v269, %v261
    %v358 = vpack.c.b16 %v270, %v262
    %v359 = vpack.c.b16 %v271, %v263
    %v360 = vpack.c.b16 %v280, %v272
    %v361 = vpack.c.b16 %v281, %v273
    %v362 = vpack.c.b16 %v282, %v274
    %v363 = vpack.c.b16 %v283, %v275
    %v364 = vpack.c.b16 %v284, %v276
    %v365 = vpack.c.b16 %v285, %v277
    %v366 = vpack.c.b16 %v286, %v278
    %v367 = vpack.c.b16 %v287, %v279
    %v368 = vpack.c.b16 %v296, %v288
    %v369 = vpack.c.b16 %v297, %v289
    %v370 = vpack.c.b16 %v298, %v290
    %v371 = vpack.c.b16 %v299, %v291
    %v372 = vpack.c.b16 %v300, %v292
    %v373 = vpack.c.b16 %v301, %v293
    %v374 = vpack.c.b16 %v302, %v294
    %v375 = vpack.c.b16 %v303, %v295
    %v376 = vpack.c.b16 %v312, %v304
    %v377 = vpack.c.b16 %v313, %v305
    %v378 = vpack.c.b16 %v314, %v306
    %v379 = vpack.c.b16 %v315, %v307
    %v380 = vpack.c.b16 %v316, %v308
    %v381 = vpack.c.b16 %v317, %v309
    %v382 = vpack.c.b16 %v318, %v310
    %v383 = vpack.c.b16 %v319, %v311
    %448 = vmatprep.subr.bf16.mxu0 %v321
    %449 = vmatpush1.bf16.msra.mxu0 %v320
    %450 = vmatprep.subr.bf16.mxu0 %v329
    %451 = vmatpush1.bf16.msra.mxu0 %v328
    %452 = vmatprep.subr.bf16.mxu0 %v337
    %453 = vmatpush1.bf16.msra.mxu0 %v336
    %454 = vmatprep.subr.bf16.mxu0 %v345
    %455 = vmatpush1.bf16.msra.mxu0 %v344
    %456 = vmatprep.subr.bf16.mxu0 %v353
    %457 = vmatpush1.bf16.msra.mxu0 %v352
    %458 = vmatprep.subr.bf16.mxu0 %v361
    %459 = vmatpush1.bf16.msra.mxu0 %v360
    %460 = vmatprep.subr.bf16.mxu0 %v369
    %461 = vmatpush1.bf16.msra.mxu0 %v368
    %462 = vmatprep.subr.bf16.mxu0 %v377
    %463 = vmatpush1.bf16.msra.mxu0 %v376
    %464 = vmatprep.subr.bf16.mxu0 0
    %465 = vmatpush1.bf16.msra.mxu0 0
    %466 = vmatprep.subr.bf16.mxu0 0
    %467 = vmatpush1.bf16.msra.mxu0 0
    %468 = vmatprep.subr.bf16.mxu0 0
    %469 = vmatpush1.bf16.msra.mxu0 0
    %470 = vmatprep.subr.bf16.mxu0 0
    %471 = vmatpush1.bf16.msra.mxu0 0
    %472 = vmatprep.subr.bf16.mxu0 0
    %473 = vmatpush1.bf16.msra.mxu0 0
    %474 = vmatprep.subr.bf16.mxu0 0
    %475 = vmatpush1.bf16.msra.mxu0 0
    %476 = vmatprep.subr.bf16.mxu0 0
    %477 = vmatpush1.bf16.msra.mxu0 0
    %478 = vmatprep.subr.bf16.mxu0 0
    %479 = vmatpush1.bf16.msra.mxu0 0
    %480 = vmatprep.mubr.bf16.mxu0 0
    %481 = vmatmul.mubr.bf16.gmra.mrb[0].mxu0 %v62
    %v482 = vpop.f32.mrb[0].mxu0
    %v483 = vadd.f32 0.0, %v482
    %v484 = vpop.f32.mrb[0].mxu0
    %v485 = vadd.f32 0.0, %v484
    %v486 = vpop.f32.mrb[0].mxu0
    %v487 = vadd.f32 0.0, %v486
    %v488 = vpop.f32.mrb[0].mxu0
    %v489 = vadd.f32 0.0, %v488
    %490 = vmatprep.mubr.bf16.mxu0 0
    %491 = vmatmul.mubr.bf16.gmra.mrb[0].mxu0 %v63
    %v492 = vpop.f32.mrb[0].mxu0
    %v493 = vadd.f32 0.0, %v492
    %v494 = vpop.f32.mrb[0].mxu0
    %v495 = vadd.f32 0.0, %v494
    %v496 = vpop.f32.mrb[0].mxu0
    %v497 = vadd.f32 0.0, %v496
    %v498 = vpop.f32.mrb[0].mxu0
    %v499 = vadd.f32 0.0, %v498
    %500 = vdwg.mxu0
    %501 = vmatprep.subr.bf16.mxu0 %v323
    %502 = vmatpush1.bf16.msra.mxu0 %v322
    %503 = vmatprep.subr.bf16.mxu0 %v331
    %504 = vmatpush1.bf16.msra.mxu0 %v330
    %505 = vmatprep.subr.bf16.mxu0 %v339
    %506 = vmatpush1.bf16.msra.mxu0 %v338
    %507 = vmatprep.subr.bf16.mxu0 %v347
    %508 = vmatpush1.bf16.msra.mxu0 %v346
    %509 = vmatprep.subr.bf16.mxu0 %v355
    %510 = vmatpush1.bf16.msra.mxu0 %v354
    %511 = vmatprep.subr.bf16.mxu0 %v363
    %512 = vmatpush1.bf16.msra.mxu0 %v362
    %513 = vmatprep.subr.bf16.mxu0 %v371
    %514 = vmatpush1.bf16.msra.mxu0 %v370
    %515 = vmatprep.subr.bf16.mxu0 %v379
    %516 = vmatpush1.bf16.msra.mxu0 %v378
    %517 = vmatprep.subr.bf16.mxu0 0
    %518 = vmatpush1.bf16.msra.mxu0 0
    %519 = vmatprep.subr.bf16.mxu0 0
    %520 = vmatpush1.bf16.msra.mxu0 0
    %521 = vmatprep.subr.bf16.mxu0 0
    %522 = vmatpush1.bf16.msra.mxu0 0
    %523 = vmatprep.subr.bf16.mxu0 0
    %524 = vmatpush1.bf16.msra.mxu0 0
    %525 = vmatprep.subr.bf16.mxu0 0
    %526 = vmatpush1.bf16.msra.mxu0 0
    %527 = vmatprep.subr.bf16.mxu0 0
    %528 = vmatpush1.bf16.msra.mxu0 0
    %529 = vmatprep.subr.bf16.mxu0 0
    %530 = vmatpush1.bf16.msra.mxu0 0
    %531 = vmatprep.subr.bf16.mxu0 0
    %532 = vmatpush1.bf16.msra.mxu0 0
    %533 = vmatprep.mubr.bf16.mxu0 0
    %534 = vmatmul.mubr.bf16.gmra.mrb[0].mxu0 %v62
    %v535 = vpop.f32.mrb[0].mxu0
    %v536 = vadd.f32 0.0, %v535
    %v537 = vpop.f32.mrb[0].mxu0
    %v538 = vadd.f32 0.0, %v537
    %v539 = vpop.f32.mrb[0].mxu0
    %v540 = vadd.f32 0.0, %v539
    %v541 = vpop.f32.mrb[0].mxu0
    %v542 = vadd.f32 0.0, %v541
    %543 = vmatprep.mubr.bf16.mxu0 0
    %544 = vmatmul.mubr.bf16.gmra.mrb[0].mxu0 %v63
    %v545 = vpop.f32.mrb[0].mxu0
    %v546 = vadd.f32 0.0, %v545
    %v547 = vpop.f32.mrb[0].mxu0
    %v548 = vadd.f32 0.0, %v547
    %v549 = vpop.f32.mrb[0].mxu0
    %v550 = vadd.f32 0.0, %v549
    %v551 = vpop.f32.mrb[0].mxu0
    %v552 = vadd.f32 0.0, %v551
    %553 = vdwg.mxu0
    %554 = vmatprep.subr.bf16.mxu0 %v325
    %555 = vmatpush1.bf16.msra.mxu0 %v324
    %556 = vmatprep.subr.bf16.mxu0 %v333
    %557 = vmatpush1.bf16.msra.mxu0 %v332
    %558 = vmatprep.subr.bf16.mxu0 %v341
    %559 = vmatpush1.bf16.msra.mxu0 %v340
    %560 = vmatprep.subr.bf16.mxu0 %v349
    %561 = vmatpush1.bf16.msra.mxu0 %v348
    %562 = vmatprep.subr.bf16.mxu0 %v357
    %563 = vmatpush1.bf16.msra.mxu0 %v356
    %564 = vmatprep.subr.bf16.mxu0 %v365
    %565 = vmatpush1.bf16.msra.mxu0 %v364
    %566 = vmatprep.subr.bf16.mxu0 %v373
    %567 = vmatpush1.bf16.msra.mxu0 %v372
    %568 = vmatprep.subr.bf16.mxu0 %v381
    %569 = vmatpush1.bf16.msra.mxu0 %v380
    %570 = vmatprep.subr.bf16.mxu0 0
    %571 = vmatpush1.bf16.msra.mxu0 0
    %572 = vmatprep.subr.bf16.mxu0 0
    %573 = vmatpush1.bf16.msra.mxu0 0
    %574 = vmatprep.subr.bf16.mxu0 0
    %575 = vmatpush1.bf16.msra.mxu0 0
    %576 = vmatprep.subr.bf16.mxu0 0
    %577 = vmatpush1.bf16.msra.mxu0 0
    %578 = vmatprep.subr.bf16.mxu0 0
    %579 = vmatpush1.bf16.msra.mxu0 0
    %580 = vmatprep.subr.bf16.mxu0 0
    %581 = vmatpush1.bf16.msra.mxu0 0
    %582 = vmatprep.subr.bf16.mxu0 0
    %583 = vmatpush1.bf16.msra.mxu0 0
    %584 = vmatprep.subr.bf16.mxu0 0
    %585 = vmatpush1.bf16.msra.mxu0 0
    %586 = vmatprep.mubr.bf16.mxu0 0
    %587 = vmatmul.mubr.bf16.gmra.mrb[0].mxu0 %v62
    %v588 = vpop.f32.mrb[0].mxu0
    %v589 = vadd.f32 0.0, %v588
    %v590 = vpop.f32.mrb[0].mxu0
    %v591 = vadd.f32 0.0, %v590
    %v592 = vpop.f32.mrb[0].mxu0
    %v593 = vadd.f32 0.0, %v592
    %v594 = vpop.f32.mrb[0].mxu0
    %v595 = vadd.f32 0.0, %v594
    %596 = vmatprep.mubr.bf16.mxu0 0
    %597 = vmatmul.mubr.bf16.gmra.mrb[0].mxu0 %v63
    %v598 = vpop.f32.mrb[0].mxu0
    %v599 = vadd.f32 0.0, %v598
    %v600 = vpop.f32.mrb[0].mxu0
    %v601 = vadd.f32 0.0, %v600
    %v602 = vpop.f32.mrb[0].mxu0
    %v603 = vadd.f32 0.0, %v602
    %v604 = vpop.f32.mrb[0].mxu0
    %v605 = vadd.f32 0.0, %v604
    %606 = vdwg.mxu0
    %607 = vmatprep.subr.bf16.mxu0 %v327
    %608 = vmatpush1.bf16.msra.mxu0 %v326
    %609 = vmatprep.subr.bf16.mxu0 %v335
    %610 = vmatpush1.bf16.msra.mxu0 %v334
    %611 = vmatprep.subr.bf16.mxu0 %v343
    %612 = vmatpush1.bf16.msra.mxu0 %v342
    %613 = vmatprep.subr.bf16.mxu0 %v351
    %614 = vmatpush1.bf16.msra.mxu0 %v350
    %615 = vmatprep.subr.bf16.mxu0 %v359
    %616 = vmatpush1.bf16.msra.mxu0 %v358
    %617 = vmatprep.subr.bf16.mxu0 %v367
    %618 = vmatpush1.bf16.msra.mxu0 %v366
    %619 = vmatprep.subr.bf16.mxu0 %v375
    %620 = vmatpush1.bf16.msra.mxu0 %v374
    %621 = vmatprep.subr.bf16.mxu0 %v383
    %622 = vmatpush1.bf16.msra.mxu0 %v382
    %623 = vmatprep.subr.bf16.mxu0 0
    %624 = vmatpush1.bf16.msra.mxu0 0
    %625 = vmatprep.subr.bf16.mxu0 0
    %626 = vmatpush1.bf16.msra.mxu0 0
    %627 = vmatprep.subr.bf16.mxu0 0
    %628 = vmatpush1.bf16.msra.mxu0 0
    %629 = vmatprep.subr.bf16.mxu0 0
    %630 = vmatpush1.bf16.msra.mxu0 0
    %631 = vmatprep.subr.bf16.mxu0 0
    %632 = vmatpush1.bf16.msra.mxu0 0
    %633 = vmatprep.subr.bf16.mxu0 0
    %634 = vmatpush1.bf16.msra.mxu0 0
    %635 = vmatprep.subr.bf16.mxu0 0
    %636 = vmatpush1.bf16.msra.mxu0 0
    %637 = vmatprep.subr.bf16.mxu0 0
    %638 = vmatpush1.bf16.msra.mxu0 0
    %639 = vmatprep.mubr.bf16.mxu0 0
    %640 = vmatmul.mubr.bf16.gmra.mrb[0].mxu0 %v62
    %v641 = vpop.f32.mrb[0].mxu0
    %v642 = vadd.f32 0.0, %v641
    %v643 = vpop.f32.mrb[0].mxu0
    %v644 = vadd.f32 0.0, %v643
    %v645 = vpop.f32.mrb[0].mxu0
    %v646 = vadd.f32 0.0, %v645
    %v647 = vpop.f32.mrb[0].mxu0
    %v648 = vadd.f32 0.0, %v647
    %649 = vmatprep.mubr.bf16.mxu0 0
    %650 = vmatmul.mubr.bf16.gmra.mrb[0].mxu0 %v63
    %v651 = vpop.f32.mrb[0].mxu0
    %v652 = vadd.f32 0.0, %v651
    %v653 = vpop.f32.mrb[0].mxu0
    %v654 = vadd.f32 0.0, %v653
    %v655 = vpop.f32.mrb[0].mxu0
    %v656 = vadd.f32 0.0, %v655
    %v657 = vpop.f32.mrb[0].mxu0
    %v658 = vadd.f32 0.0, %v657
    %659 = vdwg.mxu0
    %660 = vst [vmem:[%s4] sm:$0xff] %v483
    %661 = vst [vmem:[%s4 + $0x8] sm:$0xff] %v485
    %662 = vst [vmem:[%s4 + $0x10] sm:$0xff] %v536
    %663 = vst [vmem:[%s4 + $0x18] sm:$0xff] %v538
    %664 = vst [vmem:[%s4 + $0x20] sm:$0xff] %v589
    %665 = vst [vmem:[%s4 + $0x28] sm:$0xff] %v591
    %666 = vst [vmem:[%s4 + $0x30] sm:$0xff] %v642
    %667 = vst [vmem:[%s4 + $0x38] sm:$0xff] %v644
    %668 = vst [vmem:[%s4 + $0x40] sm:$0xff] %v487
    %669 = vst [vmem:[%s4 + $0x48] sm:$0xff] %v489
    %670 = vst [vmem:[%s4 + $0x50] sm:$0xff] %v540
    %671 = vst [vmem:[%s4 + $0x58] sm:$0xff] %v542
    %672 = vst [vmem:[%s4 + $0x60] sm:$0xff] %v593
    %673 = vst [vmem:[%s4 + $0x68] sm:$0xff] %v595
    %674 = vst [vmem:[%s4 + $0x70] sm:$0xff] %v646
    %675 = vst [vmem:[%s4 + $0x78] sm:$0xff] %v648
    %676 = vst [vmem:[%s4 + $0x80] sm:$0xff] %v493
    %677 = vst [vmem:[%s4 + $0x88] sm:$0xff] %v495
    %678 = vst [vmem:[%s4 + $0x90] sm:$0xff] %v546
    %679 = vst [vmem:[%s4 + $0x98] sm:$0xff] %v548
    %680 = vst [vmem:[%s4 + $0xa0] sm:$0xff] %v599
    %681 = vst [vmem:[%s4 + $0xa8] sm:$0xff] %v601
    %682 = vst [vmem:[%s4 + $0xb0] sm:$0xff] %v652
    %683 = vst [vmem:[%s4 + $0xb8] sm:$0xff] %v654
    %684 = vst [vmem:[%s4 + $0xc0] sm:$0xff] %v497
    %685 = vst [vmem:[%s4 + $0xc8] sm:$0xff] %v499
    %686 = vst [vmem:[%s4 + $0xd0] sm:$0xff] %v550
    %687 = vst [vmem:[%s4 + $0xd8] sm:$0xff] %v552
    %688 = vst [vmem:[%s4 + $0xe0] sm:$0xff] %v603
    %689 = vst [vmem:[%s4 + $0xe8] sm:$0xff] %v605
    %690 = vst [vmem:[%s4 + $0xf0] sm:$0xff] %v656
    %691 = vst [vmem:[%s4 + $0xf8] sm:$0xff] %v658
    // Predicated region
    $region22: #{netG_forward.5} parent=1 // pred_check
      _
    $region23: #{netG_forward.5} parent=1 // pred_check_branch
      %693 = sbr.rel (0) target = $region25
    $region24: #{netG_forward.5} parent=1 // pred_region
      _
    $region25: #{netG_forward.5} parent=1 // pred_fallthru
      _
    // Predicated region
    $region26: #{netG_forward.5} parent=1 // pred_check
      _
    $region27: #{netG_forward.5} parent=1 // pred_check_branch
      %695 = sbr.rel (0) target = $region29
    $region28: #{netG_forward.5} parent=1 // pred_region
      _
    $region29: #{netG_forward.5} parent=1 // pred_fallthru
      _
    %696 = vsyncpa [#allocation3], 1

// kernel: netG_forward.6
$region0: #{netG_forward.6}
  #allocation0 [shape = 'u32[]', space=smem, size = 0x4, offset = 0x4, fixed_abs, tag = 'smem constant byte address 0x4 - core index']
  #allocation1 [shape = 'u32[144,128]{1,0:T(1,128)}', space=vmem, size = 0x12000, scoped, tag = 'internal scratch']
  %s0 = inlined_call_operand.vmem [shape: f32[128,64], index: 0, kind: input, shape index: {}]
  %s1 = inlined_call_operand.vmem [shape: f32[1,64], index: 1, kind: input, shape index: {}]
  %s2 = inlined_call_operand.vmem [shape: f32[1,64], index: 2, kind: input, shape index: {}]
  %s3 = inlined_call_operand.hbm [shape: bf16[64,512], index: 3, kind: input, shape index: {}]
  %s4 = inlined_call_operand.vmem [shape: f32[128,512], index: 4, kind: output, shape index: {}]
  %s5 = sld [smem:[#allocation0]]
  $region30: #{netG_forward.6} parent=0
    _
  %s7 = ssub.s32 1, %s5
  %s8 = scalar_select 0, %s7, %s5
  $region1: #{netG_forward.6} parent=0
    #allocation2 [shape = 'u8[65536]{0}', space=vmem, size = 0x10000, scoped, tag = 'input window, operand 3, single buffered']
    #allocation3 [shape = 's32[1]{0}', space=sflag, size = 0x4, scoped, tag = 'scoped memory for netG_forward.6']
    %9 = vsyncpa [#allocation3], 0
    // Predicated region
    $region2: #{netG_forward.6} parent=1 // pred_check
      _
    $region3: #{netG_forward.6} parent=1 // pred_check_branch
      %11 = sbr.rel (0) target = $region5
    $region4: #{netG_forward.6} parent=1 // pred_region
      _
    $region5: #{netG_forward.6} parent=1 // pred_fallthru
      _
    // Predicated region
    $region6: #{netG_forward.6} parent=1 // pred_check
      _
    $region7: #{netG_forward.6} parent=1 // pred_check_branch
      %13 = sbr.rel (0) target = $region9
    $region8: #{netG_forward.6} parent=1 // pred_region
      _
    $region9: #{netG_forward.6} parent=1 // pred_fallthru
      _
    // Predicated region
    $region10: #{netG_forward.6} parent=1 // pred_check
      _
    $region11: #{netG_forward.6} parent=1 // pred_check_branch
      %15 = sbr.rel (0) target = $region13
    $region12: #{netG_forward.6} parent=1 // pred_region
      _
    $region13: #{netG_forward.6} parent=1 // pred_fallthru
      _
    // Predicated region
    $region14: #{netG_forward.6} parent=1 // pred_check
      _
    $region15: #{netG_forward.6} parent=1 // pred_check_branch
      %17 = sbr.rel (0) target = $region17
    $region16: #{netG_forward.6} parent=1 // pred_region
      %s19 = ssub.s32 2048, 2048
      %20 = vsyncadd [#allocation3], %s19
      %s21 = sshll.u32 [#allocation2], 4
      %s22 = int_to_ptr.vmem [resolvable:$true] %s21
      %27 = dma.hbm_to_vmem [thread:$0]  %s3, 2048, %s22, [#allocation3], 256, 256, 16
    $region17: #{netG_forward.6} parent=1 // pred_fallthru
      _
    // Predicated region
    $region18: #{netG_forward.6} parent=1 // pred_check
      _
    $region19: #{netG_forward.6} parent=1 // pred_check_branch
      %29 = sbr.rel (0) target = $region21
    $region20: #{netG_forward.6} parent=1 // pred_region
      %30 = dma.done [#allocation3], 2048
    $region21: #{netG_forward.6} parent=1 // pred_fallthru
      _
    %v32 = vld [vmem:[%s0] sm:$0xff]
    %v33 = vld [vmem:[%s0 + $0x8] sm:$0xff]
    %v34 = vld [vmem:[%s0 + $0x10] sm:$0xff]
    %v35 = vld [vmem:[%s0 + $0x18] sm:$0xff]
    %v36 = vld [vmem:[%s0 + $0x20] sm:$0xff]
    %v37 = vld [vmem:[%s0 + $0x28] sm:$0xff]
    %v38 = vld [vmem:[%s0 + $0x30] sm:$0xff]
    %v39 = vld [vmem:[%s0 + $0x38] sm:$0xff]
    %v40 = vld [vmem:[%s0 + $0x40] sm:$0xff]
    %v41 = vld [vmem:[%s0 + $0x48] sm:$0xff]
    %v42 = vld [vmem:[%s0 + $0x50] sm:$0xff]
    %v43 = vld [vmem:[%s0 + $0x58] sm:$0xff]
    %v44 = vld [vmem:[%s0 + $0x60] sm:$0xff]
    %v45 = vld [vmem:[%s0 + $0x68] sm:$0xff]
    %v46 = vld [vmem:[%s0 + $0x70] sm:$0xff]
    %v47 = vld [vmem:[%s0 + $0x78] sm:$0xff]
    %v48 = vld [vmem:[%s1] sm:$0x1]
    %v50 = vlaneseq
    %v51 = vshrl.u32 %v50, 7
    %v52 = vsub.s32 0, %v51
    %v53 = vrot.slane %v48, %v52
    %v55 = vmul.f32 %v32, %v53
    %v56 = vmul.f32 %v33, %v53
    %v57 = vmul.f32 %v34, %v53
    %v58 = vmul.f32 %v35, %v53
    %v59 = vmul.f32 %v36, %v53
    %v60 = vmul.f32 %v37, %v53
    %v61 = vmul.f32 %v38, %v53
    %v62 = vmul.f32 %v39, %v53
    %v63 = vmul.f32 %v40, %v53
    %v64 = vmul.f32 %v41, %v53
    %v65 = vmul.f32 %v42, %v53
    %v66 = vmul.f32 %v43, %v53
    %v67 = vmul.f32 %v44, %v53
    %v68 = vmul.f32 %v45, %v53
    %v69 = vmul.f32 %v46, %v53
    %v70 = vmul.f32 %v47, %v53
    %v71 = vld [vmem:[%s2] sm:$0x1]
    %v73 = vlaneseq
    %v74 = vshrl.u32 %v73, 7
    %v75 = vsub.s32 0, %v74
    %v76 = vrot.slane %v71, %v75
    %v78 = vadd.f32 %v55, %v76
    %v79 = vadd.f32 %v56, %v76
    %v80 = vadd.f32 %v57, %v76
    %v81 = vadd.f32 %v58, %v76
    %v82 = vadd.f32 %v59, %v76
    %v83 = vadd.f32 %v60, %v76
    %v84 = vadd.f32 %v61, %v76
    %v85 = vadd.f32 %v62, %v76
    %v86 = vadd.f32 %v63, %v76
    %v87 = vadd.f32 %v64, %v76
    %v88 = vadd.f32 %v65, %v76
    %v89 = vadd.f32 %v66, %v76
    %v90 = vadd.f32 %v67, %v76
    %v91 = vadd.f32 %v68, %v76
    %v92 = vadd.f32 %v69, %v76
    %v93 = vadd.f32 %v70, %v76
    %v94 = vmax.f32 %v78, 0.0
    %v95 = vmax.f32 %v79, 0.0
    %v96 = vmax.f32 %v80, 0.0
    %v97 = vmax.f32 %v81, 0.0
    %v98 = vmax.f32 %v82, 0.0
    %v99 = vmax.f32 %v83, 0.0
    %v100 = vmax.f32 %v84, 0.0
    %v101 = vmax.f32 %v85, 0.0
    %v102 = vmax.f32 %v86, 0.0
    %v103 = vmax.f32 %v87, 0.0
    %v104 = vmax.f32 %v88, 0.0
    %v105 = vmax.f32 %v89, 0.0
    %v106 = vmax.f32 %v90, 0.0
    %v107 = vmax.f32 %v91, 0.0
    %v108 = vmax.f32 %v92, 0.0
    %v109 = vmax.f32 %v93, 0.0
    %v110 = vpack.c.bf16 %v95, %v94
    %v111 = vpack.c.bf16 %v97, %v96
    %v112 = vpack.c.bf16 %v99, %v98
    %v113 = vpack.c.bf16 %v101, %v100
    %v114 = vpack.c.bf16 %v103, %v102
    %v115 = vpack.c.bf16 %v105, %v104
    %v116 = vpack.c.bf16 %v107, %v106
    %v117 = vpack.c.bf16 %v109, %v108
    %v118 = vld [vmem:[#allocation2] sm:$0xff]
    %v119 = vld [vmem:[#allocation2 + $0x8] sm:$0xff]
    %v120 = vld [vmem:[#allocation2 + $0x10] sm:$0xff]
    %v121 = vld [vmem:[#allocation2 + $0x18] sm:$0xff]
    %v122 = vld [vmem:[#allocation2 + $0x20] sm:$0xff]
    %v123 = vld [vmem:[#allocation2 + $0x28] sm:$0xff]
    %v124 = vld [vmem:[#allocation2 + $0x30] sm:$0xff]
    %v125 = vld [vmem:[#allocation2 + $0x38] sm:$0xff]
    %v126 = vld [vmem:[#allocation2 + $0x40] sm:$0xff]
    %v127 = vld [vmem:[#allocation2 + $0x48] sm:$0xff]
    %v128 = vld [vmem:[#allocation2 + $0x50] sm:$0xff]
    %v129 = vld [vmem:[#allocation2 + $0x58] sm:$0xff]
    %v130 = vld [vmem:[#allocation2 + $0x60] sm:$0xff]
    %v131 = vld [vmem:[#allocation2 + $0x68] sm:$0xff]
    %v132 = vld [vmem:[#allocation2 + $0x70] sm:$0xff]
    %v133 = vld [vmem:[#allocation2 + $0x78] sm:$0xff]
    %v150 = vunpack.c.l.b16 %v118
    %v151 = vunpack.c.h.b16 %v118
    %v152 = vunpack.c.l.b16 %v119
    %v153 = vunpack.c.h.b16 %v119
    %v154 = vunpack.c.l.b16 %v120
    %v155 = vunpack.c.h.b16 %v120
    %v156 = vunpack.c.l.b16 %v121
    %v157 = vunpack.c.h.b16 %v121
    %v158 = vunpack.c.l.b16 %v122
    %v159 = vunpack.c.h.b16 %v122
    %v160 = vunpack.c.l.b16 %v123
    %v161 = vunpack.c.h.b16 %v123
    %v162 = vunpack.c.l.b16 %v124
    %v163 = vunpack.c.h.b16 %v124
    %v164 = vunpack.c.l.b16 %v125
    %v165 = vunpack.c.h.b16 %v125
    %v166 = vunpack.c.l.b16 %v126
    %v167 = vunpack.c.h.b16 %v126
    %v168 = vunpack.c.l.b16 %v127
    %v169 = vunpack.c.h.b16 %v127
    %v170 = vunpack.c.l.b16 %v128
    %v171 = vunpack.c.h.b16 %v128
    %v172 = vunpack.c.l.b16 %v129
    %v173 = vunpack.c.h.b16 %v129
    %v174 = vunpack.c.l.b16 %v130
    %v175 = vunpack.c.h.b16 %v130
    %v176 = vunpack.c.l.b16 %v131
    %v177 = vunpack.c.h.b16 %v131
    %v178 = vunpack.c.l.b16 %v132
    %v179 = vunpack.c.h.b16 %v132
    %v180 = vunpack.c.l.b16 %v133
    %v181 = vunpack.c.h.b16 %v133
    %v182 = vpack.c.b16 %v154, %v150
    %v183 = vpack.c.b16 %v155, %v151
    %v184 = vpack.c.b16 %v156, %v152
    %v185 = vpack.c.b16 %v157, %v153
    %v186 = vpack.c.b16 %v162, %v158
    %v187 = vpack.c.b16 %v163, %v159
    %v188 = vpack.c.b16 %v164, %v160
    %v189 = vpack.c.b16 %v165, %v161
    %v190 = vpack.c.b16 %v170, %v166
    %v191 = vpack.c.b16 %v171, %v167
    %v192 = vpack.c.b16 %v172, %v168
    %v193 = vpack.c.b16 %v173, %v169
    %v194 = vpack.c.b16 %v178, %v174
    %v195 = vpack.c.b16 %v179, %v175
    %v196 = vpack.c.b16 %v180, %v176
    %v197 = vpack.c.b16 %v181, %v177
    %vm214 = vcmask 523264
    %v216 = vsel %vm214, %v110, 0
    %v219 = vsel %vm214, %v111, 0
    %v222 = vsel %vm214, %v112, 0
    %v225 = vsel %vm214, %v113, 0
    %v228 = vsel %vm214, %v114, 0
    %v231 = vsel %vm214, %v115, 0
    %v234 = vsel %vm214, %v116, 0
    %v237 = vsel %vm214, %v117, 0
    %239 = vmatprep.subr.bf16.mxu0 %v183
    %240 = vmatpush1.bf16.msra.mxu0 %v182
    %241 = vmatprep.subr.bf16.mxu0 %v187
    %242 = vmatpush1.bf16.msra.mxu0 %v186
    %243 = vmatprep.subr.bf16.mxu0 %v191
    %244 = vmatpush1.bf16.msra.mxu0 %v190
    %245 = vmatprep.subr.bf16.mxu0 %v195
    %246 = vmatpush1.bf16.msra.mxu0 %v194
    %247 = vmatprep.subr.bf16.mxu0 0
    %248 = vmatpush1.bf16.msra.mxu0 0
    %249 = vmatprep.subr.bf16.mxu0 0
    %250 = vmatpush1.bf16.msra.mxu0 0
    %251 = vmatprep.subr.bf16.mxu0 0
    %252 = vmatpush1.bf16.msra.mxu0 0
    %253 = vmatprep.subr.bf16.mxu0 0
    %254 = vmatpush1.bf16.msra.mxu0 0
    %255 = vmatprep.subr.bf16.mxu0 0
    %256 = vmatpush1.bf16.msra.mxu0 0
    %257 = vmatprep.subr.bf16.mxu0 0
    %258 = vmatpush1.bf16.msra.mxu0 0
    %259 = vmatprep.subr.bf16.mxu0 0
    %260 = vmatpush1.bf16.msra.mxu0 0
    %261 = vmatprep.subr.bf16.mxu0 0
    %262 = vmatpush1.bf16.msra.mxu0 0
    %263 = vmatprep.subr.bf16.mxu0 0
    %264 = vmatpush1.bf16.msra.mxu0 0
    %265 = vmatprep.subr.bf16.mxu0 0
    %266 = vmatpush1.bf16.msra.mxu0 0
    %267 = vmatprep.subr.bf16.mxu0 0
    %268 = vmatpush1.bf16.msra.mxu0 0
    %269 = vmatprep.subr.bf16.mxu0 0
    %270 = vmatpush1.bf16.msra.mxu0 0
    %271 = vmatprep.mubr.bf16.mxu0 0
    %272 = vmatmul.mubr.bf16.gmra.mrb[0].mxu0 %v216
    %v273 = vpop.f32.mrb[0].mxu0
    %v274 = vadd.f32 0.0, %v273
    %v275 = vpop.f32.mrb[0].mxu0
    %v276 = vadd.f32 0.0, %v275
    %v277 = vpop.f32.mrb[0].mxu0
    %v278 = vadd.f32 0.0, %v277
    %v279 = vpop.f32.mrb[0].mxu0
    %v280 = vadd.f32 0.0, %v279
    %281 = vmatprep.mubr.bf16.mxu0 0
    %282 = vmatmul.mubr.bf16.gmra.mrb[0].mxu0 %v219
    %v283 = vpop.f32.mrb[0].mxu0
    %v284 = vadd.f32 0.0, %v283
    %v285 = vpop.f32.mrb[0].mxu0
    %v286 = vadd.f32 0.0, %v285
    %v287 = vpop.f32.mrb[0].mxu0
    %v288 = vadd.f32 0.0, %v287
    %v289 = vpop.f32.mrb[0].mxu0
    %v290 = vadd.f32 0.0, %v289
    %291 = vmatprep.mubr.bf16.mxu0 0
    %292 = vmatmul.mubr.bf16.gmra.mrb[0].mxu0 %v222
    %v293 = vpop.f32.mrb[0].mxu0
    %v294 = vadd.f32 0.0, %v293
    %v295 = vpop.f32.mrb[0].mxu0
    %v296 = vadd.f32 0.0, %v295
    %v297 = vpop.f32.mrb[0].mxu0
    %v298 = vadd.f32 0.0, %v297
    %v299 = vpop.f32.mrb[0].mxu0
    %v300 = vadd.f32 0.0, %v299
    %301 = vmatprep.mubr.bf16.mxu0 0
    %302 = vmatmul.mubr.bf16.gmra.mrb[0].mxu0 %v225
    %v303 = vpop.f32.mrb[0].mxu0
    %v304 = vadd.f32 0.0, %v303
    %v305 = vpop.f32.mrb[0].mxu0
    %v306 = vadd.f32 0.0, %v305
    %v307 = vpop.f32.mrb[0].mxu0
    %v308 = vadd.f32 0.0, %v307
    %v309 = vpop.f32.mrb[0].mxu0
    %v310 = vadd.f32 0.0, %v309
    %311 = vmatprep.mubr.bf16.mxu0 0
    %312 = vmatmul.mubr.bf16.gmra.mrb[0].mxu0 %v228
    %v313 = vpop.f32.mrb[0].mxu0
    %v314 = vadd.f32 0.0, %v313
    %v315 = vpop.f32.mrb[0].mxu0
    %v316 = vadd.f32 0.0, %v315
    %v317 = vpop.f32.mrb[0].mxu0
    %v318 = vadd.f32 0.0, %v317
    %v319 = vpop.f32.mrb[0].mxu0
    %v320 = vadd.f32 0.0, %v319
    %321 = vmatprep.mubr.bf16.mxu0 0
    %322 = vmatmul.mubr.bf16.gmra.mrb[0].mxu0 %v231
    %v323 = vpop.f32.mrb[0].mxu0
    %v324 = vadd.f32 0.0, %v323
    %v325 = vpop.f32.mrb[0].mxu0
    %v326 = vadd.f32 0.0, %v325
    %v327 = vpop.f32.mrb[0].mxu0
    %v328 = vadd.f32 0.0, %v327
    %v329 = vpop.f32.mrb[0].mxu0
    %v330 = vadd.f32 0.0, %v329
    %331 = vmatprep.mubr.bf16.mxu0 0
    %332 = vmatmul.mubr.bf16.gmra.mrb[0].mxu0 %v234
    %v333 = vpop.f32.mrb[0].mxu0
    %v334 = vadd.f32 0.0, %v333
    %v335 = vpop.f32.mrb[0].mxu0
    %v336 = vadd.f32 0.0, %v335
    %v337 = vpop.f32.mrb[0].mxu0
    %v338 = vadd.f32 0.0, %v337
    %v339 = vpop.f32.mrb[0].mxu0
    %v340 = vadd.f32 0.0, %v339
    %341 = vmatprep.mubr.bf16.mxu0 0
    %342 = vmatmul.mubr.bf16.gmra.mrb[0].mxu0 %v237
    %v343 = vpop.f32.mrb[0].mxu0
    %v344 = vadd.f32 0.0, %v343
    %v345 = vpop.f32.mrb[0].mxu0
    %v346 = vadd.f32 0.0, %v345
    %v347 = vpop.f32.mrb[0].mxu0
    %v348 = vadd.f32 0.0, %v347
    %v349 = vpop.f32.mrb[0].mxu0
    %v350 = vadd.f32 0.0, %v349
    %351 = vdwg.mxu0
    %352 = vmatprep.subr.bf16.mxu0 %v185
    %353 = vmatpush1.bf16.msra.mxu0 %v184
    %354 = vmatprep.subr.bf16.mxu0 %v189
    %355 = vmatpush1.bf16.msra.mxu0 %v188
    %356 = vmatprep.subr.bf16.mxu0 %v193
    %357 = vmatpush1.bf16.msra.mxu0 %v192
    %358 = vmatprep.subr.bf16.mxu0 %v197
    %359 = vmatpush1.bf16.msra.mxu0 %v196
    %360 = vmatprep.subr.bf16.mxu0 0
    %361 = vmatpush1.bf16.msra.mxu0 0
    %362 = vmatprep.subr.bf16.mxu0 0
    %363 = vmatpush1.bf16.msra.mxu0 0
    %364 = vmatprep.subr.bf16.mxu0 0
    %365 = vmatpush1.bf16.msra.mxu0 0
    %366 = vmatprep.subr.bf16.mxu0 0
    %367 = vmatpush1.bf16.msra.mxu0 0
    %368 = vmatprep.subr.bf16.mxu0 0
    %369 = vmatpush1.bf16.msra.mxu0 0
    %370 = vmatprep.subr.bf16.mxu0 0
    %371 = vmatpush1.bf16.msra.mxu0 0
    %372 = vmatprep.subr.bf16.mxu0 0
    %373 = vmatpush1.bf16.msra.mxu0 0
    %374 = vmatprep.subr.bf16.mxu0 0
    %375 = vmatpush1.bf16.msra.mxu0 0
    %376 = vmatprep.subr.bf16.mxu0 0
    %377 = vmatpush1.bf16.msra.mxu0 0
    %378 = vmatprep.subr.bf16.mxu0 0
    %379 = vmatpush1.bf16.msra.mxu0 0
    %380 = vmatprep.subr.bf16.mxu0 0
    %381 = vmatpush1.bf16.msra.mxu0 0
    %382 = vmatprep.subr.bf16.mxu0 0
    %383 = vmatpush1.bf16.msra.mxu0 0
    %384 = vmatprep.mubr.bf16.mxu0 0
    %385 = vmatmul.mubr.bf16.gmra.mrb[0].mxu0 %v216
    %v386 = vpop.f32.mrb[0].mxu0
    %v387 = vadd.f32 0.0, %v386
    %v388 = vpop.f32.mrb[0].mxu0
    %v389 = vadd.f32 0.0, %v388
    %v390 = vpop.f32.mrb[0].mxu0
    %v391 = vadd.f32 0.0, %v390
    %v392 = vpop.f32.mrb[0].mxu0
    %v393 = vadd.f32 0.0, %v392
    %394 = vmatprep.mubr.bf16.mxu0 0
    %395 = vmatmul.mubr.bf16.gmra.mrb[0].mxu0 %v219
    %v396 = vpop.f32.mrb[0].mxu0
    %v397 = vadd.f32 0.0, %v396
    %v398 = vpop.f32.mrb[0].mxu0
    %v399 = vadd.f32 0.0, %v398
    %v400 = vpop.f32.mrb[0].mxu0
    %v401 = vadd.f32 0.0, %v400
    %v402 = vpop.f32.mrb[0].mxu0
    %v403 = vadd.f32 0.0, %v402
    %404 = vmatprep.mubr.bf16.mxu0 0
    %405 = vmatmul.mubr.bf16.gmra.mrb[0].mxu0 %v222
    %v406 = vpop.f32.mrb[0].mxu0
    %v407 = vadd.f32 0.0, %v406
    %v408 = vpop.f32.mrb[0].mxu0
    %v409 = vadd.f32 0.0, %v408
    %v410 = vpop.f32.mrb[0].mxu0
    %v411 = vadd.f32 0.0, %v410
    %v412 = vpop.f32.mrb[0].mxu0
    %v413 = vadd.f32 0.0, %v412
    %414 = vmatprep.mubr.bf16.mxu0 0
    %415 = vmatmul.mubr.bf16.gmra.mrb[0].mxu0 %v225
    %v416 = vpop.f32.mrb[0].mxu0
    %v417 = vadd.f32 0.0, %v416
    %v418 = vpop.f32.mrb[0].mxu0
    %v419 = vadd.f32 0.0, %v418
    %v420 = vpop.f32.mrb[0].mxu0
    %v421 = vadd.f32 0.0, %v420
    %v422 = vpop.f32.mrb[0].mxu0
    %v423 = vadd.f32 0.0, %v422
    %424 = vmatprep.mubr.bf16.mxu0 0
    %425 = vmatmul.mubr.bf16.gmra.mrb[0].mxu0 %v228
    %v426 = vpop.f32.mrb[0].mxu0
    %v427 = vadd.f32 0.0, %v426
    %v428 = vpop.f32.mrb[0].mxu0
    %v429 = vadd.f32 0.0, %v428
    %v430 = vpop.f32.mrb[0].mxu0
    %v431 = vadd.f32 0.0, %v430
    %v432 = vpop.f32.mrb[0].mxu0
    %v433 = vadd.f32 0.0, %v432
    %434 = vmatprep.mubr.bf16.mxu0 0
    %435 = vmatmul.mubr.bf16.gmra.mrb[0].mxu0 %v231
    %v436 = vpop.f32.mrb[0].mxu0
    %v437 = vadd.f32 0.0, %v436
    %v438 = vpop.f32.mrb[0].mxu0
    %v439 = vadd.f32 0.0, %v438
    %v440 = vpop.f32.mrb[0].mxu0
    %v441 = vadd.f32 0.0, %v440
    %v442 = vpop.f32.mrb[0].mxu0
    %v443 = vadd.f32 0.0, %v442
    %444 = vmatprep.mubr.bf16.mxu0 0
    %445 = vmatmul.mubr.bf16.gmra.mrb[0].mxu0 %v234
    %v446 = vpop.f32.mrb[0].mxu0
    %v447 = vadd.f32 0.0, %v446
    %v448 = vpop.f32.mrb[0].mxu0
    %v449 = vadd.f32 0.0, %v448
    %v450 = vpop.f32.mrb[0].mxu0
    %v451 = vadd.f32 0.0, %v450
    %v452 = vpop.f32.mrb[0].mxu0
    %v453 = vadd.f32 0.0, %v452
    %454 = vmatprep.mubr.bf16.mxu0 0
    %455 = vmatmul.mubr.bf16.gmra.mrb[0].mxu0 %v237
    %v456 = vpop.f32.mrb[0].mxu0
    %v457 = vadd.f32 0.0, %v456
    %v458 = vpop.f32.mrb[0].mxu0
    %v459 = vadd.f32 0.0, %v458
    %v460 = vpop.f32.mrb[0].mxu0
    %v461 = vadd.f32 0.0, %v460
    %v462 = vpop.f32.mrb[0].mxu0
    %v463 = vadd.f32 0.0, %v462
    %464 = vdwg.mxu0
    %465 = vst [vmem:[%s4] sm:$0xff] %v274
    %466 = vst [vmem:[%s4 + $0x8] sm:$0xff] %v276
    %467 = vst [vmem:[%s4 + $0x10] sm:$0xff] %v387
    %468 = vst [vmem:[%s4 + $0x18] sm:$0xff] %v389
    %469 = vst [vmem:[%s4 + $0x20] sm:$0xff] %v278
    %470 = vst [vmem:[%s4 + $0x28] sm:$0xff] %v280
    %471 = vst [vmem:[%s4 + $0x30] sm:$0xff] %v391
    %472 = vst [vmem:[%s4 + $0x38] sm:$0xff] %v393
    %473 = vst [vmem:[%s4 + $0x40] sm:$0xff] %v284
    %474 = vst [vmem:[%s4 + $0x48] sm:$0xff] %v286
    %475 = vst [vmem:[%s4 + $0x50] sm:$0xff] %v397
    %476 = vst [vmem:[%s4 + $0x58] sm:$0xff] %v399
    %477 = vst [vmem:[%s4 + $0x60] sm:$0xff] %v288
    %478 = vst [vmem:[%s4 + $0x68] sm:$0xff] %v290
    %479 = vst [vmem:[%s4 + $0x70] sm:$0xff] %v401
    %480 = vst [vmem:[%s4 + $0x78] sm:$0xff] %v403
    %481 = vst [vmem:[%s4 + $0x80] sm:$0xff] %v294
    %482 = vst [vmem:[%s4 + $0x88] sm:$0xff] %v296
    %483 = vst [vmem:[%s4 + $0x90] sm:$0xff] %v407
    %484 = vst [vmem:[%s4 + $0x98] sm:$0xff] %v409
    %485 = vst [vmem:[%s4 + $0xa0] sm:$0xff] %v298
    %486 = vst [vmem:[%s4 + $0xa8] sm:$0xff] %v300
    %487 = vst [vmem:[%s4 + $0xb0] sm:$0xff] %v411
    %488 = vst [vmem:[%s4 + $0xb8] sm:$0xff] %v413
    %489 = vst [vmem:[%s4 + $0xc0] sm:$0xff] %v304
    %490 = vst [vmem:[%s4 + $0xc8] sm:$0xff] %v306
    %491 = vst [vmem:[%s4 + $0xd0] sm:$0xff] %v417
    %492 = vst [vmem:[%s4 + $0xd8] sm:$0xff] %v419
    %493 = vst [vmem:[%s4 + $0xe0] sm:$0xff] %v308
    %494 = vst [vmem:[%s4 + $0xe8] sm:$0xff] %v310
    %495 = vst [vmem:[%s4 + $0xf0] sm:$0xff] %v421
    %496 = vst [vmem:[%s4 + $0xf8] sm:$0xff] %v423
    %497 = vst [vmem:[%s4 + $0x100] sm:$0xff] %v314
    %498 = vst [vmem:[%s4 + $0x108] sm:$0xff] %v316
    %499 = vst [vmem:[%s4 + $0x110] sm:$0xff] %v427
    %500 = vst [vmem:[%s4 + $0x118] sm:$0xff] %v429
    %501 = vst [vmem:[%s4 + $0x120] sm:$0xff] %v318
    %502 = vst [vmem:[%s4 + $0x128] sm:$0xff] %v320
    %503 = vst [vmem:[%s4 + $0x130] sm:$0xff] %v431
    %504 = vst [vmem:[%s4 + $0x138] sm:$0xff] %v433
    %505 = vst [vmem:[%s4 + $0x140] sm:$0xff] %v324
    %506 = vst [vmem:[%s4 + $0x148] sm:$0xff] %v326
    %507 = vst [vmem:[%s4 + $0x150] sm:$0xff] %v437
    %508 = vst [vmem:[%s4 + $0x158] sm:$0xff] %v439
    %509 = vst [vmem:[%s4 + $0x160] sm:$0xff] %v328
    %510 = vst [vmem:[%s4 + $0x168] sm:$0xff] %v330
    %511 = vst [vmem:[%s4 + $0x170] sm:$0xff] %v441
    %512 = vst [vmem:[%s4 + $0x178] sm:$0xff] %v443
    %513 = vst [vmem:[%s4 + $0x180] sm:$0xff] %v334
    %514 = vst [vmem:[%s4 + $0x188] sm:$0xff] %v336
    %515 = vst [vmem:[%s4 + $0x190] sm:$0xff] %v447
    %516 = vst [vmem:[%s4 + $0x198] sm:$0xff] %v449
    %517 = vst [vmem:[%s4 + $0x1a0] sm:$0xff] %v338
    %518 = vst [vmem:[%s4 + $0x1a8] sm:$0xff] %v340
    %519 = vst [vmem:[%s4 + $0x1b0] sm:$0xff] %v451
    %520 = vst [vmem:[%s4 + $0x1b8] sm:$0xff] %v453
    %521 = vst [vmem:[%s4 + $0x1c0] sm:$0xff] %v344
    %522 = vst [vmem:[%s4 + $0x1c8] sm:$0xff] %v346
    %523 = vst [vmem:[%s4 + $0x1d0] sm:$0xff] %v457
    %524 = vst [vmem:[%s4 + $0x1d8] sm:$0xff] %v459
    %525 = vst [vmem:[%s4 + $0x1e0] sm:$0xff] %v348
    %526 = vst [vmem:[%s4 + $0x1e8] sm:$0xff] %v350
    %527 = vst [vmem:[%s4 + $0x1f0] sm:$0xff] %v461
    %528 = vst [vmem:[%s4 + $0x1f8] sm:$0xff] %v463
    // Predicated region
    $region22: #{netG_forward.6} parent=1 // pred_check
      _
    $region23: #{netG_forward.6} parent=1 // pred_check_branch
      %530 = sbr.rel (0) target = $region25
    $region24: #{netG_forward.6} parent=1 // pred_region
      _
    $region25: #{netG_forward.6} parent=1 // pred_fallthru
      _
    // Predicated region
    $region26: #{netG_forward.6} parent=1 // pred_check
      _
    $region27: #{netG_forward.6} parent=1 // pred_check_branch
      %532 = sbr.rel (0) target = $region29
    $region28: #{netG_forward.6} parent=1 // pred_region
      _
    $region29: #{netG_forward.6} parent=1 // pred_fallthru
      _
    %533 = vsyncpa [#allocation3], 1

// kernel: netG_forward.7
$region0: #{netG_forward.7}
  #allocation0 [shape = 'u32[]', space=smem, size = 0x4, offset = 0x4, fixed_abs, tag = 'smem constant byte address 0x4 - core index']
  #allocation1 [shape = 'u32[144,128]{1,0:T(1,128)}', space=vmem, size = 0x12000, scoped, tag = 'internal scratch']
  %s0 = inlined_call_operand.vmem [shape: f32[512,32], index: 0, kind: input, shape index: {}]
  %s1 = inlined_call_operand.vmem [shape: f32[1,32], index: 1, kind: input, shape index: {}]
  %s2 = inlined_call_operand.vmem [shape: f32[1,32], index: 2, kind: input, shape index: {}]
  %s3 = inlined_call_operand.vmem [shape: bf16[32,256], index: 3, kind: input, shape index: {}]
  %s4 = inlined_call_operand.vmem [shape: f32[512,256], index: 4, kind: output, shape index: {}]
  %s5 = sld [smem:[#allocation0]]
  $region49: #{netG_forward.7} parent=0
    _
  %s7 = ssub.s32 1, %s5
  %s8 = scalar_select 0, %s7, %s5
  loop: start=0, step=1, limit=4
  $region2: #{netG_forward.7} parent=0 // loop_pre_header
    _
  $region3: #{netG_forward.7} parent=0 // loop_header
    %s10 = sphi 0, %s14
    %p11 = scmp.ge.s32.totalorder %s10, 4
    %s20 = sphi 0, %s22
    %s23 = sphi 0, %s20
    %s24 = sphi 0, %s23
    %s40 = sphi 0, %s24
    %s44 = sphi 0, %s44
    %s46 = sphi 0, %s44
    %s47 = sphi 0, %s46
    %s61 = sphi 0, %s47
    %s65 = sphi 0, %s65
    %s67 = sphi 0, %s65
    %s68 = sphi 0, %s67
    %s82 = sphi 0, %s68
    %s86 = sphi 0, %s86
    %s88 = sphi 0, %s86
    %s89 = sphi 0, %s88
    %s103 = sphi 0, %s89
    %s109 = sphi 0, %s111
    %s112 = sphi 0, %s109
    %s113 = sphi 0, %s112
    %s129 = sphi 0, %s113
  $region4: #{netG_forward.7} parent=0 // loop_header_branch
    %13 = sbr.rel (%p11) target = $region8
  $region5: #{netG_forward.7} parent=0 // loop_body
    %s15 = ssub.s32 %s10, 1
    %s16 = ssub.s32 %s10, 2
    %s17 = sadd.s32 %s10, 1
    %s18 = ssub.s32 %s10, %s17
    %p19 = scmp.eq.s32.totalorder %s18, 0
    %s21 = sadd.s32 %s20, 1
    %s22 = scalar_select %p19, %s20, %s21
    %p25 = pneg %p19
    %p26 = scmp.eq.s32.totalorder %s10, 1
    %p27 = por %p25, %p26
    %p28 = scmp.ne.s32.totalorder %s20, %s23
    %p29 = scmp.eq.s32.totalorder %s10, 0
    %p30 = por %p28, %p29
    %p31 = scmp.ne.s32.totalorder %s20, %s23
    %p32 = scmp.eq.s32.totalorder %s15, 1
    %p33 = por %p31, %p32
    %p34 = scmp.ne.s32.totalorder %s23, %s24
    %p35 = scmp.eq.s32.totalorder %s15, 0
    %p36 = por %p34, %p35
    %p37 = scmp.ne.s32.totalorder %s23, %s24
    %p38 = scmp.eq.s32.totalorder %s16, 1
    %p39 = por %p37, %p38
    %p41 = scmp.ne.s32.totalorder %s24, %s40
    %p42 = scmp.eq.s32.totalorder %s16, 0
    %p43 = por %p41, %p42
    %s45 = sadd.s32 %s44, 1
    %p48 = scmp.eq.s32.totalorder %s10, 1
    %p49 = scmp.ne.s32.totalorder %s44, %s46
    %p50 = scmp.eq.s32.totalorder %s10, 0
    %p51 = por %p49, %p50
    %p52 = scmp.ne.s32.totalorder %s44, %s46
    %p53 = scmp.eq.s32.totalorder %s15, 1
    %p54 = por %p52, %p53
    %p55 = scmp.ne.s32.totalorder %s46, %s47
    %p56 = scmp.eq.s32.totalorder %s15, 0
    %p57 = por %p55, %p56
    %p58 = scmp.ne.s32.totalorder %s46, %s47
    %p59 = scmp.eq.s32.totalorder %s16, 1
    %p60 = por %p58, %p59
    %p62 = scmp.ne.s32.totalorder %s47, %s61
    %p63 = scmp.eq.s32.totalorder %s16, 0
    %p64 = por %p62, %p63
    %s66 = sadd.s32 %s65, 1
    %p69 = scmp.eq.s32.totalorder %s10, 1
    %p70 = scmp.ne.s32.totalorder %s65, %s67
    %p71 = scmp.eq.s32.totalorder %s10, 0
    %p72 = por %p70, %p71
    %p73 = scmp.ne.s32.totalorder %s65, %s67
    %p74 = scmp.eq.s32.totalorder %s15, 1
    %p75 = por %p73, %p74
    %p76 = scmp.ne.s32.totalorder %s67, %s68
    %p77 = scmp.eq.s32.totalorder %s15, 0
    %p78 = por %p76, %p77
    %p79 = scmp.ne.s32.totalorder %s67, %s68
    %p80 = scmp.eq.s32.totalorder %s16, 1
    %p81 = por %p79, %p80
    %p83 = scmp.ne.s32.totalorder %s68, %s82
    %p84 = scmp.eq.s32.totalorder %s16, 0
    %p85 = por %p83, %p84
    %s87 = sadd.s32 %s86, 1
    %p90 = scmp.eq.s32.totalorder %s10, 1
    %p91 = scmp.ne.s32.totalorder %s86, %s88
    %p92 = scmp.eq.s32.totalorder %s10, 0
    %p93 = por %p91, %p92
    %p94 = scmp.ne.s32.totalorder %s86, %s88
    %p95 = scmp.eq.s32.totalorder %s15, 1
    %p96 = por %p94, %p95
    %p97 = scmp.ne.s32.totalorder %s88, %s89
    %p98 = scmp.eq.s32.totalorder %s15, 0
    %p99 = por %p97, %p98
    %p100 = scmp.ne.s32.totalorder %s88, %s89
    %p101 = scmp.eq.s32.totalorder %s16, 1
    %p102 = por %p100, %p101
    %p104 = scmp.ne.s32.totalorder %s89, %s103
    %p105 = scmp.eq.s32.totalorder %s16, 0
    %p106 = por %p104, %p105
    %s107 = ssub.s32 %s10, %s17
    %p108 = scmp.eq.s32.totalorder %s107, 0
    %s110 = sadd.s32 %s109, 1
    %s111 = scalar_select %p108, %s109, %s110
    %p114 = pneg %p108
    %p115 = scmp.eq.s32.totalorder %s10, 1
    %p116 = por %p114, %p115
    %p117 = scmp.ne.s32.totalorder %s109, %s112
    %p118 = scmp.eq.s32.totalorder %s10, 0
    %p119 = por %p117, %p118
    %p120 = scmp.ne.s32.totalorder %s109, %s112
    %p121 = scmp.eq.s32.totalorder %s15, 1
    %p122 = por %p120, %p121
    %p123 = scmp.ne.s32.totalorder %s112, %s113
    %p124 = scmp.eq.s32.totalorder %s15, 0
    %p125 = por %p123, %p124
    %p126 = scmp.ne.s32.totalorder %s112, %s113
    %p127 = scmp.eq.s32.totalorder %s16, 1
    %p128 = por %p126, %p127
    %p130 = scmp.ne.s32.totalorder %s113, %s129
    %p131 = scmp.eq.s32.totalorder %s16, 0
    %p132 = por %p130, %p131
    %p133 = scmp.le.s32.totalorder 1, %s10
    %p134 = scmp.lt.s32.totalorder %s10, 3
    %p135 = pnand %p133, %p134
    %p136 = pneg %p135
    // Predicated region
    $region9: #{netG_forward.7} parent=5 // pred_check
      _
    $region10: #{netG_forward.7} parent=5 // pred_check_branch
      %138 = sbr.rel (%p135) target = $region12
    $region11: #{netG_forward.7} parent=5 // pred_region
      %s139 = ssub.s32 %s10, 1
      // Predicated region
      $region13: #{netG_forward.7} parent=11 // pred_check
        %p140 = pneg %p57
      $region14: #{netG_forward.7} parent=11 // pred_check_branch
        %142 = sbr.rel (%p140) target = $region16
      $region15: #{netG_forward.7} parent=11 // pred_region
        _
      $region16: #{netG_forward.7} parent=11 // pred_fallthru
        _
      // Predicated region
      $region17: #{netG_forward.7} parent=11 // pred_check
        %p143 = pneg %p78
      $region18: #{netG_forward.7} parent=11 // pred_check_branch
        %145 = sbr.rel (%p143) target = $region20
      $region19: #{netG_forward.7} parent=11 // pred_region
        _
      $region20: #{netG_forward.7} parent=11 // pred_fallthru
        _
      // Predicated region
      $region21: #{netG_forward.7} parent=11 // pred_check
        %p146 = pneg %p99
      $region22: #{netG_forward.7} parent=11 // pred_check_branch
        %148 = sbr.rel (%p146) target = $region24
      $region23: #{netG_forward.7} parent=11 // pred_region
        _
      $region24: #{netG_forward.7} parent=11 // pred_fallthru
        _
    $region12: #{netG_forward.7} parent=5 // pred_fallthru
      _
    %p149 = scmp.lt.s32.totalorder %s10, 2
    // Predicated region
    $region25: #{netG_forward.7} parent=5 // pred_check
      %p150 = pneg %p149
    $region26: #{netG_forward.7} parent=5 // pred_check_branch
      %152 = sbr.rel (%p150) target = $region28
    $region27: #{netG_forward.7} parent=5 // pred_region
      // Predicated region
      $region29: #{netG_forward.7} parent=27 // pred_check
        %p153 = pneg %p30
      $region30: #{netG_forward.7} parent=27 // pred_check_branch
        %155 = sbr.rel (%p153) target = $region32
      $region31: #{netG_forward.7} parent=27 // pred_region
        %s156 = smul.u32 32, %s10
        %p157 = scmp.lt.s32.totalorder %s156, 63
        %s158 = scalar_select %p157, %s156, 63
        %s159 = smul.addr %s158, 8
        %s160 = scalar_lea.vmem %s0, %s159
        %s161 = smul.u32 32, %s10
      $region32: #{netG_forward.7} parent=27 // pred_fallthru
        _
    $region28: #{netG_forward.7} parent=5 // pred_fallthru
      _
    %p162 = scmp.le.s32.totalorder 1, %s10
    %p163 = scmp.lt.s32.totalorder %s10, 3
    %p164 = pnand %p162, %p163
    %p165 = pneg %p164
    // Predicated region
    $region33: #{netG_forward.7} parent=5 // pred_check
      _
    $region34: #{netG_forward.7} parent=5 // pred_check_branch
      %167 = sbr.rel (%p164) target = $region36
    $region35: #{netG_forward.7} parent=5 // pred_region
      %s168 = ssub.s32 %s10, 1
      %s169 = smul.u32 32, %s15
      %p170 = scmp.lt.s32.totalorder %s169, 63
      %s171 = scalar_select %p170, %s169, 63
      %s172 = smul.addr %s171, 8
      %s173 = scalar_lea.vmem %s0, %s172
      %p174 = pneg %p36
      %p175 = pneg %p33
      %p176 = pneg %p57
      %p177 = pneg %p54
      %p178 = pneg %p78
      %p179 = pneg %p75
      %p180 = pneg %p99
      %p181 = pneg %p96
      %p182 = pneg %p125
      %p183 = pneg %p122
      %s184 = smul.u32 32, %s15
      %p185 = scmp.lt.s32.totalorder %s184, 63
      %s186 = scalar_select %p185, %s184, 63
      %s187 = smul.addr %s186, 2
      %s188 = smul.addr %s187, 8
      %s189 = scalar_lea.vmem %s4, %s188
      %s190 = smul.u32 32, %s15
      %p191 = scmp.lt.s32.totalorder %s190, 63
      %s192 = scalar_select %p191, %s190, 63
      %s193 = smul.addr %s192, 8
      %s194 = scalar_lea.vmem %s0, %s193
      %s195 = smul.u32 32, %s15
      %s196 = smul.u32 32, %s15
      %p197 = scmp.lt.s32.totalorder %s196, 63
      %s198 = scalar_select %p197, %s196, 63
      %s199 = smul.addr %s198, 2
      %s200 = smul.addr %s199, 8
      %s201 = scalar_lea.vmem %s4, %s200
      %s202 = smul.u32 32, %s15
      %v204 = vld [vmem:[%s194] sm:$0xff]
      %v205 = vld [vmem:[%s194 + $0x8] sm:$0xff]
      %v206 = vld [vmem:[%s194 + $0x10] sm:$0xff]
      %v207 = vld [vmem:[%s194 + $0x18] sm:$0xff]
      %v208 = vld [vmem:[%s194 + $0x20] sm:$0xff]
      %v209 = vld [vmem:[%s194 + $0x28] sm:$0xff]
      %v210 = vld [vmem:[%s194 + $0x30] sm:$0xff]
      %v211 = vld [vmem:[%s194 + $0x38] sm:$0xff]
      %v212 = vld [vmem:[%s194 + $0x40] sm:$0xff]
      %v213 = vld [vmem:[%s194 + $0x48] sm:$0xff]
      %v214 = vld [vmem:[%s194 + $0x50] sm:$0xff]
      %v215 = vld [vmem:[%s194 + $0x58] sm:$0xff]
      %v216 = vld [vmem:[%s194 + $0x60] sm:$0xff]
      %v217 = vld [vmem:[%s194 + $0x68] sm:$0xff]
      %v218 = vld [vmem:[%s194 + $0x70] sm:$0xff]
      %v219 = vld [vmem:[%s194 + $0x78] sm:$0xff]
      %v220 = vld [vmem:[%s194 + $0x80] sm:$0xff]
      %v221 = vld [vmem:[%s194 + $0x88] sm:$0xff]
      %v222 = vld [vmem:[%s194 + $0x90] sm:$0xff]
      %v223 = vld [vmem:[%s194 + $0x98] sm:$0xff]
      %v224 = vld [vmem:[%s194 + $0xa0] sm:$0xff]
      %v225 = vld [vmem:[%s194 + $0xa8] sm:$0xff]
      %v226 = vld [vmem:[%s194 + $0xb0] sm:$0xff]
      %v227 = vld [vmem:[%s194 + $0xb8] sm:$0xff]
      %v228 = vld [vmem:[%s194 + $0xc0] sm:$0xff]
      %v229 = vld [vmem:[%s194 + $0xc8] sm:$0xff]
      %v230 = vld [vmem:[%s194 + $0xd0] sm:$0xff]
      %v231 = vld [vmem:[%s194 + $0xd8] sm:$0xff]
      %v232 = vld [vmem:[%s194 + $0xe0] sm:$0xff]
      %v233 = vld [vmem:[%s194 + $0xe8] sm:$0xff]
      %v234 = vld [vmem:[%s194 + $0xf0] sm:$0xff]
      %v235 = vld [vmem:[%s194 + $0xf8] sm:$0xff]
      %v236 = vld [vmem:[%s1] sm:$0x1]
      %v238 = vlaneseq
      %v239 = vshrl.u32 %v238, 7
      %v240 = vsub.s32 0, %v239
      %v241 = vrot.slane %v236, %v240
      %v243 = vmul.f32 %v204, %v241
      %v244 = vmul.f32 %v205, %v241
      %v245 = vmul.f32 %v206, %v241
      %v246 = vmul.f32 %v207, %v241
      %v247 = vmul.f32 %v208, %v241
      %v248 = vmul.f32 %v209, %v241
      %v249 = vmul.f32 %v210, %v241
      %v250 = vmul.f32 %v211, %v241
      %v251 = vmul.f32 %v212, %v241
      %v252 = vmul.f32 %v213, %v241
      %v253 = vmul.f32 %v214, %v241
      %v254 = vmul.f32 %v215, %v241
      %v255 = vmul.f32 %v216, %v241
      %v256 = vmul.f32 %v217, %v241
      %v257 = vmul.f32 %v218, %v241
      %v258 = vmul.f32 %v219, %v241
      %v259 = vmul.f32 %v220, %v241
      %v260 = vmul.f32 %v221, %v241
      %v261 = vmul.f32 %v222, %v241
      %v262 = vmul.f32 %v223, %v241
      %v263 = vmul.f32 %v224, %v241
      %v264 = vmul.f32 %v225, %v241
      %v265 = vmul.f32 %v226, %v241
      %v266 = vmul.f32 %v227, %v241
      %v267 = vmul.f32 %v228, %v241
      %v268 = vmul.f32 %v229, %v241
      %v269 = vmul.f32 %v230, %v241
      %v270 = vmul.f32 %v231, %v241
      %v271 = vmul.f32 %v232, %v241
      %v272 = vmul.f32 %v233, %v241
      %v273 = vmul.f32 %v234, %v241
      %v274 = vmul.f32 %v235, %v241
      %v275 = vld [vmem:[%s2] sm:$0x1]
      %v277 = vlaneseq
      %v278 = vshrl.u32 %v277, 7
      %v279 = vsub.s32 0, %v278
      %v280 = vrot.slane %v275, %v279
      %v282 = vadd.f32 %v243, %v280
      %v283 = vadd.f32 %v244, %v280
      %v284 = vadd.f32 %v245, %v280
      %v285 = vadd.f32 %v246, %v280
      %v286 = vadd.f32 %v247, %v280
      %v287 = vadd.f32 %v248, %v280
      %v288 = vadd.f32 %v249, %v280
      %v289 = vadd.f32 %v250, %v280
      %v290 = vadd.f32 %v251, %v280
      %v291 = vadd.f32 %v252, %v280
      %v292 = vadd.f32 %v253, %v280
      %v293 = vadd.f32 %v254, %v280
      %v294 = vadd.f32 %v255, %v280
      %v295 = vadd.f32 %v256, %v280
      %v296 = vadd.f32 %v257, %v280
      %v297 = vadd.f32 %v258, %v280
      %v298 = vadd.f32 %v259, %v280
      %v299 = vadd.f32 %v260, %v280
      %v300 = vadd.f32 %v261, %v280
      %v301 = vadd.f32 %v262, %v280
      %v302 = vadd.f32 %v263, %v280
      %v303 = vadd.f32 %v264, %v280
      %v304 = vadd.f32 %v265, %v280
      %v305 = vadd.f32 %v266, %v280
      %v306 = vadd.f32 %v267, %v280
      %v307 = vadd.f32 %v268, %v280
      %v308 = vadd.f32 %v269, %v280
      %v309 = vadd.f32 %v270, %v280
      %v310 = vadd.f32 %v271, %v280
      %v311 = vadd.f32 %v272, %v280
      %v312 = vadd.f32 %v273, %v280
      %v313 = vadd.f32 %v274, %v280
      %v314 = vmax.f32 %v282, 0.0
      %v315 = vmax.f32 %v283, 0.0
      %v316 = vmax.f32 %v284, 0.0
      %v317 = vmax.f32 %v285, 0.0
      %v318 = vmax.f32 %v286, 0.0
      %v319 = vmax.f32 %v287, 0.0
      %v320 = vmax.f32 %v288, 0.0
      %v321 = vmax.f32 %v289, 0.0
      %v322 = vmax.f32 %v290, 0.0
      %v323 = vmax.f32 %v291, 0.0
      %v324 = vmax.f32 %v292, 0.0
      %v325 = vmax.f32 %v293, 0.0
      %v326 = vmax.f32 %v294, 0.0
      %v327 = vmax.f32 %v295, 0.0
      %v328 = vmax.f32 %v296, 0.0
      %v329 = vmax.f32 %v297, 0.0
      %v330 = vmax.f32 %v298, 0.0
      %v331 = vmax.f32 %v299, 0.0
      %v332 = vmax.f32 %v300, 0.0
      %v333 = vmax.f32 %v301, 0.0
      %v334 = vmax.f32 %v302, 0.0
      %v335 = vmax.f32 %v303, 0.0
      %v336 = vmax.f32 %v304, 0.0
      %v337 = vmax.f32 %v305, 0.0
      %v338 = vmax.f32 %v306, 0.0
      %v339 = vmax.f32 %v307, 0.0
      %v340 = vmax.f32 %v308, 0.0
      %v341 = vmax.f32 %v309, 0.0
      %v342 = vmax.f32 %v310, 0.0
      %v343 = vmax.f32 %v311, 0.0
      %v344 = vmax.f32 %v312, 0.0
      %v345 = vmax.f32 %v313, 0.0
      %v346 = vpack.c.bf16 %v315, %v314
      %v347 = vpack.c.bf16 %v317, %v316
      %v348 = vpack.c.bf16 %v319, %v318
      %v349 = vpack.c.bf16 %v321, %v320
      %v350 = vpack.c.bf16 %v323, %v322
      %v351 = vpack.c.bf16 %v325, %v324
      %v352 = vpack.c.bf16 %v327, %v326
      %v353 = vpack.c.bf16 %v329, %v328
      %v354 = vpack.c.bf16 %v331, %v330
      %v355 = vpack.c.bf16 %v333, %v332
      %v356 = vpack.c.bf16 %v335, %v334
      %v357 = vpack.c.bf16 %v337, %v336
      %v358 = vpack.c.bf16 %v339, %v338
      %v359 = vpack.c.bf16 %v341, %v340
      %v360 = vpack.c.bf16 %v343, %v342
      %v361 = vpack.c.bf16 %v345, %v344
      %v362 = vld [vmem:[%s3] sm:$0xff]
      %v363 = vld [vmem:[%s3 + $0x8] sm:$0xff]
      %v364 = vld [vmem:[%s3 + $0x10] sm:$0xff]
      %v365 = vld [vmem:[%s3 + $0x18] sm:$0xff]
      %v370 = vunpack.c.l.b16 %v362
      %v371 = vunpack.c.h.b16 %v362
      %v372 = vunpack.c.l.b16 %v363
      %v373 = vunpack.c.h.b16 %v363
      %v374 = vunpack.c.l.b16 %v364
      %v375 = vunpack.c.h.b16 %v364
      %v376 = vunpack.c.l.b16 %v365
      %v377 = vunpack.c.h.b16 %v365
      %v378 = vpack.c.b16 %v372, %v370
      %v379 = vpack.c.b16 %v373, %v371
      %v380 = vpack.c.b16 %v376, %v374
      %v381 = vpack.c.b16 %v377, %v375
      %vm386 = vcmask 261120
      %v388 = vsel %vm386, %v346, 0
      %v391 = vsel %vm386, %v347, 0
      %v394 = vsel %vm386, %v348, 0
      %v397 = vsel %vm386, %v349, 0
      %v400 = vsel %vm386, %v350, 0
      %v403 = vsel %vm386, %v351, 0
      %v406 = vsel %vm386, %v352, 0
      %v409 = vsel %vm386, %v353, 0
      %v412 = vsel %vm386, %v354, 0
      %v415 = vsel %vm386, %v355, 0
      %v418 = vsel %vm386, %v356, 0
      %v421 = vsel %vm386, %v357, 0
      %v424 = vsel %vm386, %v358, 0
      %v427 = vsel %vm386, %v359, 0
      %v430 = vsel %vm386, %v360, 0
      %v433 = vsel %vm386, %v361, 0
      %435 = vmatprep.subr.bf16.mxu0 %v379
      %436 = vmatpush1.bf16.msra.mxu0 %v378
      %437 = vmatprep.subr.bf16.mxu0 %v381
      %438 = vmatpush1.bf16.msra.mxu0 %v380
      %439 = vmatprep.subr.bf16.mxu0 0
      %440 = vmatpush1.bf16.msra.mxu0 0
      %441 = vmatprep.subr.bf16.mxu0 0
      %442 = vmatpush1.bf16.msra.mxu0 0
      %443 = vmatprep.subr.bf16.mxu0 0
      %444 = vmatpush1.bf16.msra.mxu0 0
      %445 = vmatprep.subr.bf16.mxu0 0
      %446 = vmatpush1.bf16.msra.mxu0 0
      %447 = vmatprep.subr.bf16.mxu0 0
      %448 = vmatpush1.bf16.msra.mxu0 0
      %449 = vmatprep.subr.bf16.mxu0 0
      %450 = vmatpush1.bf16.msra.mxu0 0
      %451 = vmatprep.subr.bf16.mxu0 0
      %452 = vmatpush1.bf16.msra.mxu0 0
      %453 = vmatprep.subr.bf16.mxu0 0
      %454 = vmatpush1.bf16.msra.mxu0 0
      %455 = vmatprep.subr.bf16.mxu0 0
      %456 = vmatpush1.bf16.msra.mxu0 0
      %457 = vmatprep.subr.bf16.mxu0 0
      %458 = vmatpush1.bf16.msra.mxu0 0
      %459 = vmatprep.subr.bf16.mxu0 0
      %460 = vmatpush1.bf16.msra.mxu0 0
      %461 = vmatprep.subr.bf16.mxu0 0
      %462 = vmatpush1.bf16.msra.mxu0 0
      %463 = vmatprep.subr.bf16.mxu0 0
      %464 = vmatpush1.bf16.msra.mxu0 0
      %465 = vmatprep.subr.bf16.mxu0 0
      %466 = vmatpush1.bf16.msra.mxu0 0
      %467 = vmatprep.mubr.bf16.mxu0 0
      %468 = vmatmul.mubr.bf16.gmra.mrb[0].mxu0 %v388
      %v469 = vpop.f32.mrb[0].mxu0
      %v470 = vadd.f32 0.0, %v469
      %v471 = vpop.f32.mrb[0].mxu0
      %v472 = vadd.f32 0.0, %v471
      %v473 = vpop.f32.mrb[0].mxu0
      %v474 = vadd.f32 0.0, %v473
      %v475 = vpop.f32.mrb[0].mxu0
      %v476 = vadd.f32 0.0, %v475
      %477 = vmatprep.mubr.bf16.mxu0 0
      %478 = vmatmul.mubr.bf16.gmra.mrb[0].mxu0 %v391
      %v479 = vpop.f32.mrb[0].mxu0
      %v480 = vadd.f32 0.0, %v479
      %v481 = vpop.f32.mrb[0].mxu0
      %v482 = vadd.f32 0.0, %v481
      %v483 = vpop.f32.mrb[0].mxu0
      %v484 = vadd.f32 0.0, %v483
      %v485 = vpop.f32.mrb[0].mxu0
      %v486 = vadd.f32 0.0, %v485
      %487 = vmatprep.mubr.bf16.mxu0 0
      %488 = vmatmul.mubr.bf16.gmra.mrb[0].mxu0 %v394
      %v489 = vpop.f32.mrb[0].mxu0
      %v490 = vadd.f32 0.0, %v489
      %v491 = vpop.f32.mrb[0].mxu0
      %v492 = vadd.f32 0.0, %v491
      %v493 = vpop.f32.mrb[0].mxu0
      %v494 = vadd.f32 0.0, %v493
      %v495 = vpop.f32.mrb[0].mxu0
      %v496 = vadd.f32 0.0, %v495
      %497 = vmatprep.mubr.bf16.mxu0 0
      %498 = vmatmul.mubr.bf16.gmra.mrb[0].mxu0 %v397
      %v499 = vpop.f32.mrb[0].mxu0
      %v500 = vadd.f32 0.0, %v499
      %v501 = vpop.f32.mrb[0].mxu0
      %v502 = vadd.f32 0.0, %v501
      %v503 = vpop.f32.mrb[0].mxu0
      %v504 = vadd.f32 0.0, %v503
      %v505 = vpop.f32.mrb[0].mxu0
      %v506 = vadd.f32 0.0, %v505
      %507 = vmatprep.mubr.bf16.mxu0 0
      %508 = vmatmul.mubr.bf16.gmra.mrb[0].mxu0 %v400
      %v509 = vpop.f32.mrb[0].mxu0
      %v510 = vadd.f32 0.0, %v509
      %v511 = vpop.f32.mrb[0].mxu0
      %v512 = vadd.f32 0.0, %v511
      %v513 = vpop.f32.mrb[0].mxu0
      %v514 = vadd.f32 0.0, %v513
      %v515 = vpop.f32.mrb[0].mxu0
      %v516 = vadd.f32 0.0, %v515
      %517 = vmatprep.mubr.bf16.mxu0 0
      %518 = vmatmul.mubr.bf16.gmra.mrb[0].mxu0 %v403
      %v519 = vpop.f32.mrb[0].mxu0
      %v520 = vadd.f32 0.0, %v519
      %v521 = vpop.f32.mrb[0].mxu0
      %v522 = vadd.f32 0.0, %v521
      %v523 = vpop.f32.mrb[0].mxu0
      %v524 = vadd.f32 0.0, %v523
      %v525 = vpop.f32.mrb[0].mxu0
      %v526 = vadd.f32 0.0, %v525
      %527 = vmatprep.mubr.bf16.mxu0 0
      %528 = vmatmul.mubr.bf16.gmra.mrb[0].mxu0 %v406
      %v529 = vpop.f32.mrb[0].mxu0
      %v530 = vadd.f32 0.0, %v529
      %v531 = vpop.f32.mrb[0].mxu0
      %v532 = vadd.f32 0.0, %v531
      %v533 = vpop.f32.mrb[0].mxu0
      %v534 = vadd.f32 0.0, %v533
      %v535 = vpop.f32.mrb[0].mxu0
      %v536 = vadd.f32 0.0, %v535
      %537 = vmatprep.mubr.bf16.mxu0 0
      %538 = vmatmul.mubr.bf16.gmra.mrb[0].mxu0 %v409
      %v539 = vpop.f32.mrb[0].mxu0
      %v540 = vadd.f32 0.0, %v539
      %v541 = vpop.f32.mrb[0].mxu0
      %v542 = vadd.f32 0.0, %v541
      %v543 = vpop.f32.mrb[0].mxu0
      %v544 = vadd.f32 0.0, %v543
      %v545 = vpop.f32.mrb[0].mxu0
      %v546 = vadd.f32 0.0, %v545
      %547 = vmatprep.mubr.bf16.mxu0 0
      %548 = vmatmul.mubr.bf16.gmra.mrb[0].mxu0 %v412
      %v549 = vpop.f32.mrb[0].mxu0
      %v550 = vadd.f32 0.0, %v549
      %v551 = vpop.f32.mrb[0].mxu0
      %v552 = vadd.f32 0.0, %v551
      %v553 = vpop.f32.mrb[0].mxu0
      %v554 = vadd.f32 0.0, %v553
      %v555 = vpop.f32.mrb[0].mxu0
      %v556 = vadd.f32 0.0, %v555
      %557 = vmatprep.mubr.bf16.mxu0 0
      %558 = vmatmul.mubr.bf16.gmra.mrb[0].mxu0 %v415
      %v559 = vpop.f32.mrb[0].mxu0
      %v560 = vadd.f32 0.0, %v559
      %v561 = vpop.f32.mrb[0].mxu0
      %v562 = vadd.f32 0.0, %v561
      %v563 = vpop.f32.mrb[0].mxu0
      %v564 = vadd.f32 0.0, %v563
      %v565 = vpop.f32.mrb[0].mxu0
      %v566 = vadd.f32 0.0, %v565
      %567 = vmatprep.mubr.bf16.mxu0 0
      %568 = vmatmul.mubr.bf16.gmra.mrb[0].mxu0 %v418
      %v569 = vpop.f32.mrb[0].mxu0
      %v570 = vadd.f32 0.0, %v569
      %v571 = vpop.f32.mrb[0].mxu0
      %v572 = vadd.f32 0.0, %v571
      %v573 = vpop.f32.mrb[0].mxu0
      %v574 = vadd.f32 0.0, %v573
      %v575 = vpop.f32.mrb[0].mxu0
      %v576 = vadd.f32 0.0, %v575
      %577 = vmatprep.mubr.bf16.mxu0 0
      %578 = vmatmul.mubr.bf16.gmra.mrb[0].mxu0 %v421
      %v579 = vpop.f32.mrb[0].mxu0
      %v580 = vadd.f32 0.0, %v579
      %v581 = vpop.f32.mrb[0].mxu0
      %v582 = vadd.f32 0.0, %v581
      %v583 = vpop.f32.mrb[0].mxu0
      %v584 = vadd.f32 0.0, %v583
      %v585 = vpop.f32.mrb[0].mxu0
      %v586 = vadd.f32 0.0, %v585
      %587 = vmatprep.mubr.bf16.mxu0 0
      %588 = vmatmul.mubr.bf16.gmra.mrb[0].mxu0 %v424
      %v589 = vpop.f32.mrb[0].mxu0
      %v590 = vadd.f32 0.0, %v589
      %v591 = vpop.f32.mrb[0].mxu0
      %v592 = vadd.f32 0.0, %v591
      %v593 = vpop.f32.mrb[0].mxu0
      %v594 = vadd.f32 0.0, %v593
      %v595 = vpop.f32.mrb[0].mxu0
      %v596 = vadd.f32 0.0, %v595
      %597 = vmatprep.mubr.bf16.mxu0 0
      %598 = vmatmul.mubr.bf16.gmra.mrb[0].mxu0 %v427
      %v599 = vpop.f32.mrb[0].mxu0
      %v600 = vadd.f32 0.0, %v599
      %v601 = vpop.f32.mrb[0].mxu0
      %v602 = vadd.f32 0.0, %v601
      %v603 = vpop.f32.mrb[0].mxu0
      %v604 = vadd.f32 0.0, %v603
      %v605 = vpop.f32.mrb[0].mxu0
      %v606 = vadd.f32 0.0, %v605
      %607 = vmatprep.mubr.bf16.mxu0 0
      %608 = vmatmul.mubr.bf16.gmra.mrb[0].mxu0 %v430
      %v609 = vpop.f32.mrb[0].mxu0
      %v610 = vadd.f32 0.0, %v609
      %v611 = vpop.f32.mrb[0].mxu0
      %v612 = vadd.f32 0.0, %v611
      %v613 = vpop.f32.mrb[0].mxu0
      %v614 = vadd.f32 0.0, %v613
      %v615 = vpop.f32.mrb[0].mxu0
      %v616 = vadd.f32 0.0, %v615
      %617 = vmatprep.mubr.bf16.mxu0 0
      %618 = vmatmul.mubr.bf16.gmra.mrb[0].mxu0 %v433
      %v619 = vpop.f32.mrb[0].mxu0
      %v620 = vadd.f32 0.0, %v619
      %v621 = vpop.f32.mrb[0].mxu0
      %v622 = vadd.f32 0.0, %v621
      %v623 = vpop.f32.mrb[0].mxu0
      %v624 = vadd.f32 0.0, %v623
      %v625 = vpop.f32.mrb[0].mxu0
      %v626 = vadd.f32 0.0, %v625
      %627 = vdwg.mxu0
      %628 = vst [vmem:[%s201] sm:$0xff] %v470
      %629 = vst [vmem:[%s201 + $0x8] sm:$0xff] %v472
      %630 = vst [vmem:[%s201 + $0x10] sm:$0xff] %v474
      %631 = vst [vmem:[%s201 + $0x18] sm:$0xff] %v476
      %632 = vst [vmem:[%s201 + $0x20] sm:$0xff] %v480
      %633 = vst [vmem:[%s201 + $0x28] sm:$0xff] %v482
      %634 = vst [vmem:[%s201 + $0x30] sm:$0xff] %v484
      %635 = vst [vmem:[%s201 + $0x38] sm:$0xff] %v486
      %636 = vst [vmem:[%s201 + $0x40] sm:$0xff] %v490
      %637 = vst [vmem:[%s201 + $0x48] sm:$0xff] %v492
      %638 = vst [vmem:[%s201 + $0x50] sm:$0xff] %v494
      %639 = vst [vmem:[%s201 + $0x58] sm:$0xff] %v496
      %640 = vst [vmem:[%s201 + $0x60] sm:$0xff] %v500
      %641 = vst [vmem:[%s201 + $0x68] sm:$0xff] %v502
      %642 = vst [vmem:[%s201 + $0x70] sm:$0xff] %v504
      %643 = vst [vmem:[%s201 + $0x78] sm:$0xff] %v506
      %644 = vst [vmem:[%s201 + $0x80] sm:$0xff] %v510
      %645 = vst [vmem:[%s201 + $0x88] sm:$0xff] %v512
      %646 = vst [vmem:[%s201 + $0x90] sm:$0xff] %v514
      %647 = vst [vmem:[%s201 + $0x98] sm:$0xff] %v516
      %648 = vst [vmem:[%s201 + $0xa0] sm:$0xff] %v520
      %649 = vst [vmem:[%s201 + $0xa8] sm:$0xff] %v522
      %650 = vst [vmem:[%s201 + $0xb0] sm:$0xff] %v524
      %651 = vst [vmem:[%s201 + $0xb8] sm:$0xff] %v526
      %652 = vst [vmem:[%s201 + $0xc0] sm:$0xff] %v530
      %653 = vst [vmem:[%s201 + $0xc8] sm:$0xff] %v532
      %654 = vst [vmem:[%s201 + $0xd0] sm:$0xff] %v534
      %655 = vst [vmem:[%s201 + $0xd8] sm:$0xff] %v536
      %656 = vst [vmem:[%s201 + $0xe0] sm:$0xff] %v540
      %657 = vst [vmem:[%s201 + $0xe8] sm:$0xff] %v542
      %658 = vst [vmem:[%s201 + $0xf0] sm:$0xff] %v544
      %659 = vst [vmem:[%s201 + $0xf8] sm:$0xff] %v546
      %660 = vst [vmem:[%s201 + $0x100] sm:$0xff] %v550
      %661 = vst [vmem:[%s201 + $0x108] sm:$0xff] %v552
      %662 = vst [vmem:[%s201 + $0x110] sm:$0xff] %v554
      %663 = vst [vmem:[%s201 + $0x118] sm:$0xff] %v556
      %664 = vst [vmem:[%s201 + $0x120] sm:$0xff] %v560
      %665 = vst [vmem:[%s201 + $0x128] sm:$0xff] %v562
      %666 = vst [vmem:[%s201 + $0x130] sm:$0xff] %v564
      %667 = vst [vmem:[%s201 + $0x138] sm:$0xff] %v566
      %668 = vst [vmem:[%s201 + $0x140] sm:$0xff] %v570
      %669 = vst [vmem:[%s201 + $0x148] sm:$0xff] %v572
      %670 = vst [vmem:[%s201 + $0x150] sm:$0xff] %v574
      %671 = vst [vmem:[%s201 + $0x158] sm:$0xff] %v576
      %672 = vst [vmem:[%s201 + $0x160] sm:$0xff] %v580
      %673 = vst [vmem:[%s201 + $0x168] sm:$0xff] %v582
      %674 = vst [vmem:[%s201 + $0x170] sm:$0xff] %v584
      %675 = vst [vmem:[%s201 + $0x178] sm:$0xff] %v586
      %676 = vst [vmem:[%s201 + $0x180] sm:$0xff] %v590
      %677 = vst [vmem:[%s201 + $0x188] sm:$0xff] %v592
      %678 = vst [vmem:[%s201 + $0x190] sm:$0xff] %v594
      %679 = vst [vmem:[%s201 + $0x198] sm:$0xff] %v596
      %680 = vst [vmem:[%s201 + $0x1a0] sm:$0xff] %v600
      %681 = vst [vmem:[%s201 + $0x1a8] sm:$0xff] %v602
      %682 = vst [vmem:[%s201 + $0x1b0] sm:$0xff] %v604
      %683 = vst [vmem:[%s201 + $0x1b8] sm:$0xff] %v606
      %684 = vst [vmem:[%s201 + $0x1c0] sm:$0xff] %v610
      %685 = vst [vmem:[%s201 + $0x1c8] sm:$0xff] %v612
      %686 = vst [vmem:[%s201 + $0x1d0] sm:$0xff] %v614
      %687 = vst [vmem:[%s201 + $0x1d8] sm:$0xff] %v616
      %688 = vst [vmem:[%s201 + $0x1e0] sm:$0xff] %v620
      %689 = vst [vmem:[%s201 + $0x1e8] sm:$0xff] %v622
      %690 = vst [vmem:[%s201 + $0x1f0] sm:$0xff] %v624
      %691 = vst [vmem:[%s201 + $0x1f8] sm:$0xff] %v626
      %s692 = smul.u32 32, %s15
      %p693 = scmp.lt.s32.totalorder %s692, 63
      %s694 = scalar_select %p693, %s692, 63
      %s695 = smul.addr %s694, 2
      %s696 = smul.addr %s695, 8
      %s697 = scalar_lea.vmem %s4, %s696
      // Predicated region
      $region37: #{netG_forward.7} parent=35 // pred_check
        %p698 = pneg %p122
      $region38: #{netG_forward.7} parent=35 // pred_check_branch
        %700 = sbr.rel (%p698) target = $region40
      $region39: #{netG_forward.7} parent=35 // pred_region
        %s701 = smul.u32 32, %s15
      $region40: #{netG_forward.7} parent=35 // pred_fallthru
        _
    $region36: #{netG_forward.7} parent=5 // pred_fallthru
      _
    %p702 = scmp.le.s32.totalorder 2, %s10
    // Predicated region
    $region41: #{netG_forward.7} parent=5 // pred_check
      %p703 = pneg %p702
    $region42: #{netG_forward.7} parent=5 // pred_check_branch
      %705 = sbr.rel (%p703) target = $region44
    $region43: #{netG_forward.7} parent=5 // pred_region
      %s706 = ssub.s32 %s10, 2
      // Predicated region
      $region45: #{netG_forward.7} parent=43 // pred_check
        %p707 = pneg %p128
      $region46: #{netG_forward.7} parent=43 // pred_check_branch
        %709 = sbr.rel (%p707) target = $region48
      $region47: #{netG_forward.7} parent=43 // pred_region
        %s710 = smul.u32 32, %s16
        %p711 = scmp.lt.s32.totalorder %s710, 63
        %s712 = scalar_select %p711, %s710, 63
        %s713 = smul.addr %s712, 2
        %s714 = smul.addr %s713, 8
        %s715 = scalar_lea.vmem %s4, %s714
      $region48: #{netG_forward.7} parent=43 // pred_fallthru
        _
    $region44: #{netG_forward.7} parent=5 // pred_fallthru
      _
  $region6: #{netG_forward.7} parent=0 // loop_footer
    %s14 = sadd.s32 1, %s10
  $region7: #{netG_forward.7} parent=0 // loop_footer_branch
    %9 = sbr.rel target = $region3
  $region8: #{netG_forward.7} parent=0 // loop_exit
    _

// kernel: netG_forward.8
$region0: #{netG_forward.8}
  #allocation0 [shape = 'u32[]', space=smem, size = 0x4, offset = 0x4, fixed_abs, tag = 'smem constant byte address 0x4 - core index']
  #allocation1 [shape = 'u32[144,128]{1,0:T(1,128)}', space=vmem, size = 0x12000, scoped, tag = 'internal scratch']
  %s0 = inlined_call_operand.vmem [shape: f32[2048,16], index: 0, kind: input, shape index: {}]
  %s1 = inlined_call_operand.vmem [shape: f32[1,16], index: 1, kind: input, shape index: {}]
  %s2 = inlined_call_operand.vmem [shape: f32[1,16], index: 2, kind: input, shape index: {}]
  %s3 = inlined_call_operand.vmem [shape: bf16[16,128], index: 3, kind: input, shape index: {}]
  %s4 = inlined_call_operand.vmem [shape: f32[2048,128], index: 4, kind: output, shape index: {}]
  %s5 = sld [smem:[#allocation0]]
  $region49: #{netG_forward.8} parent=0
    _
  %s7 = ssub.s32 1, %s5
  %s8 = scalar_select 0, %s7, %s5
  loop: start=0, step=1, limit=4
  $region2: #{netG_forward.8} parent=0 // loop_pre_header
    _
  $region3: #{netG_forward.8} parent=0 // loop_header
    %s10 = sphi 0, %s14
    %p11 = scmp.ge.s32.totalorder %s10, 4
    %s20 = sphi 0, %s22
    %s23 = sphi 0, %s20
    %s24 = sphi 0, %s23
    %s40 = sphi 0, %s24
    %s44 = sphi 0, %s44
    %s46 = sphi 0, %s44
    %s47 = sphi 0, %s46
    %s61 = sphi 0, %s47
    %s65 = sphi 0, %s65
    %s67 = sphi 0, %s65
    %s68 = sphi 0, %s67
    %s82 = sphi 0, %s68
    %s86 = sphi 0, %s86
    %s88 = sphi 0, %s86
    %s89 = sphi 0, %s88
    %s103 = sphi 0, %s89
    %s109 = sphi 0, %s111
    %s112 = sphi 0, %s109
    %s113 = sphi 0, %s112
    %s129 = sphi 0, %s113
  $region4: #{netG_forward.8} parent=0 // loop_header_branch
    %13 = sbr.rel (%p11) target = $region8
  $region5: #{netG_forward.8} parent=0 // loop_body
    %s15 = ssub.s32 %s10, 1
    %s16 = ssub.s32 %s10, 2
    %s17 = sadd.s32 %s10, 1
    %s18 = ssub.s32 %s10, %s17
    %p19 = scmp.eq.s32.totalorder %s18, 0
    %s21 = sadd.s32 %s20, 1
    %s22 = scalar_select %p19, %s20, %s21
    %p25 = pneg %p19
    %p26 = scmp.eq.s32.totalorder %s10, 1
    %p27 = por %p25, %p26
    %p28 = scmp.ne.s32.totalorder %s20, %s23
    %p29 = scmp.eq.s32.totalorder %s10, 0
    %p30 = por %p28, %p29
    %p31 = scmp.ne.s32.totalorder %s20, %s23
    %p32 = scmp.eq.s32.totalorder %s15, 1
    %p33 = por %p31, %p32
    %p34 = scmp.ne.s32.totalorder %s23, %s24
    %p35 = scmp.eq.s32.totalorder %s15, 0
    %p36 = por %p34, %p35
    %p37 = scmp.ne.s32.totalorder %s23, %s24
    %p38 = scmp.eq.s32.totalorder %s16, 1
    %p39 = por %p37, %p38
    %p41 = scmp.ne.s32.totalorder %s24, %s40
    %p42 = scmp.eq.s32.totalorder %s16, 0
    %p43 = por %p41, %p42
    %s45 = sadd.s32 %s44, 1
    %p48 = scmp.eq.s32.totalorder %s10, 1
    %p49 = scmp.ne.s32.totalorder %s44, %s46
    %p50 = scmp.eq.s32.totalorder %s10, 0
    %p51 = por %p49, %p50
    %p52 = scmp.ne.s32.totalorder %s44, %s46
    %p53 = scmp.eq.s32.totalorder %s15, 1
    %p54 = por %p52, %p53
    %p55 = scmp.ne.s32.totalorder %s46, %s47
    %p56 = scmp.eq.s32.totalorder %s15, 0
    %p57 = por %p55, %p56
    %p58 = scmp.ne.s32.totalorder %s46, %s47
    %p59 = scmp.eq.s32.totalorder %s16, 1
    %p60 = por %p58, %p59
    %p62 = scmp.ne.s32.totalorder %s47, %s61
    %p63 = scmp.eq.s32.totalorder %s16, 0
    %p64 = por %p62, %p63
    %s66 = sadd.s32 %s65, 1
    %p69 = scmp.eq.s32.totalorder %s10, 1
    %p70 = scmp.ne.s32.totalorder %s65, %s67
    %p71 = scmp.eq.s32.totalorder %s10, 0
    %p72 = por %p70, %p71
    %p73 = scmp.ne.s32.totalorder %s65, %s67
    %p74 = scmp.eq.s32.totalorder %s15, 1
    %p75 = por %p73, %p74
    %p76 = scmp.ne.s32.totalorder %s67, %s68
    %p77 = scmp.eq.s32.totalorder %s15, 0
    %p78 = por %p76, %p77
    %p79 = scmp.ne.s32.totalorder %s67, %s68
    %p80 = scmp.eq.s32.totalorder %s16, 1
    %p81 = por %p79, %p80
    %p83 = scmp.ne.s32.totalorder %s68, %s82
    %p84 = scmp.eq.s32.totalorder %s16, 0
    %p85 = por %p83, %p84
    %s87 = sadd.s32 %s86, 1
    %p90 = scmp.eq.s32.totalorder %s10, 1
    %p91 = scmp.ne.s32.totalorder %s86, %s88
    %p92 = scmp.eq.s32.totalorder %s10, 0
    %p93 = por %p91, %p92
    %p94 = scmp.ne.s32.totalorder %s86, %s88
    %p95 = scmp.eq.s32.totalorder %s15, 1
    %p96 = por %p94, %p95
    %p97 = scmp.ne.s32.totalorder %s88, %s89
    %p98 = scmp.eq.s32.totalorder %s15, 0
    %p99 = por %p97, %p98
    %p100 = scmp.ne.s32.totalorder %s88, %s89
    %p101 = scmp.eq.s32.totalorder %s16, 1
    %p102 = por %p100, %p101
    %p104 = scmp.ne.s32.totalorder %s89, %s103
    %p105 = scmp.eq.s32.totalorder %s16, 0
    %p106 = por %p104, %p105
    %s107 = ssub.s32 %s10, %s17
    %p108 = scmp.eq.s32.totalorder %s107, 0
    %s110 = sadd.s32 %s109, 1
    %s111 = scalar_select %p108, %s109, %s110
    %p114 = pneg %p108
    %p115 = scmp.eq.s32.totalorder %s10, 1
    %p116 = por %p114, %p115
    %p117 = scmp.ne.s32.totalorder %s109, %s112
    %p118 = scmp.eq.s32.totalorder %s10, 0
    %p119 = por %p117, %p118
    %p120 = scmp.ne.s32.totalorder %s109, %s112
    %p121 = scmp.eq.s32.totalorder %s15, 1
    %p122 = por %p120, %p121
    %p123 = scmp.ne.s32.totalorder %s112, %s113
    %p124 = scmp.eq.s32.totalorder %s15, 0
    %p125 = por %p123, %p124
    %p126 = scmp.ne.s32.totalorder %s112, %s113
    %p127 = scmp.eq.s32.totalorder %s16, 1
    %p128 = por %p126, %p127
    %p130 = scmp.ne.s32.totalorder %s113, %s129
    %p131 = scmp.eq.s32.totalorder %s16, 0
    %p132 = por %p130, %p131
    %p133 = scmp.le.s32.totalorder 1, %s10
    %p134 = scmp.lt.s32.totalorder %s10, 3
    %p135 = pnand %p133, %p134
    %p136 = pneg %p135
    // Predicated region
    $region9: #{netG_forward.8} parent=5 // pred_check
      _
    $region10: #{netG_forward.8} parent=5 // pred_check_branch
      %138 = sbr.rel (%p135) target = $region12
    $region11: #{netG_forward.8} parent=5 // pred_region
      %s139 = ssub.s32 %s10, 1
      // Predicated region
      $region13: #{netG_forward.8} parent=11 // pred_check
        %p140 = pneg %p57
      $region14: #{netG_forward.8} parent=11 // pred_check_branch
        %142 = sbr.rel (%p140) target = $region16
      $region15: #{netG_forward.8} parent=11 // pred_region
        _
      $region16: #{netG_forward.8} parent=11 // pred_fallthru
        _
      // Predicated region
      $region17: #{netG_forward.8} parent=11 // pred_check
        %p143 = pneg %p78
      $region18: #{netG_forward.8} parent=11 // pred_check_branch
        %145 = sbr.rel (%p143) target = $region20
      $region19: #{netG_forward.8} parent=11 // pred_region
        _
      $region20: #{netG_forward.8} parent=11 // pred_fallthru
        _
      // Predicated region
      $region21: #{netG_forward.8} parent=11 // pred_check
        %p146 = pneg %p99
      $region22: #{netG_forward.8} parent=11 // pred_check_branch
        %148 = sbr.rel (%p146) target = $region24
      $region23: #{netG_forward.8} parent=11 // pred_region
        _
      $region24: #{netG_forward.8} parent=11 // pred_fallthru
        _
    $region12: #{netG_forward.8} parent=5 // pred_fallthru
      _
    %p149 = scmp.lt.s32.totalorder %s10, 2
    // Predicated region
    $region25: #{netG_forward.8} parent=5 // pred_check
      %p150 = pneg %p149
    $region26: #{netG_forward.8} parent=5 // pred_check_branch
      %152 = sbr.rel (%p150) target = $region28
    $region27: #{netG_forward.8} parent=5 // pred_region
      // Predicated region
      $region29: #{netG_forward.8} parent=27 // pred_check
        %p153 = pneg %p30
      $region30: #{netG_forward.8} parent=27 // pred_check_branch
        %155 = sbr.rel (%p153) target = $region32
      $region31: #{netG_forward.8} parent=27 // pred_region
        %s156 = smul.u32 128, %s10
        %p157 = scmp.lt.s32.totalorder %s156, 255
        %s158 = scalar_select %p157, %s156, 255
        %s159 = smul.addr %s158, 8
        %s160 = scalar_lea.vmem %s0, %s159
        %s161 = smul.u32 128, %s10
      $region32: #{netG_forward.8} parent=27 // pred_fallthru
        _
    $region28: #{netG_forward.8} parent=5 // pred_fallthru
      _
    %p162 = scmp.le.s32.totalorder 1, %s10
    %p163 = scmp.lt.s32.totalorder %s10, 3
    %p164 = pnand %p162, %p163
    %p165 = pneg %p164
    // Predicated region
    $region33: #{netG_forward.8} parent=5 // pred_check
      _
    $region34: #{netG_forward.8} parent=5 // pred_check_branch
      %167 = sbr.rel (%p164) target = $region36
    $region35: #{netG_forward.8} parent=5 // pred_region
      %s168 = ssub.s32 %s10, 1
      %s169 = smul.u32 128, %s15
      %p170 = scmp.lt.s32.totalorder %s169, 255
      %s171 = scalar_select %p170, %s169, 255
      %s172 = smul.addr %s171, 8
      %s173 = scalar_lea.vmem %s0, %s172
      %p174 = pneg %p36
      %p175 = pneg %p33
      %p176 = pneg %p57
      %p177 = pneg %p54
      %p178 = pneg %p78
      %p179 = pneg %p75
      %p180 = pneg %p99
      %p181 = pneg %p96
      %p182 = pneg %p125
      %p183 = pneg %p122
      %s184 = smul.u32 128, %s15
      %p185 = scmp.lt.s32.totalorder %s184, 255
      %s186 = scalar_select %p185, %s184, 255
      %s187 = smul.addr %s186, 8
      %s188 = scalar_lea.vmem %s4, %s187
      %s189 = smul.u32 128, %s15
      %p190 = scmp.lt.s32.totalorder %s189, 255
      %s191 = scalar_select %p190, %s189, 255
      %s192 = smul.addr %s191, 8
      %s193 = scalar_lea.vmem %s0, %s192
      %s194 = smul.u32 128, %s15
      %s195 = smul.u32 128, %s15
      %p196 = scmp.lt.s32.totalorder %s195, 255
      %s197 = scalar_select %p196, %s195, 255
      %s198 = smul.addr %s197, 8
      %s199 = scalar_lea.vmem %s4, %s198
      %s200 = smul.u32 128, %s15
      %v202 = vld [vmem:[%s193] sm:$0xff]
      %v203 = vld [vmem:[%s193 + $0x8] sm:$0xff]
      %v204 = vld [vmem:[%s193 + $0x10] sm:$0xff]
      %v205 = vld [vmem:[%s193 + $0x18] sm:$0xff]
      %v206 = vld [vmem:[%s193 + $0x20] sm:$0xff]
      %v207 = vld [vmem:[%s193 + $0x28] sm:$0xff]
      %v208 = vld [vmem:[%s193 + $0x30] sm:$0xff]
      %v209 = vld [vmem:[%s193 + $0x38] sm:$0xff]
      %v210 = vld [vmem:[%s193 + $0x40] sm:$0xff]
      %v211 = vld [vmem:[%s193 + $0x48] sm:$0xff]
      %v212 = vld [vmem:[%s193 + $0x50] sm:$0xff]
      %v213 = vld [vmem:[%s193 + $0x58] sm:$0xff]
      %v214 = vld [vmem:[%s193 + $0x60] sm:$0xff]
      %v215 = vld [vmem:[%s193 + $0x68] sm:$0xff]
      %v216 = vld [vmem:[%s193 + $0x70] sm:$0xff]
      %v217 = vld [vmem:[%s193 + $0x78] sm:$0xff]
      %v218 = vld [vmem:[%s193 + $0x80] sm:$0xff]
      %v219 = vld [vmem:[%s193 + $0x88] sm:$0xff]
      %v220 = vld [vmem:[%s193 + $0x90] sm:$0xff]
      %v221 = vld [vmem:[%s193 + $0x98] sm:$0xff]
      %v222 = vld [vmem:[%s193 + $0xa0] sm:$0xff]
      %v223 = vld [vmem:[%s193 + $0xa8] sm:$0xff]
      %v224 = vld [vmem:[%s193 + $0xb0] sm:$0xff]
      %v225 = vld [vmem:[%s193 + $0xb8] sm:$0xff]
      %v226 = vld [vmem:[%s193 + $0xc0] sm:$0xff]
      %v227 = vld [vmem:[%s193 + $0xc8] sm:$0xff]
      %v228 = vld [vmem:[%s193 + $0xd0] sm:$0xff]
      %v229 = vld [vmem:[%s193 + $0xd8] sm:$0xff]
      %v230 = vld [vmem:[%s193 + $0xe0] sm:$0xff]
      %v231 = vld [vmem:[%s193 + $0xe8] sm:$0xff]
      %v232 = vld [vmem:[%s193 + $0xf0] sm:$0xff]
      %v233 = vld [vmem:[%s193 + $0xf8] sm:$0xff]
      %v234 = vld [vmem:[%s193 + $0x100] sm:$0xff]
      %v235 = vld [vmem:[%s193 + $0x108] sm:$0xff]
      %v236 = vld [vmem:[%s193 + $0x110] sm:$0xff]
      %v237 = vld [vmem:[%s193 + $0x118] sm:$0xff]
      %v238 = vld [vmem:[%s193 + $0x120] sm:$0xff]
      %v239 = vld [vmem:[%s193 + $0x128] sm:$0xff]
      %v240 = vld [vmem:[%s193 + $0x130] sm:$0xff]
      %v241 = vld [vmem:[%s193 + $0x138] sm:$0xff]
      %v242 = vld [vmem:[%s193 + $0x140] sm:$0xff]
      %v243 = vld [vmem:[%s193 + $0x148] sm:$0xff]
      %v244 = vld [vmem:[%s193 + $0x150] sm:$0xff]
      %v245 = vld [vmem:[%s193 + $0x158] sm:$0xff]
      %v246 = vld [vmem:[%s193 + $0x160] sm:$0xff]
      %v247 = vld [vmem:[%s193 + $0x168] sm:$0xff]
      %v248 = vld [vmem:[%s193 + $0x170] sm:$0xff]
      %v249 = vld [vmem:[%s193 + $0x178] sm:$0xff]
      %v250 = vld [vmem:[%s193 + $0x180] sm:$0xff]
      %v251 = vld [vmem:[%s193 + $0x188] sm:$0xff]
      %v252 = vld [vmem:[%s193 + $0x190] sm:$0xff]
      %v253 = vld [vmem:[%s193 + $0x198] sm:$0xff]
      %v254 = vld [vmem:[%s193 + $0x1a0] sm:$0xff]
      %v255 = vld [vmem:[%s193 + $0x1a8] sm:$0xff]
      %v256 = vld [vmem:[%s193 + $0x1b0] sm:$0xff]
      %v257 = vld [vmem:[%s193 + $0x1b8] sm:$0xff]
      %v258 = vld [vmem:[%s193 + $0x1c0] sm:$0xff]
      %v259 = vld [vmem:[%s193 + $0x1c8] sm:$0xff]
      %v260 = vld [vmem:[%s193 + $0x1d0] sm:$0xff]
      %v261 = vld [vmem:[%s193 + $0x1d8] sm:$0xff]
      %v262 = vld [vmem:[%s193 + $0x1e0] sm:$0xff]
      %v263 = vld [vmem:[%s193 + $0x1e8] sm:$0xff]
      %v264 = vld [vmem:[%s193 + $0x1f0] sm:$0xff]
      %v265 = vld [vmem:[%s193 + $0x1f8] sm:$0xff]
      %v266 = vld [vmem:[%s193 + $0x200] sm:$0xff]
      %v267 = vld [vmem:[%s193 + $0x208] sm:$0xff]
      %v268 = vld [vmem:[%s193 + $0x210] sm:$0xff]
      %v269 = vld [vmem:[%s193 + $0x218] sm:$0xff]
      %v270 = vld [vmem:[%s193 + $0x220] sm:$0xff]
      %v271 = vld [vmem:[%s193 + $0x228] sm:$0xff]
      %v272 = vld [vmem:[%s193 + $0x230] sm:$0xff]
      %v273 = vld [vmem:[%s193 + $0x238] sm:$0xff]
      %v274 = vld [vmem:[%s193 + $0x240] sm:$0xff]
      %v275 = vld [vmem:[%s193 + $0x248] sm:$0xff]
      %v276 = vld [vmem:[%s193 + $0x250] sm:$0xff]
      %v277 = vld [vmem:[%s193 + $0x258] sm:$0xff]
      %v278 = vld [vmem:[%s193 + $0x260] sm:$0xff]
      %v279 = vld [vmem:[%s193 + $0x268] sm:$0xff]
      %v280 = vld [vmem:[%s193 + $0x270] sm:$0xff]
      %v281 = vld [vmem:[%s193 + $0x278] sm:$0xff]
      %v282 = vld [vmem:[%s193 + $0x280] sm:$0xff]
      %v283 = vld [vmem:[%s193 + $0x288] sm:$0xff]
      %v284 = vld [vmem:[%s193 + $0x290] sm:$0xff]
      %v285 = vld [vmem:[%s193 + $0x298] sm:$0xff]
      %v286 = vld [vmem:[%s193 + $0x2a0] sm:$0xff]
      %v287 = vld [vmem:[%s193 + $0x2a8] sm:$0xff]
      %v288 = vld [vmem:[%s193 + $0x2b0] sm:$0xff]
      %v289 = vld [vmem:[%s193 + $0x2b8] sm:$0xff]
      %v290 = vld [vmem:[%s193 + $0x2c0] sm:$0xff]
      %v291 = vld [vmem:[%s193 + $0x2c8] sm:$0xff]
      %v292 = vld [vmem:[%s193 + $0x2d0] sm:$0xff]
      %v293 = vld [vmem:[%s193 + $0x2d8] sm:$0xff]
      %v294 = vld [vmem:[%s193 + $0x2e0] sm:$0xff]
      %v295 = vld [vmem:[%s193 + $0x2e8] sm:$0xff]
      %v296 = vld [vmem:[%s193 + $0x2f0] sm:$0xff]
      %v297 = vld [vmem:[%s193 + $0x2f8] sm:$0xff]
      %v298 = vld [vmem:[%s193 + $0x300] sm:$0xff]
      %v299 = vld [vmem:[%s193 + $0x308] sm:$0xff]
      %v300 = vld [vmem:[%s193 + $0x310] sm:$0xff]
      %v301 = vld [vmem:[%s193 + $0x318] sm:$0xff]
      %v302 = vld [vmem:[%s193 + $0x320] sm:$0xff]
      %v303 = vld [vmem:[%s193 + $0x328] sm:$0xff]
      %v304 = vld [vmem:[%s193 + $0x330] sm:$0xff]
      %v305 = vld [vmem:[%s193 + $0x338] sm:$0xff]
      %v306 = vld [vmem:[%s193 + $0x340] sm:$0xff]
      %v307 = vld [vmem:[%s193 + $0x348] sm:$0xff]
      %v308 = vld [vmem:[%s193 + $0x350] sm:$0xff]
      %v309 = vld [vmem:[%s193 + $0x358] sm:$0xff]
      %v310 = vld [vmem:[%s193 + $0x360] sm:$0xff]
      %v311 = vld [vmem:[%s193 + $0x368] sm:$0xff]
      %v312 = vld [vmem:[%s193 + $0x370] sm:$0xff]
      %v313 = vld [vmem:[%s193 + $0x378] sm:$0xff]
      %v314 = vld [vmem:[%s193 + $0x380] sm:$0xff]
      %v315 = vld [vmem:[%s193 + $0x388] sm:$0xff]
      %v316 = vld [vmem:[%s193 + $0x390] sm:$0xff]
      %v317 = vld [vmem:[%s193 + $0x398] sm:$0xff]
      %v318 = vld [vmem:[%s193 + $0x3a0] sm:$0xff]
      %v319 = vld [vmem:[%s193 + $0x3a8] sm:$0xff]
      %v320 = vld [vmem:[%s193 + $0x3b0] sm:$0xff]
      %v321 = vld [vmem:[%s193 + $0x3b8] sm:$0xff]
      %v322 = vld [vmem:[%s193 + $0x3c0] sm:$0xff]
      %v323 = vld [vmem:[%s193 + $0x3c8] sm:$0xff]
      %v324 = vld [vmem:[%s193 + $0x3d0] sm:$0xff]
      %v325 = vld [vmem:[%s193 + $0x3d8] sm:$0xff]
      %v326 = vld [vmem:[%s193 + $0x3e0] sm:$0xff]
      %v327 = vld [vmem:[%s193 + $0x3e8] sm:$0xff]
      %v328 = vld [vmem:[%s193 + $0x3f0] sm:$0xff]
      %v329 = vld [vmem:[%s193 + $0x3f8] sm:$0xff]
      %v330 = vld [vmem:[%s1] sm:$0x1]
      %v332 = vlaneseq
      %v333 = vshrl.u32 %v332, 7
      %v334 = vsub.s32 0, %v333
      %v335 = vrot.slane %v330, %v334
      %v337 = vmul.f32 %v202, %v335
      %v338 = vmul.f32 %v203, %v335
      %v339 = vmul.f32 %v204, %v335
      %v340 = vmul.f32 %v205, %v335
      %v341 = vmul.f32 %v206, %v335
      %v342 = vmul.f32 %v207, %v335
      %v343 = vmul.f32 %v208, %v335
      %v344 = vmul.f32 %v209, %v335
      %v345 = vmul.f32 %v210, %v335
      %v346 = vmul.f32 %v211, %v335
      %v347 = vmul.f32 %v212, %v335
      %v348 = vmul.f32 %v213, %v335
      %v349 = vmul.f32 %v214, %v335
      %v350 = vmul.f32 %v215, %v335
      %v351 = vmul.f32 %v216, %v335
      %v352 = vmul.f32 %v217, %v335
      %v353 = vmul.f32 %v218, %v335
      %v354 = vmul.f32 %v219, %v335
      %v355 = vmul.f32 %v220, %v335
      %v356 = vmul.f32 %v221, %v335
      %v357 = vmul.f32 %v222, %v335
      %v358 = vmul.f32 %v223, %v335
      %v359 = vmul.f32 %v224, %v335
      %v360 = vmul.f32 %v225, %v335
      %v361 = vmul.f32 %v226, %v335
      %v362 = vmul.f32 %v227, %v335
      %v363 = vmul.f32 %v228, %v335
      %v364 = vmul.f32 %v229, %v335
      %v365 = vmul.f32 %v230, %v335
      %v366 = vmul.f32 %v231, %v335
      %v367 = vmul.f32 %v232, %v335
      %v368 = vmul.f32 %v233, %v335
      %v369 = vmul.f32 %v234, %v335
      %v370 = vmul.f32 %v235, %v335
      %v371 = vmul.f32 %v236, %v335
      %v372 = vmul.f32 %v237, %v335
      %v373 = vmul.f32 %v238, %v335
      %v374 = vmul.f32 %v239, %v335
      %v375 = vmul.f32 %v240, %v335
      %v376 = vmul.f32 %v241, %v335
      %v377 = vmul.f32 %v242, %v335
      %v378 = vmul.f32 %v243, %v335
      %v379 = vmul.f32 %v244, %v335
      %v380 = vmul.f32 %v245, %v335
      %v381 = vmul.f32 %v246, %v335
      %v382 = vmul.f32 %v247, %v335
      %v383 = vmul.f32 %v248, %v335
      %v384 = vmul.f32 %v249, %v335
      %v385 = vmul.f32 %v250, %v335
      %v386 = vmul.f32 %v251, %v335
      %v387 = vmul.f32 %v252, %v335
      %v388 = vmul.f32 %v253, %v335
      %v389 = vmul.f32 %v254, %v335
      %v390 = vmul.f32 %v255, %v335
      %v391 = vmul.f32 %v256, %v335
      %v392 = vmul.f32 %v257, %v335
      %v393 = vmul.f32 %v258, %v335
      %v394 = vmul.f32 %v259, %v335
      %v395 = vmul.f32 %v260, %v335
      %v396 = vmul.f32 %v261, %v335
      %v397 = vmul.f32 %v262, %v335
      %v398 = vmul.f32 %v263, %v335
      %v399 = vmul.f32 %v264, %v335
      %v400 = vmul.f32 %v265, %v335
      %v401 = vmul.f32 %v266, %v335
      %v402 = vmul.f32 %v267, %v335
      %v403 = vmul.f32 %v268, %v335
      %v404 = vmul.f32 %v269, %v335
      %v405 = vmul.f32 %v270, %v335
      %v406 = vmul.f32 %v271, %v335
      %v407 = vmul.f32 %v272, %v335
      %v408 = vmul.f32 %v273, %v335
      %v409 = vmul.f32 %v274, %v335
      %v410 = vmul.f32 %v275, %v335
      %v411 = vmul.f32 %v276, %v335
      %v412 = vmul.f32 %v277, %v335
      %v413 = vmul.f32 %v278, %v335
      %v414 = vmul.f32 %v279, %v335
      %v415 = vmul.f32 %v280, %v335
      %v416 = vmul.f32 %v281, %v335
      %v417 = vmul.f32 %v282, %v335
      %v418 = vmul.f32 %v283, %v335
      %v419 = vmul.f32 %v284, %v335
      %v420 = vmul.f32 %v285, %v335
      %v421 = vmul.f32 %v286, %v335
      %v422 = vmul.f32 %v287, %v335
      %v423 = vmul.f32 %v288, %v335
      %v424 = vmul.f32 %v289, %v335
      %v425 = vmul.f32 %v290, %v335
      %v426 = vmul.f32 %v291, %v335
      %v427 = vmul.f32 %v292, %v335
      %v428 = vmul.f32 %v293, %v335
      %v429 = vmul.f32 %v294, %v335
      %v430 = vmul.f32 %v295, %v335
      %v431 = vmul.f32 %v296, %v335
      %v432 = vmul.f32 %v297, %v335
      %v433 = vmul.f32 %v298, %v335
      %v434 = vmul.f32 %v299, %v335
      %v435 = vmul.f32 %v300, %v335
      %v436 = vmul.f32 %v301, %v335
      %v437 = vmul.f32 %v302, %v335
      %v438 = vmul.f32 %v303, %v335
      %v439 = vmul.f32 %v304, %v335
      %v440 = vmul.f32 %v305, %v335
      %v441 = vmul.f32 %v306, %v335
      %v442 = vmul.f32 %v307, %v335
      %v443 = vmul.f32 %v308, %v335
      %v444 = vmul.f32 %v309, %v335
      %v445 = vmul.f32 %v310, %v335
      %v446 = vmul.f32 %v311, %v335
      %v447 = vmul.f32 %v312, %v335
      %v448 = vmul.f32 %v313, %v335
      %v449 = vmul.f32 %v314, %v335
      %v450 = vmul.f32 %v315, %v335
      %v451 = vmul.f32 %v316, %v335
      %v452 = vmul.f32 %v317, %v335
      %v453 = vmul.f32 %v318, %v335
      %v454 = vmul.f32 %v319, %v335
      %v455 = vmul.f32 %v320, %v335
      %v456 = vmul.f32 %v321, %v335
      %v457 = vmul.f32 %v322, %v335
      %v458 = vmul.f32 %v323, %v335
      %v459 = vmul.f32 %v324, %v335
      %v460 = vmul.f32 %v325, %v335
      %v461 = vmul.f32 %v326, %v335
      %v462 = vmul.f32 %v327, %v335
      %v463 = vmul.f32 %v328, %v335
      %v464 = vmul.f32 %v329, %v335
      %v465 = vld [vmem:[%s2] sm:$0x1]
      %v467 = vlaneseq
      %v468 = vshrl.u32 %v467, 7
      %v469 = vsub.s32 0, %v468
      %v470 = vrot.slane %v465, %v469
      %v472 = vadd.f32 %v337, %v470
      %v473 = vadd.f32 %v338, %v470
      %v474 = vadd.f32 %v339, %v470
      %v475 = vadd.f32 %v340, %v470
      %v476 = vadd.f32 %v341, %v470
      %v477 = vadd.f32 %v342, %v470
      %v478 = vadd.f32 %v343, %v470
      %v479 = vadd.f32 %v344, %v470
      %v480 = vadd.f32 %v345, %v470
      %v481 = vadd.f32 %v346, %v470
      %v482 = vadd.f32 %v347, %v470
      %v483 = vadd.f32 %v348, %v470
      %v484 = vadd.f32 %v349, %v470
      %v485 = vadd.f32 %v350, %v470
      %v486 = vadd.f32 %v351, %v470
      %v487 = vadd.f32 %v352, %v470
      %v488 = vadd.f32 %v353, %v470
      %v489 = vadd.f32 %v354, %v470
      %v490 = vadd.f32 %v355, %v470
      %v491 = vadd.f32 %v356, %v470
      %v492 = vadd.f32 %v357, %v470
      %v493 = vadd.f32 %v358, %v470
      %v494 = vadd.f32 %v359, %v470
      %v495 = vadd.f32 %v360, %v470
      %v496 = vadd.f32 %v361, %v470
      %v497 = vadd.f32 %v362, %v470
      %v498 = vadd.f32 %v363, %v470
      %v499 = vadd.f32 %v364, %v470
      %v500 = vadd.f32 %v365, %v470
      %v501 = vadd.f32 %v366, %v470
      %v502 = vadd.f32 %v367, %v470
      %v503 = vadd.f32 %v368, %v470
      %v504 = vadd.f32 %v369, %v470
      %v505 = vadd.f32 %v370, %v470
      %v506 = vadd.f32 %v371, %v470
      %v507 = vadd.f32 %v372, %v470
      %v508 = vadd.f32 %v373, %v470
      %v509 = vadd.f32 %v374, %v470
      %v510 = vadd.f32 %v375, %v470
      %v511 = vadd.f32 %v376, %v470
      %v512 = vadd.f32 %v377, %v470
      %v513 = vadd.f32 %v378, %v470
      %v514 = vadd.f32 %v379, %v470
      %v515 = vadd.f32 %v380, %v470
      %v516 = vadd.f32 %v381, %v470
      %v517 = vadd.f32 %v382, %v470
      %v518 = vadd.f32 %v383, %v470
      %v519 = vadd.f32 %v384, %v470
      %v520 = vadd.f32 %v385, %v470
      %v521 = vadd.f32 %v386, %v470
      %v522 = vadd.f32 %v387, %v470
      %v523 = vadd.f32 %v388, %v470
      %v524 = vadd.f32 %v389, %v470
      %v525 = vadd.f32 %v390, %v470
      %v526 = vadd.f32 %v391, %v470
      %v527 = vadd.f32 %v392, %v470
      %v528 = vadd.f32 %v393, %v470
      %v529 = vadd.f32 %v394, %v470
      %v530 = vadd.f32 %v395, %v470
      %v531 = vadd.f32 %v396, %v470
      %v532 = vadd.f32 %v397, %v470
      %v533 = vadd.f32 %v398, %v470
      %v534 = vadd.f32 %v399, %v470
      %v535 = vadd.f32 %v400, %v470
      %v536 = vadd.f32 %v401, %v470
      %v537 = vadd.f32 %v402, %v470
      %v538 = vadd.f32 %v403, %v470
      %v539 = vadd.f32 %v404, %v470
      %v540 = vadd.f32 %v405, %v470
      %v541 = vadd.f32 %v406, %v470
      %v542 = vadd.f32 %v407, %v470
      %v543 = vadd.f32 %v408, %v470
      %v544 = vadd.f32 %v409, %v470
      %v545 = vadd.f32 %v410, %v470
      %v546 = vadd.f32 %v411, %v470
      %v547 = vadd.f32 %v412, %v470
      %v548 = vadd.f32 %v413, %v470
      %v549 = vadd.f32 %v414, %v470
      %v550 = vadd.f32 %v415, %v470
      %v551 = vadd.f32 %v416, %v470
      %v552 = vadd.f32 %v417, %v470
      %v553 = vadd.f32 %v418, %v470
      %v554 = vadd.f32 %v419, %v470
      %v555 = vadd.f32 %v420, %v470
      %v556 = vadd.f32 %v421, %v470
      %v557 = vadd.f32 %v422, %v470
      %v558 = vadd.f32 %v423, %v470
      %v559 = vadd.f32 %v424, %v470
      %v560 = vadd.f32 %v425, %v470
      %v561 = vadd.f32 %v426, %v470
      %v562 = vadd.f32 %v427, %v470
      %v563 = vadd.f32 %v428, %v470
      %v564 = vadd.f32 %v429, %v470
      %v565 = vadd.f32 %v430, %v470
      %v566 = vadd.f32 %v431, %v470
      %v567 = vadd.f32 %v432, %v470
      %v568 = vadd.f32 %v433, %v470
      %v569 = vadd.f32 %v434, %v470
      %v570 = vadd.f32 %v435, %v470
      %v571 = vadd.f32 %v436, %v470
      %v572 = vadd.f32 %v437, %v470
      %v573 = vadd.f32 %v438, %v470
      %v574 = vadd.f32 %v439, %v470
      %v575 = vadd.f32 %v440, %v470
      %v576 = vadd.f32 %v441, %v470
      %v577 = vadd.f32 %v442, %v470
      %v578 = vadd.f32 %v443, %v470
      %v579 = vadd.f32 %v444, %v470
      %v580 = vadd.f32 %v445, %v470
      %v581 = vadd.f32 %v446, %v470
      %v582 = vadd.f32 %v447, %v470
      %v583 = vadd.f32 %v448, %v470
      %v584 = vadd.f32 %v449, %v470
      %v585 = vadd.f32 %v450, %v470
      %v586 = vadd.f32 %v451, %v470
      %v587 = vadd.f32 %v452, %v470
      %v588 = vadd.f32 %v453, %v470
      %v589 = vadd.f32 %v454, %v470
      %v590 = vadd.f32 %v455, %v470
      %v591 = vadd.f32 %v456, %v470
      %v592 = vadd.f32 %v457, %v470
      %v593 = vadd.f32 %v458, %v470
      %v594 = vadd.f32 %v459, %v470
      %v595 = vadd.f32 %v460, %v470
      %v596 = vadd.f32 %v461, %v470
      %v597 = vadd.f32 %v462, %v470
      %v598 = vadd.f32 %v463, %v470
      %v599 = vadd.f32 %v464, %v470
      %v600 = vmax.f32 %v472, 0.0
      %v601 = vmax.f32 %v473, 0.0
      %v602 = vmax.f32 %v474, 0.0
      %v603 = vmax.f32 %v475, 0.0
      %v604 = vmax.f32 %v476, 0.0
      %v605 = vmax.f32 %v477, 0.0
      %v606 = vmax.f32 %v478, 0.0
      %v607 = vmax.f32 %v479, 0.0
      %v608 = vmax.f32 %v480, 0.0
      %v609 = vmax.f32 %v481, 0.0
      %v610 = vmax.f32 %v482, 0.0
      %v611 = vmax.f32 %v483, 0.0
      %v612 = vmax.f32 %v484, 0.0
      %v613 = vmax.f32 %v485, 0.0
      %v614 = vmax.f32 %v486, 0.0
      %v615 = vmax.f32 %v487, 0.0
      %v616 = vmax.f32 %v488, 0.0
      %v617 = vmax.f32 %v489, 0.0
      %v618 = vmax.f32 %v490, 0.0
      %v619 = vmax.f32 %v491, 0.0
      %v620 = vmax.f32 %v492, 0.0
      %v621 = vmax.f32 %v493, 0.0
      %v622 = vmax.f32 %v494, 0.0
      %v623 = vmax.f32 %v495, 0.0
      %v624 = vmax.f32 %v496, 0.0
      %v625 = vmax.f32 %v497, 0.0
      %v626 = vmax.f32 %v498, 0.0
      %v627 = vmax.f32 %v499, 0.0
      %v628 = vmax.f32 %v500, 0.0
      %v629 = vmax.f32 %v501, 0.0
      %v630 = vmax.f32 %v502, 0.0
      %v631 = vmax.f32 %v503, 0.0
      %v632 = vmax.f32 %v504, 0.0
      %v633 = vmax.f32 %v505, 0.0
      %v634 = vmax.f32 %v506, 0.0
      %v635 = vmax.f32 %v507, 0.0
      %v636 = vmax.f32 %v508, 0.0
      %v637 = vmax.f32 %v509, 0.0
      %v638 = vmax.f32 %v510, 0.0
      %v639 = vmax.f32 %v511, 0.0
      %v640 = vmax.f32 %v512, 0.0
      %v641 = vmax.f32 %v513, 0.0
      %v642 = vmax.f32 %v514, 0.0
      %v643 = vmax.f32 %v515, 0.0
      %v644 = vmax.f32 %v516, 0.0
      %v645 = vmax.f32 %v517, 0.0
      %v646 = vmax.f32 %v518, 0.0
      %v647 = vmax.f32 %v519, 0.0
      %v648 = vmax.f32 %v520, 0.0
      %v649 = vmax.f32 %v521, 0.0
      %v650 = vmax.f32 %v522, 0.0
      %v651 = vmax.f32 %v523, 0.0
      %v652 = vmax.f32 %v524, 0.0
      %v653 = vmax.f32 %v525, 0.0
      %v654 = vmax.f32 %v526, 0.0
      %v655 = vmax.f32 %v527, 0.0
      %v656 = vmax.f32 %v528, 0.0
      %v657 = vmax.f32 %v529, 0.0
      %v658 = vmax.f32 %v530, 0.0
      %v659 = vmax.f32 %v531, 0.0
      %v660 = vmax.f32 %v532, 0.0
      %v661 = vmax.f32 %v533, 0.0
      %v662 = vmax.f32 %v534, 0.0
      %v663 = vmax.f32 %v535, 0.0
      %v664 = vmax.f32 %v536, 0.0
      %v665 = vmax.f32 %v537, 0.0
      %v666 = vmax.f32 %v538, 0.0
      %v667 = vmax.f32 %v539, 0.0
      %v668 = vmax.f32 %v540, 0.0
      %v669 = vmax.f32 %v541, 0.0
      %v670 = vmax.f32 %v542, 0.0
      %v671 = vmax.f32 %v543, 0.0
      %v672 = vmax.f32 %v544, 0.0
      %v673 = vmax.f32 %v545, 0.0
      %v674 = vmax.f32 %v546, 0.0
      %v675 = vmax.f32 %v547, 0.0
      %v676 = vmax.f32 %v548, 0.0
      %v677 = vmax.f32 %v549, 0.0
      %v678 = vmax.f32 %v550, 0.0
      %v679 = vmax.f32 %v551, 0.0
      %v680 = vmax.f32 %v552, 0.0
      %v681 = vmax.f32 %v553, 0.0
      %v682 = vmax.f32 %v554, 0.0
      %v683 = vmax.f32 %v555, 0.0
      %v684 = vmax.f32 %v556, 0.0
      %v685 = vmax.f32 %v557, 0.0
      %v686 = vmax.f32 %v558, 0.0
      %v687 = vmax.f32 %v559, 0.0
      %v688 = vmax.f32 %v560, 0.0
      %v689 = vmax.f32 %v561, 0.0
      %v690 = vmax.f32 %v562, 0.0
      %v691 = vmax.f32 %v563, 0.0
      %v692 = vmax.f32 %v564, 0.0
      %v693 = vmax.f32 %v565, 0.0
      %v694 = vmax.f32 %v566, 0.0
      %v695 = vmax.f32 %v567, 0.0
      %v696 = vmax.f32 %v568, 0.0
      %v697 = vmax.f32 %v569, 0.0
      %v698 = vmax.f32 %v570, 0.0
      %v699 = vmax.f32 %v571, 0.0
      %v700 = vmax.f32 %v572, 0.0
      %v701 = vmax.f32 %v573, 0.0
      %v702 = vmax.f32 %v574, 0.0
      %v703 = vmax.f32 %v575, 0.0
      %v704 = vmax.f32 %v576, 0.0
      %v705 = vmax.f32 %v577, 0.0
      %v706 = vmax.f32 %v578, 0.0
      %v707 = vmax.f32 %v579, 0.0
      %v708 = vmax.f32 %v580, 0.0
      %v709 = vmax.f32 %v581, 0.0
      %v710 = vmax.f32 %v582, 0.0
      %v711 = vmax.f32 %v583, 0.0
      %v712 = vmax.f32 %v584, 0.0
      %v713 = vmax.f32 %v585, 0.0
      %v714 = vmax.f32 %v586, 0.0
      %v715 = vmax.f32 %v587, 0.0
      %v716 = vmax.f32 %v588, 0.0
      %v717 = vmax.f32 %v589, 0.0
      %v718 = vmax.f32 %v590, 0.0
      %v719 = vmax.f32 %v591, 0.0
      %v720 = vmax.f32 %v592, 0.0
      %v721 = vmax.f32 %v593, 0.0
      %v722 = vmax.f32 %v594, 0.0
      %v723 = vmax.f32 %v595, 0.0
      %v724 = vmax.f32 %v596, 0.0
      %v725 = vmax.f32 %v597, 0.0
      %v726 = vmax.f32 %v598, 0.0
      %v727 = vmax.f32 %v599, 0.0
      %v728 = vpack.c.bf16 %v601, %v600
      %v729 = vpack.c.bf16 %v603, %v602
      %v730 = vpack.c.bf16 %v605, %v604
      %v731 = vpack.c.bf16 %v607, %v606
      %v732 = vpack.c.bf16 %v609, %v608
      %v733 = vpack.c.bf16 %v611, %v610
      %v734 = vpack.c.bf16 %v613, %v612
      %v735 = vpack.c.bf16 %v615, %v614
      %v736 = vpack.c.bf16 %v617, %v616
      %v737 = vpack.c.bf16 %v619, %v618
      %v738 = vpack.c.bf16 %v621, %v620
      %v739 = vpack.c.bf16 %v623, %v622
      %v740 = vpack.c.bf16 %v625, %v624
      %v741 = vpack.c.bf16 %v627, %v626
      %v742 = vpack.c.bf16 %v629, %v628
      %v743 = vpack.c.bf16 %v631, %v630
      %v744 = vpack.c.bf16 %v633, %v632
      %v745 = vpack.c.bf16 %v635, %v634
      %v746 = vpack.c.bf16 %v637, %v636
      %v747 = vpack.c.bf16 %v639, %v638
      %v748 = vpack.c.bf16 %v641, %v640
      %v749 = vpack.c.bf16 %v643, %v642
      %v750 = vpack.c.bf16 %v645, %v644
      %v751 = vpack.c.bf16 %v647, %v646
      %v752 = vpack.c.bf16 %v649, %v648
      %v753 = vpack.c.bf16 %v651, %v650
      %v754 = vpack.c.bf16 %v653, %v652
      %v755 = vpack.c.bf16 %v655, %v654
      %v756 = vpack.c.bf16 %v657, %v656
      %v757 = vpack.c.bf16 %v659, %v658
      %v758 = vpack.c.bf16 %v661, %v660
      %v759 = vpack.c.bf16 %v663, %v662
      %v760 = vpack.c.bf16 %v665, %v664
      %v761 = vpack.c.bf16 %v667, %v666
      %v762 = vpack.c.bf16 %v669, %v668
      %v763 = vpack.c.bf16 %v671, %v670
      %v764 = vpack.c.bf16 %v673, %v672
      %v765 = vpack.c.bf16 %v675, %v674
      %v766 = vpack.c.bf16 %v677, %v676
      %v767 = vpack.c.bf16 %v679, %v678
      %v768 = vpack.c.bf16 %v681, %v680
      %v769 = vpack.c.bf16 %v683, %v682
      %v770 = vpack.c.bf16 %v685, %v684
      %v771 = vpack.c.bf16 %v687, %v686
      %v772 = vpack.c.bf16 %v689, %v688
      %v773 = vpack.c.bf16 %v691, %v690
      %v774 = vpack.c.bf16 %v693, %v692
      %v775 = vpack.c.bf16 %v695, %v694
      %v776 = vpack.c.bf16 %v697, %v696
      %v777 = vpack.c.bf16 %v699, %v698
      %v778 = vpack.c.bf16 %v701, %v700
      %v779 = vpack.c.bf16 %v703, %v702
      %v780 = vpack.c.bf16 %v705, %v704
      %v781 = vpack.c.bf16 %v707, %v706
      %v782 = vpack.c.bf16 %v709, %v708
      %v783 = vpack.c.bf16 %v711, %v710
      %v784 = vpack.c.bf16 %v713, %v712
      %v785 = vpack.c.bf16 %v715, %v714
      %v786 = vpack.c.bf16 %v717, %v716
      %v787 = vpack.c.bf16 %v719, %v718
      %v788 = vpack.c.bf16 %v721, %v720
      %v789 = vpack.c.bf16 %v723, %v722
      %v790 = vpack.c.bf16 %v725, %v724
      %v791 = vpack.c.bf16 %v727, %v726
      %v792 = vld [vmem:[%s3] sm:$0xf]
      %v793 = vld [vmem:[%s3 + $0x4] sm:$0xf]
      %v796 = vunpack.c.l.b16 %v792
      %v797 = vunpack.c.l.b16 %v793
      %v798 = vpack.c.b16 %v797, %v796
      %vm800 = vcmask 130048
      %v802 = vsel %vm800, %v728, 0
      %v805 = vsel %vm800, %v729, 0
      %v808 = vsel %vm800, %v730, 0
      %v811 = vsel %vm800, %v731, 0
      %v814 = vsel %vm800, %v732, 0
      %v817 = vsel %vm800, %v733, 0
      %v820 = vsel %vm800, %v734, 0
      %v823 = vsel %vm800, %v735, 0
      %v826 = vsel %vm800, %v736, 0
      %v829 = vsel %vm800, %v737, 0
      %v832 = vsel %vm800, %v738, 0
      %v835 = vsel %vm800, %v739, 0
      %v838 = vsel %vm800, %v740, 0
      %v841 = vsel %vm800, %v741, 0
      %v844 = vsel %vm800, %v742, 0
      %v847 = vsel %vm800, %v743, 0
      %v850 = vsel %vm800, %v744, 0
      %v853 = vsel %vm800, %v745, 0
      %v856 = vsel %vm800, %v746, 0
      %v859 = vsel %vm800, %v747, 0
      %v862 = vsel %vm800, %v748, 0
      %v865 = vsel %vm800, %v749, 0
      %v868 = vsel %vm800, %v750, 0
      %v871 = vsel %vm800, %v751, 0
      %v874 = vsel %vm800, %v752, 0
      %v877 = vsel %vm800, %v753, 0
      %v880 = vsel %vm800, %v754, 0
      %v883 = vsel %vm800, %v755, 0
      %v886 = vsel %vm800, %v756, 0
      %v889 = vsel %vm800, %v757, 0
      %v892 = vsel %vm800, %v758, 0
      %v895 = vsel %vm800, %v759, 0
      %v898 = vsel %vm800, %v760, 0
      %v901 = vsel %vm800, %v761, 0
      %v904 = vsel %vm800, %v762, 0
      %v907 = vsel %vm800, %v763, 0
      %v910 = vsel %vm800, %v764, 0
      %v913 = vsel %vm800, %v765, 0
      %v916 = vsel %vm800, %v766, 0
      %v919 = vsel %vm800, %v767, 0
      %v922 = vsel %vm800, %v768, 0
      %v925 = vsel %vm800, %v769, 0
      %v928 = vsel %vm800, %v770, 0
      %v931 = vsel %vm800, %v771, 0
      %v934 = vsel %vm800, %v772, 0
      %v937 = vsel %vm800, %v773, 0
      %v940 = vsel %vm800, %v774, 0
      %v943 = vsel %vm800, %v775, 0
      %v946 = vsel %vm800, %v776, 0
      %v949 = vsel %vm800, %v777, 0
      %v952 = vsel %vm800, %v778, 0
      %v955 = vsel %vm800, %v779, 0
      %v958 = vsel %vm800, %v780, 0
      %v961 = vsel %vm800, %v781, 0
      %v964 = vsel %vm800, %v782, 0
      %v967 = vsel %vm800, %v783, 0
      %v970 = vsel %vm800, %v784, 0
      %v973 = vsel %vm800, %v785, 0
      %v976 = vsel %vm800, %v786, 0
      %v979 = vsel %vm800, %v787, 0
      %v982 = vsel %vm800, %v788, 0
      %v985 = vsel %vm800, %v789, 0
      %v988 = vsel %vm800, %v790, 0
      %v991 = vsel %vm800, %v791, 0
      %993 = vmatprep.subr.bf16.mxu0 0
      %994 = vmatpush1.bf16.msra.mxu0 %v798
      %995 = vmatprep.subr.bf16.mxu0 0
      %996 = vmatpush1.bf16.msra.mxu0 0
      %997 = vmatprep.subr.bf16.mxu0 0
      %998 = vmatpush1.bf16.msra.mxu0 0
      %999 = vmatprep.subr.bf16.mxu0 0
      %1000 = vmatpush1.bf16.msra.mxu0 0
      %1001 = vmatprep.subr.bf16.mxu0 0
      %1002 = vmatpush1.bf16.msra.mxu0 0
      %1003 = vmatprep.subr.bf16.mxu0 0
      %1004 = vmatpush1.bf16.msra.mxu0 0
      %1005 = vmatprep.subr.bf16.mxu0 0
      %1006 = vmatpush1.bf16.msra.mxu0 0
      %1007 = vmatprep.subr.bf16.mxu0 0
      %1008 = vmatpush1.bf16.msra.mxu0 0
      %1009 = vmatprep.subr.bf16.mxu0 0
      %1010 = vmatpush1.bf16.msra.mxu0 0
      %1011 = vmatprep.subr.bf16.mxu0 0
      %1012 = vmatpush1.bf16.msra.mxu0 0
      %1013 = vmatprep.subr.bf16.mxu0 0
      %1014 = vmatpush1.bf16.msra.mxu0 0
      %1015 = vmatprep.subr.bf16.mxu0 0
      %1016 = vmatpush1.bf16.msra.mxu0 0
      %1017 = vmatprep.subr.bf16.mxu0 0
      %1018 = vmatpush1.bf16.msra.mxu0 0
      %1019 = vmatprep.subr.bf16.mxu0 0
      %1020 = vmatpush1.bf16.msra.mxu0 0
      %1021 = vmatprep.subr.bf16.mxu0 0
      %1022 = vmatpush1.bf16.msra.mxu0 0
      %1023 = vmatprep.subr.bf16.mxu0 0
      %1024 = vmatpush1.bf16.msra.mxu0 0
      %1025 = vmatprep.mubr.bf16.mxu0 0
      %1026 = vmatmul.mubr.bf16.gmra.mrb[0].mxu0 %v802
      %v1027 = vpop.f32.mrb[0].mxu0
      %v1028 = vadd.f32 0.0, %v1027
      %v1029 = vpop.f32.mrb[0].mxu0
      %v1030 = vpop.f32.mrb[0].mxu0
      %v1031 = vadd.f32 0.0, %v1030
      %v1032 = vpop.f32.mrb[0].mxu0
      %1033 = vmatprep.mubr.bf16.mxu0 0
      %1034 = vmatmul.mubr.bf16.gmra.mrb[0].mxu0 %v805
      %v1035 = vpop.f32.mrb[0].mxu0
      %v1036 = vadd.f32 0.0, %v1035
      %v1037 = vpop.f32.mrb[0].mxu0
      %v1038 = vpop.f32.mrb[0].mxu0
      %v1039 = vadd.f32 0.0, %v1038
      %v1040 = vpop.f32.mrb[0].mxu0
      %1041 = vmatprep.mubr.bf16.mxu0 0
      %1042 = vmatmul.mubr.bf16.gmra.mrb[0].mxu0 %v808
      %v1043 = vpop.f32.mrb[0].mxu0
      %v1044 = vadd.f32 0.0, %v1043
      %v1045 = vpop.f32.mrb[0].mxu0
      %v1046 = vpop.f32.mrb[0].mxu0
      %v1047 = vadd.f32 0.0, %v1046
      %v1048 = vpop.f32.mrb[0].mxu0
      %1049 = vmatprep.mubr.bf16.mxu0 0
      %1050 = vmatmul.mubr.bf16.gmra.mrb[0].mxu0 %v811
      %v1051 = vpop.f32.mrb[0].mxu0
      %v1052 = vadd.f32 0.0, %v1051
      %v1053 = vpop.f32.mrb[0].mxu0
      %v1054 = vpop.f32.mrb[0].mxu0
      %v1055 = vadd.f32 0.0, %v1054
      %v1056 = vpop.f32.mrb[0].mxu0
      %1057 = vmatprep.mubr.bf16.mxu0 0
      %1058 = vmatmul.mubr.bf16.gmra.mrb[0].mxu0 %v814
      %v1059 = vpop.f32.mrb[0].mxu0
      %v1060 = vadd.f32 0.0, %v1059
      %v1061 = vpop.f32.mrb[0].mxu0
      %v1062 = vpop.f32.mrb[0].mxu0
      %v1063 = vadd.f32 0.0, %v1062
      %v1064 = vpop.f32.mrb[0].mxu0
      %1065 = vmatprep.mubr.bf16.mxu0 0
      %1066 = vmatmul.mubr.bf16.gmra.mrb[0].mxu0 %v817
      %v1067 = vpop.f32.mrb[0].mxu0
      %v1068 = vadd.f32 0.0, %v1067
      %v1069 = vpop.f32.mrb[0].mxu0
      %v1070 = vpop.f32.mrb[0].mxu0
      %v1071 = vadd.f32 0.0, %v1070
      %v1072 = vpop.f32.mrb[0].mxu0
      %1073 = vmatprep.mubr.bf16.mxu0 0
      %1074 = vmatmul.mubr.bf16.gmra.mrb[0].mxu0 %v820
      %v1075 = vpop.f32.mrb[0].mxu0
      %v1076 = vadd.f32 0.0, %v1075
      %v1077 = vpop.f32.mrb[0].mxu0
      %v1078 = vpop.f32.mrb[0].mxu0
      %v1079 = vadd.f32 0.0, %v1078
      %v1080 = vpop.f32.mrb[0].mxu0
      %1081 = vmatprep.mubr.bf16.mxu0 0
      %1082 = vmatmul.mubr.bf16.gmra.mrb[0].mxu0 %v823
      %v1083 = vpop.f32.mrb[0].mxu0
      %v1084 = vadd.f32 0.0, %v1083
      %v1085 = vpop.f32.mrb[0].mxu0
      %v1086 = vpop.f32.mrb[0].mxu0
      %v1087 = vadd.f32 0.0, %v1086
      %v1088 = vpop.f32.mrb[0].mxu0
      %1089 = vmatprep.mubr.bf16.mxu0 0
      %1090 = vmatmul.mubr.bf16.gmra.mrb[0].mxu0 %v826
      %v1091 = vpop.f32.mrb[0].mxu0
      %v1092 = vadd.f32 0.0, %v1091
      %v1093 = vpop.f32.mrb[0].mxu0
      %v1094 = vpop.f32.mrb[0].mxu0
      %v1095 = vadd.f32 0.0, %v1094
      %v1096 = vpop.f32.mrb[0].mxu0
      %1097 = vmatprep.mubr.bf16.mxu0 0
      %1098 = vmatmul.mubr.bf16.gmra.mrb[0].mxu0 %v829
      %v1099 = vpop.f32.mrb[0].mxu0
      %v1100 = vadd.f32 0.0, %v1099
      %v1101 = vpop.f32.mrb[0].mxu0
      %v1102 = vpop.f32.mrb[0].mxu0
      %v1103 = vadd.f32 0.0, %v1102
      %v1104 = vpop.f32.mrb[0].mxu0
      %1105 = vmatprep.mubr.bf16.mxu0 0
      %1106 = vmatmul.mubr.bf16.gmra.mrb[0].mxu0 %v832
      %v1107 = vpop.f32.mrb[0].mxu0
      %v1108 = vadd.f32 0.0, %v1107
      %v1109 = vpop.f32.mrb[0].mxu0
      %v1110 = vpop.f32.mrb[0].mxu0
      %v1111 = vadd.f32 0.0, %v1110
      %v1112 = vpop.f32.mrb[0].mxu0
      %1113 = vmatprep.mubr.bf16.mxu0 0
      %1114 = vmatmul.mubr.bf16.gmra.mrb[0].mxu0 %v835
      %v1115 = vpop.f32.mrb[0].mxu0
      %v1116 = vadd.f32 0.0, %v1115
      %v1117 = vpop.f32.mrb[0].mxu0
      %v1118 = vpop.f32.mrb[0].mxu0
      %v1119 = vadd.f32 0.0, %v1118
      %v1120 = vpop.f32.mrb[0].mxu0
      %1121 = vmatprep.mubr.bf16.mxu0 0
      %1122 = vmatmul.mubr.bf16.gmra.mrb[0].mxu0 %v838
      %v1123 = vpop.f32.mrb[0].mxu0
      %v1124 = vadd.f32 0.0, %v1123
      %v1125 = vpop.f32.mrb[0].mxu0
      %v1126 = vpop.f32.mrb[0].mxu0
      %v1127 = vadd.f32 0.0, %v1126
      %v1128 = vpop.f32.mrb[0].mxu0
      %1129 = vmatprep.mubr.bf16.mxu0 0
      %1130 = vmatmul.mubr.bf16.gmra.mrb[0].mxu0 %v841
      %v1131 = vpop.f32.mrb[0].mxu0
      %v1132 = vadd.f32 0.0, %v1131
      %v1133 = vpop.f32.mrb[0].mxu0
      %v1134 = vpop.f32.mrb[0].mxu0
      %v1135 = vadd.f32 0.0, %v1134
      %v1136 = vpop.f32.mrb[0].mxu0
      %1137 = vmatprep.mubr.bf16.mxu0 0
      %1138 = vmatmul.mubr.bf16.gmra.mrb[0].mxu0 %v844
      %v1139 = vpop.f32.mrb[0].mxu0
      %v1140 = vadd.f32 0.0, %v1139
      %v1141 = vpop.f32.mrb[0].mxu0
      %v1142 = vpop.f32.mrb[0].mxu0
      %v1143 = vadd.f32 0.0, %v1142
      %v1144 = vpop.f32.mrb[0].mxu0
      %1145 = vmatprep.mubr.bf16.mxu0 0
      %1146 = vmatmul.mubr.bf16.gmra.mrb[0].mxu0 %v847
      %v1147 = vpop.f32.mrb[0].mxu0
      %v1148 = vadd.f32 0.0, %v1147
      %v1149 = vpop.f32.mrb[0].mxu0
      %v1150 = vpop.f32.mrb[0].mxu0
      %v1151 = vadd.f32 0.0, %v1150
      %v1152 = vpop.f32.mrb[0].mxu0
      %1153 = vmatprep.mubr.bf16.mxu0 0
      %1154 = vmatmul.mubr.bf16.gmra.mrb[0].mxu0 %v850
      %v1155 = vpop.f32.mrb[0].mxu0
      %v1156 = vadd.f32 0.0, %v1155
      %v1157 = vpop.f32.mrb[0].mxu0
      %v1158 = vpop.f32.mrb[0].mxu0
      %v1159 = vadd.f32 0.0, %v1158
      %v1160 = vpop.f32.mrb[0].mxu0
      %1161 = vmatprep.mubr.bf16.mxu0 0
      %1162 = vmatmul.mubr.bf16.gmra.mrb[0].mxu0 %v853
      %v1163 = vpop.f32.mrb[0].mxu0
      %v1164 = vadd.f32 0.0, %v1163
      %v1165 = vpop.f32.mrb[0].mxu0
      %v1166 = vpop.f32.mrb[0].mxu0
      %v1167 = vadd.f32 0.0, %v1166
      %v1168 = vpop.f32.mrb[0].mxu0
      %1169 = vmatprep.mubr.bf16.mxu0 0
      %1170 = vmatmul.mubr.bf16.gmra.mrb[0].mxu0 %v856
      %v1171 = vpop.f32.mrb[0].mxu0
      %v1172 = vadd.f32 0.0, %v1171
      %v1173 = vpop.f32.mrb[0].mxu0
      %v1174 = vpop.f32.mrb[0].mxu0
      %v1175 = vadd.f32 0.0, %v1174
      %v1176 = vpop.f32.mrb[0].mxu0
      %1177 = vmatprep.mubr.bf16.mxu0 0
      %1178 = vmatmul.mubr.bf16.gmra.mrb[0].mxu0 %v859
      %v1179 = vpop.f32.mrb[0].mxu0
      %v1180 = vadd.f32 0.0, %v1179
      %v1181 = vpop.f32.mrb[0].mxu0
      %v1182 = vpop.f32.mrb[0].mxu0
      %v1183 = vadd.f32 0.0, %v1182
      %v1184 = vpop.f32.mrb[0].mxu0
      %1185 = vmatprep.mubr.bf16.mxu0 0
      %1186 = vmatmul.mubr.bf16.gmra.mrb[0].mxu0 %v862
      %v1187 = vpop.f32.mrb[0].mxu0
      %v1188 = vadd.f32 0.0, %v1187
      %v1189 = vpop.f32.mrb[0].mxu0
      %v1190 = vpop.f32.mrb[0].mxu0
      %v1191 = vadd.f32 0.0, %v1190
      %v1192 = vpop.f32.mrb[0].mxu0
      %1193 = vmatprep.mubr.bf16.mxu0 0
      %1194 = vmatmul.mubr.bf16.gmra.mrb[0].mxu0 %v865
      %v1195 = vpop.f32.mrb[0].mxu0
      %v1196 = vadd.f32 0.0, %v1195
      %v1197 = vpop.f32.mrb[0].mxu0
      %v1198 = vpop.f32.mrb[0].mxu0
      %v1199 = vadd.f32 0.0, %v1198
      %v1200 = vpop.f32.mrb[0].mxu0
      %1201 = vmatprep.mubr.bf16.mxu0 0
      %1202 = vmatmul.mubr.bf16.gmra.mrb[0].mxu0 %v868
      %v1203 = vpop.f32.mrb[0].mxu0
      %v1204 = vadd.f32 0.0, %v1203
      %v1205 = vpop.f32.mrb[0].mxu0
      %v1206 = vpop.f32.mrb[0].mxu0
      %v1207 = vadd.f32 0.0, %v1206
      %v1208 = vpop.f32.mrb[0].mxu0
      %1209 = vmatprep.mubr.bf16.mxu0 0
      %1210 = vmatmul.mubr.bf16.gmra.mrb[0].mxu0 %v871
      %v1211 = vpop.f32.mrb[0].mxu0
      %v1212 = vadd.f32 0.0, %v1211
      %v1213 = vpop.f32.mrb[0].mxu0
      %v1214 = vpop.f32.mrb[0].mxu0
      %v1215 = vadd.f32 0.0, %v1214
      %v1216 = vpop.f32.mrb[0].mxu0
      %1217 = vmatprep.mubr.bf16.mxu0 0
      %1218 = vmatmul.mubr.bf16.gmra.mrb[0].mxu0 %v874
      %v1219 = vpop.f32.mrb[0].mxu0
      %v1220 = vadd.f32 0.0, %v1219
      %v1221 = vpop.f32.mrb[0].mxu0
      %v1222 = vpop.f32.mrb[0].mxu0
      %v1223 = vadd.f32 0.0, %v1222
      %v1224 = vpop.f32.mrb[0].mxu0
      %1225 = vmatprep.mubr.bf16.mxu0 0
      %1226 = vmatmul.mubr.bf16.gmra.mrb[0].mxu0 %v877
      %v1227 = vpop.f32.mrb[0].mxu0
      %v1228 = vadd.f32 0.0, %v1227
      %v1229 = vpop.f32.mrb[0].mxu0
      %v1230 = vpop.f32.mrb[0].mxu0
      %v1231 = vadd.f32 0.0, %v1230
      %v1232 = vpop.f32.mrb[0].mxu0
      %1233 = vmatprep.mubr.bf16.mxu0 0
      %1234 = vmatmul.mubr.bf16.gmra.mrb[0].mxu0 %v880
      %v1235 = vpop.f32.mrb[0].mxu0
      %v1236 = vadd.f32 0.0, %v1235
      %v1237 = vpop.f32.mrb[0].mxu0
      %v1238 = vpop.f32.mrb[0].mxu0
      %v1239 = vadd.f32 0.0, %v1238
      %v1240 = vpop.f32.mrb[0].mxu0
      %1241 = vmatprep.mubr.bf16.mxu0 0
      %1242 = vmatmul.mubr.bf16.gmra.mrb[0].mxu0 %v883
      %v1243 = vpop.f32.mrb[0].mxu0
      %v1244 = vadd.f32 0.0, %v1243
      %v1245 = vpop.f32.mrb[0].mxu0
      %v1246 = vpop.f32.mrb[0].mxu0
      %v1247 = vadd.f32 0.0, %v1246
      %v1248 = vpop.f32.mrb[0].mxu0
      %1249 = vmatprep.mubr.bf16.mxu0 0
      %1250 = vmatmul.mubr.bf16.gmra.mrb[0].mxu0 %v886
      %v1251 = vpop.f32.mrb[0].mxu0
      %v1252 = vadd.f32 0.0, %v1251
      %v1253 = vpop.f32.mrb[0].mxu0
      %v1254 = vpop.f32.mrb[0].mxu0
      %v1255 = vadd.f32 0.0, %v1254
      %v1256 = vpop.f32.mrb[0].mxu0
      %1257 = vmatprep.mubr.bf16.mxu0 0
      %1258 = vmatmul.mubr.bf16.gmra.mrb[0].mxu0 %v889
      %v1259 = vpop.f32.mrb[0].mxu0
      %v1260 = vadd.f32 0.0, %v1259
      %v1261 = vpop.f32.mrb[0].mxu0
      %v1262 = vpop.f32.mrb[0].mxu0
      %v1263 = vadd.f32 0.0, %v1262
      %v1264 = vpop.f32.mrb[0].mxu0
      %1265 = vmatprep.mubr.bf16.mxu0 0
      %1266 = vmatmul.mubr.bf16.gmra.mrb[0].mxu0 %v892
      %v1267 = vpop.f32.mrb[0].mxu0
      %v1268 = vadd.f32 0.0, %v1267
      %v1269 = vpop.f32.mrb[0].mxu0
      %v1270 = vpop.f32.mrb[0].mxu0
      %v1271 = vadd.f32 0.0, %v1270
      %v1272 = vpop.f32.mrb[0].mxu0
      %1273 = vmatprep.mubr.bf16.mxu0 0
      %1274 = vmatmul.mubr.bf16.gmra.mrb[0].mxu0 %v895
      %v1275 = vpop.f32.mrb[0].mxu0
      %v1276 = vadd.f32 0.0, %v1275
      %v1277 = vpop.f32.mrb[0].mxu0
      %v1278 = vpop.f32.mrb[0].mxu0
      %v1279 = vadd.f32 0.0, %v1278
      %v1280 = vpop.f32.mrb[0].mxu0
      %1281 = vmatprep.mubr.bf16.mxu0 0
      %1282 = vmatmul.mubr.bf16.gmra.mrb[0].mxu0 %v898
      %v1283 = vpop.f32.mrb[0].mxu0
      %v1284 = vadd.f32 0.0, %v1283
      %v1285 = vpop.f32.mrb[0].mxu0
      %v1286 = vpop.f32.mrb[0].mxu0
      %v1287 = vadd.f32 0.0, %v1286
      %v1288 = vpop.f32.mrb[0].mxu0
      %1289 = vmatprep.mubr.bf16.mxu0 0
      %1290 = vmatmul.mubr.bf16.gmra.mrb[0].mxu0 %v901
      %v1291 = vpop.f32.mrb[0].mxu0
      %v1292 = vadd.f32 0.0, %v1291
      %v1293 = vpop.f32.mrb[0].mxu0
      %v1294 = vpop.f32.mrb[0].mxu0
      %v1295 = vadd.f32 0.0, %v1294
      %v1296 = vpop.f32.mrb[0].mxu0
      %1297 = vmatprep.mubr.bf16.mxu0 0
      %1298 = vmatmul.mubr.bf16.gmra.mrb[0].mxu0 %v904
      %v1299 = vpop.f32.mrb[0].mxu0
      %v1300 = vadd.f32 0.0, %v1299
      %v1301 = vpop.f32.mrb[0].mxu0
      %v1302 = vpop.f32.mrb[0].mxu0
      %v1303 = vadd.f32 0.0, %v1302
      %v1304 = vpop.f32.mrb[0].mxu0
      %1305 = vmatprep.mubr.bf16.mxu0 0
      %1306 = vmatmul.mubr.bf16.gmra.mrb[0].mxu0 %v907
      %v1307 = vpop.f32.mrb[0].mxu0
      %v1308 = vadd.f32 0.0, %v1307
      %v1309 = vpop.f32.mrb[0].mxu0
      %v1310 = vpop.f32.mrb[0].mxu0
      %v1311 = vadd.f32 0.0, %v1310
      %v1312 = vpop.f32.mrb[0].mxu0
      %1313 = vmatprep.mubr.bf16.mxu0 0
      %1314 = vmatmul.mubr.bf16.gmra.mrb[0].mxu0 %v910
      %v1315 = vpop.f32.mrb[0].mxu0
      %v1316 = vadd.f32 0.0, %v1315
      %v1317 = vpop.f32.mrb[0].mxu0
      %v1318 = vpop.f32.mrb[0].mxu0
      %v1319 = vadd.f32 0.0, %v1318
      %v1320 = vpop.f32.mrb[0].mxu0
      %1321 = vmatprep.mubr.bf16.mxu0 0
      %1322 = vmatmul.mubr.bf16.gmra.mrb[0].mxu0 %v913
      %v1323 = vpop.f32.mrb[0].mxu0
      %v1324 = vadd.f32 0.0, %v1323
      %v1325 = vpop.f32.mrb[0].mxu0
      %v1326 = vpop.f32.mrb[0].mxu0
      %v1327 = vadd.f32 0.0, %v1326
      %v1328 = vpop.f32.mrb[0].mxu0
      %1329 = vmatprep.mubr.bf16.mxu0 0
      %1330 = vmatmul.mubr.bf16.gmra.mrb[0].mxu0 %v916
      %v1331 = vpop.f32.mrb[0].mxu0
      %v1332 = vadd.f32 0.0, %v1331
      %v1333 = vpop.f32.mrb[0].mxu0
      %v1334 = vpop.f32.mrb[0].mxu0
      %v1335 = vadd.f32 0.0, %v1334
      %v1336 = vpop.f32.mrb[0].mxu0
      %1337 = vmatprep.mubr.bf16.mxu0 0
      %1338 = vmatmul.mubr.bf16.gmra.mrb[0].mxu0 %v919
      %v1339 = vpop.f32.mrb[0].mxu0
      %v1340 = vadd.f32 0.0, %v1339
      %v1341 = vpop.f32.mrb[0].mxu0
      %v1342 = vpop.f32.mrb[0].mxu0
      %v1343 = vadd.f32 0.0, %v1342
      %v1344 = vpop.f32.mrb[0].mxu0
      %1345 = vmatprep.mubr.bf16.mxu0 0
      %1346 = vmatmul.mubr.bf16.gmra.mrb[0].mxu0 %v922
      %v1347 = vpop.f32.mrb[0].mxu0
      %v1348 = vadd.f32 0.0, %v1347
      %v1349 = vpop.f32.mrb[0].mxu0
      %v1350 = vpop.f32.mrb[0].mxu0
      %v1351 = vadd.f32 0.0, %v1350
      %v1352 = vpop.f32.mrb[0].mxu0
      %1353 = vmatprep.mubr.bf16.mxu0 0
      %1354 = vmatmul.mubr.bf16.gmra.mrb[0].mxu0 %v925
      %v1355 = vpop.f32.mrb[0].mxu0
      %v1356 = vadd.f32 0.0, %v1355
      %v1357 = vpop.f32.mrb[0].mxu0
      %v1358 = vpop.f32.mrb[0].mxu0
      %v1359 = vadd.f32 0.0, %v1358
      %v1360 = vpop.f32.mrb[0].mxu0
      %1361 = vmatprep.mubr.bf16.mxu0 0
      %1362 = vmatmul.mubr.bf16.gmra.mrb[0].mxu0 %v928
      %v1363 = vpop.f32.mrb[0].mxu0
      %v1364 = vadd.f32 0.0, %v1363
      %v1365 = vpop.f32.mrb[0].mxu0
      %v1366 = vpop.f32.mrb[0].mxu0
      %v1367 = vadd.f32 0.0, %v1366
      %v1368 = vpop.f32.mrb[0].mxu0
      %1369 = vmatprep.mubr.bf16.mxu0 0
      %1370 = vmatmul.mubr.bf16.gmra.mrb[0].mxu0 %v931
      %v1371 = vpop.f32.mrb[0].mxu0
      %v1372 = vadd.f32 0.0, %v1371
      %v1373 = vpop.f32.mrb[0].mxu0
      %v1374 = vpop.f32.mrb[0].mxu0
      %v1375 = vadd.f32 0.0, %v1374
      %v1376 = vpop.f32.mrb[0].mxu0
      %1377 = vmatprep.mubr.bf16.mxu0 0
      %1378 = vmatmul.mubr.bf16.gmra.mrb[0].mxu0 %v934
      %v1379 = vpop.f32.mrb[0].mxu0
      %v1380 = vadd.f32 0.0, %v1379
      %v1381 = vpop.f32.mrb[0].mxu0
      %v1382 = vpop.f32.mrb[0].mxu0
      %v1383 = vadd.f32 0.0, %v1382
      %v1384 = vpop.f32.mrb[0].mxu0
      %1385 = vmatprep.mubr.bf16.mxu0 0
      %1386 = vmatmul.mubr.bf16.gmra.mrb[0].mxu0 %v937
      %v1387 = vpop.f32.mrb[0].mxu0
      %v1388 = vadd.f32 0.0, %v1387
      %v1389 = vpop.f32.mrb[0].mxu0
      %v1390 = vpop.f32.mrb[0].mxu0
      %v1391 = vadd.f32 0.0, %v1390
      %v1392 = vpop.f32.mrb[0].mxu0
      %1393 = vmatprep.mubr.bf16.mxu0 0
      %1394 = vmatmul.mubr.bf16.gmra.mrb[0].mxu0 %v940
      %v1395 = vpop.f32.mrb[0].mxu0
      %v1396 = vadd.f32 0.0, %v1395
      %v1397 = vpop.f32.mrb[0].mxu0
      %v1398 = vpop.f32.mrb[0].mxu0
      %v1399 = vadd.f32 0.0, %v1398
      %v1400 = vpop.f32.mrb[0].mxu0
      %1401 = vmatprep.mubr.bf16.mxu0 0
      %1402 = vmatmul.mubr.bf16.gmra.mrb[0].mxu0 %v943
      %v1403 = vpop.f32.mrb[0].mxu0
      %v1404 = vadd.f32 0.0, %v1403
      %v1405 = vpop.f32.mrb[0].mxu0
      %v1406 = vpop.f32.mrb[0].mxu0
      %v1407 = vadd.f32 0.0, %v1406
      %v1408 = vpop.f32.mrb[0].mxu0
      %1409 = vmatprep.mubr.bf16.mxu0 0
      %1410 = vmatmul.mubr.bf16.gmra.mrb[0].mxu0 %v946
      %v1411 = vpop.f32.mrb[0].mxu0
      %v1412 = vadd.f32 0.0, %v1411
      %v1413 = vpop.f32.mrb[0].mxu0
      %v1414 = vpop.f32.mrb[0].mxu0
      %v1415 = vadd.f32 0.0, %v1414
      %v1416 = vpop.f32.mrb[0].mxu0
      %1417 = vmatprep.mubr.bf16.mxu0 0
      %1418 = vmatmul.mubr.bf16.gmra.mrb[0].mxu0 %v949
      %v1419 = vpop.f32.mrb[0].mxu0
      %v1420 = vadd.f32 0.0, %v1419
      %v1421 = vpop.f32.mrb[0].mxu0
      %v1422 = vpop.f32.mrb[0].mxu0
      %v1423 = vadd.f32 0.0, %v1422
      %v1424 = vpop.f32.mrb[0].mxu0
      %1425 = vmatprep.mubr.bf16.mxu0 0
      %1426 = vmatmul.mubr.bf16.gmra.mrb[0].mxu0 %v952
      %v1427 = vpop.f32.mrb[0].mxu0
      %v1428 = vadd.f32 0.0, %v1427
      %v1429 = vpop.f32.mrb[0].mxu0
      %v1430 = vpop.f32.mrb[0].mxu0
      %v1431 = vadd.f32 0.0, %v1430
      %v1432 = vpop.f32.mrb[0].mxu0
      %1433 = vmatprep.mubr.bf16.mxu0 0
      %1434 = vmatmul.mubr.bf16.gmra.mrb[0].mxu0 %v955
      %v1435 = vpop.f32.mrb[0].mxu0
      %v1436 = vadd.f32 0.0, %v1435
      %v1437 = vpop.f32.mrb[0].mxu0
      %v1438 = vpop.f32.mrb[0].mxu0
      %v1439 = vadd.f32 0.0, %v1438
      %v1440 = vpop.f32.mrb[0].mxu0
      %1441 = vmatprep.mubr.bf16.mxu0 0
      %1442 = vmatmul.mubr.bf16.gmra.mrb[0].mxu0 %v958
      %v1443 = vpop.f32.mrb[0].mxu0
      %v1444 = vadd.f32 0.0, %v1443
      %v1445 = vpop.f32.mrb[0].mxu0
      %v1446 = vpop.f32.mrb[0].mxu0
      %v1447 = vadd.f32 0.0, %v1446
      %v1448 = vpop.f32.mrb[0].mxu0
      %1449 = vmatprep.mubr.bf16.mxu0 0
      %1450 = vmatmul.mubr.bf16.gmra.mrb[0].mxu0 %v961
      %v1451 = vpop.f32.mrb[0].mxu0
      %v1452 = vadd.f32 0.0, %v1451
      %v1453 = vpop.f32.mrb[0].mxu0
      %v1454 = vpop.f32.mrb[0].mxu0
      %v1455 = vadd.f32 0.0, %v1454
      %v1456 = vpop.f32.mrb[0].mxu0
      %1457 = vmatprep.mubr.bf16.mxu0 0
      %1458 = vmatmul.mubr.bf16.gmra.mrb[0].mxu0 %v964
      %v1459 = vpop.f32.mrb[0].mxu0
      %v1460 = vadd.f32 0.0, %v1459
      %v1461 = vpop.f32.mrb[0].mxu0
      %v1462 = vpop.f32.mrb[0].mxu0
      %v1463 = vadd.f32 0.0, %v1462
      %v1464 = vpop.f32.mrb[0].mxu0
      %1465 = vmatprep.mubr.bf16.mxu0 0
      %1466 = vmatmul.mubr.bf16.gmra.mrb[0].mxu0 %v967
      %v1467 = vpop.f32.mrb[0].mxu0
      %v1468 = vadd.f32 0.0, %v1467
      %v1469 = vpop.f32.mrb[0].mxu0
      %v1470 = vpop.f32.mrb[0].mxu0
      %v1471 = vadd.f32 0.0, %v1470
      %v1472 = vpop.f32.mrb[0].mxu0
      %1473 = vmatprep.mubr.bf16.mxu0 0
      %1474 = vmatmul.mubr.bf16.gmra.mrb[0].mxu0 %v970
      %v1475 = vpop.f32.mrb[0].mxu0
      %v1476 = vadd.f32 0.0, %v1475
      %v1477 = vpop.f32.mrb[0].mxu0
      %v1478 = vpop.f32.mrb[0].mxu0
      %v1479 = vadd.f32 0.0, %v1478
      %v1480 = vpop.f32.mrb[0].mxu0
      %1481 = vmatprep.mubr.bf16.mxu0 0
      %1482 = vmatmul.mubr.bf16.gmra.mrb[0].mxu0 %v973
      %v1483 = vpop.f32.mrb[0].mxu0
      %v1484 = vadd.f32 0.0, %v1483
      %v1485 = vpop.f32.mrb[0].mxu0
      %v1486 = vpop.f32.mrb[0].mxu0
      %v1487 = vadd.f32 0.0, %v1486
      %v1488 = vpop.f32.mrb[0].mxu0
      %1489 = vmatprep.mubr.bf16.mxu0 0
      %1490 = vmatmul.mubr.bf16.gmra.mrb[0].mxu0 %v976
      %v1491 = vpop.f32.mrb[0].mxu0
      %v1492 = vadd.f32 0.0, %v1491
      %v1493 = vpop.f32.mrb[0].mxu0
      %v1494 = vpop.f32.mrb[0].mxu0
      %v1495 = vadd.f32 0.0, %v1494
      %v1496 = vpop.f32.mrb[0].mxu0
      %1497 = vmatprep.mubr.bf16.mxu0 0
      %1498 = vmatmul.mubr.bf16.gmra.mrb[0].mxu0 %v979
      %v1499 = vpop.f32.mrb[0].mxu0
      %v1500 = vadd.f32 0.0, %v1499
      %v1501 = vpop.f32.mrb[0].mxu0
      %v1502 = vpop.f32.mrb[0].mxu0
      %v1503 = vadd.f32 0.0, %v1502
      %v1504 = vpop.f32.mrb[0].mxu0
      %1505 = vmatprep.mubr.bf16.mxu0 0
      %1506 = vmatmul.mubr.bf16.gmra.mrb[0].mxu0 %v982
      %v1507 = vpop.f32.mrb[0].mxu0
      %v1508 = vadd.f32 0.0, %v1507
      %v1509 = vpop.f32.mrb[0].mxu0
      %v1510 = vpop.f32.mrb[0].mxu0
      %v1511 = vadd.f32 0.0, %v1510
      %v1512 = vpop.f32.mrb[0].mxu0
      %1513 = vmatprep.mubr.bf16.mxu0 0
      %1514 = vmatmul.mubr.bf16.gmra.mrb[0].mxu0 %v985
      %v1515 = vpop.f32.mrb[0].mxu0
      %v1516 = vadd.f32 0.0, %v1515
      %v1517 = vpop.f32.mrb[0].mxu0
      %v1518 = vpop.f32.mrb[0].mxu0
      %v1519 = vadd.f32 0.0, %v1518
      %v1520 = vpop.f32.mrb[0].mxu0
      %1521 = vmatprep.mubr.bf16.mxu0 0
      %1522 = vmatmul.mubr.bf16.gmra.mrb[0].mxu0 %v988
      %v1523 = vpop.f32.mrb[0].mxu0
      %v1524 = vadd.f32 0.0, %v1523
      %v1525 = vpop.f32.mrb[0].mxu0
      %v1526 = vpop.f32.mrb[0].mxu0
      %v1527 = vadd.f32 0.0, %v1526
      %v1528 = vpop.f32.mrb[0].mxu0
      %1529 = vmatprep.mubr.bf16.mxu0 0
      %1530 = vmatmul.mubr.bf16.gmra.mrb[0].mxu0 %v991
      %v1531 = vpop.f32.mrb[0].mxu0
      %v1532 = vadd.f32 0.0, %v1531
      %v1533 = vpop.f32.mrb[0].mxu0
      %v1534 = vpop.f32.mrb[0].mxu0
      %v1535 = vadd.f32 0.0, %v1534
      %v1536 = vpop.f32.mrb[0].mxu0
      %1537 = vdwg.mxu0
      %1538 = vst [vmem:[%s199] sm:$0xff] %v1028
      %1539 = vst [vmem:[%s199 + $0x8] sm:$0xff] %v1031
      %1540 = vst [vmem:[%s199 + $0x10] sm:$0xff] %v1036
      %1541 = vst [vmem:[%s199 + $0x18] sm:$0xff] %v1039
      %1542 = vst [vmem:[%s199 + $0x20] sm:$0xff] %v1044
      %1543 = vst [vmem:[%s199 + $0x28] sm:$0xff] %v1047
      %1544 = vst [vmem:[%s199 + $0x30] sm:$0xff] %v1052
      %1545 = vst [vmem:[%s199 + $0x38] sm:$0xff] %v1055
      %1546 = vst [vmem:[%s199 + $0x40] sm:$0xff] %v1060
      %1547 = vst [vmem:[%s199 + $0x48] sm:$0xff] %v1063
      %1548 = vst [vmem:[%s199 + $0x50] sm:$0xff] %v1068
      %1549 = vst [vmem:[%s199 + $0x58] sm:$0xff] %v1071
      %1550 = vst [vmem:[%s199 + $0x60] sm:$0xff] %v1076
      %1551 = vst [vmem:[%s199 + $0x68] sm:$0xff] %v1079
      %1552 = vst [vmem:[%s199 + $0x70] sm:$0xff] %v1084
      %1553 = vst [vmem:[%s199 + $0x78] sm:$0xff] %v1087
      %1554 = vst [vmem:[%s199 + $0x80] sm:$0xff] %v1092
      %1555 = vst [vmem:[%s199 + $0x88] sm:$0xff] %v1095
      %1556 = vst [vmem:[%s199 + $0x90] sm:$0xff] %v1100
      %1557 = vst [vmem:[%s199 + $0x98] sm:$0xff] %v1103
      %1558 = vst [vmem:[%s199 + $0xa0] sm:$0xff] %v1108
      %1559 = vst [vmem:[%s199 + $0xa8] sm:$0xff] %v1111
      %1560 = vst [vmem:[%s199 + $0xb0] sm:$0xff] %v1116
      %1561 = vst [vmem:[%s199 + $0xb8] sm:$0xff] %v1119
      %1562 = vst [vmem:[%s199 + $0xc0] sm:$0xff] %v1124
      %1563 = vst [vmem:[%s199 + $0xc8] sm:$0xff] %v1127
      %1564 = vst [vmem:[%s199 + $0xd0] sm:$0xff] %v1132
      %1565 = vst [vmem:[%s199 + $0xd8] sm:$0xff] %v1135
      %1566 = vst [vmem:[%s199 + $0xe0] sm:$0xff] %v1140
      %1567 = vst [vmem:[%s199 + $0xe8] sm:$0xff] %v1143
      %1568 = vst [vmem:[%s199 + $0xf0] sm:$0xff] %v1148
      %1569 = vst [vmem:[%s199 + $0xf8] sm:$0xff] %v1151
      %1570 = vst [vmem:[%s199 + $0x100] sm:$0xff] %v1156
      %1571 = vst [vmem:[%s199 + $0x108] sm:$0xff] %v1159
      %1572 = vst [vmem:[%s199 + $0x110] sm:$0xff] %v1164
      %1573 = vst [vmem:[%s199 + $0x118] sm:$0xff] %v1167
      %1574 = vst [vmem:[%s199 + $0x120] sm:$0xff] %v1172
      %1575 = vst [vmem:[%s199 + $0x128] sm:$0xff] %v1175
      %1576 = vst [vmem:[%s199 + $0x130] sm:$0xff] %v1180
      %1577 = vst [vmem:[%s199 + $0x138] sm:$0xff] %v1183
      %1578 = vst [vmem:[%s199 + $0x140] sm:$0xff] %v1188
      %1579 = vst [vmem:[%s199 + $0x148] sm:$0xff] %v1191
      %1580 = vst [vmem:[%s199 + $0x150] sm:$0xff] %v1196
      %1581 = vst [vmem:[%s199 + $0x158] sm:$0xff] %v1199
      %1582 = vst [vmem:[%s199 + $0x160] sm:$0xff] %v1204
      %1583 = vst [vmem:[%s199 + $0x168] sm:$0xff] %v1207
      %1584 = vst [vmem:[%s199 + $0x170] sm:$0xff] %v1212
      %1585 = vst [vmem:[%s199 + $0x178] sm:$0xff] %v1215
      %1586 = vst [vmem:[%s199 + $0x180] sm:$0xff] %v1220
      %1587 = vst [vmem:[%s199 + $0x188] sm:$0xff] %v1223
      %1588 = vst [vmem:[%s199 + $0x190] sm:$0xff] %v1228
      %1589 = vst [vmem:[%s199 + $0x198] sm:$0xff] %v1231
      %1590 = vst [vmem:[%s199 + $0x1a0] sm:$0xff] %v1236
      %1591 = vst [vmem:[%s199 + $0x1a8] sm:$0xff] %v1239
      %1592 = vst [vmem:[%s199 + $0x1b0] sm:$0xff] %v1244
      %1593 = vst [vmem:[%s199 + $0x1b8] sm:$0xff] %v1247
      %1594 = vst [vmem:[%s199 + $0x1c0] sm:$0xff] %v1252
      %1595 = vst [vmem:[%s199 + $0x1c8] sm:$0xff] %v1255
      %1596 = vst [vmem:[%s199 + $0x1d0] sm:$0xff] %v1260
      %1597 = vst [vmem:[%s199 + $0x1d8] sm:$0xff] %v1263
      %1598 = vst [vmem:[%s199 + $0x1e0] sm:$0xff] %v1268
      %1599 = vst [vmem:[%s199 + $0x1e8] sm:$0xff] %v1271
      %1600 = vst [vmem:[%s199 + $0x1f0] sm:$0xff] %v1276
      %1601 = vst [vmem:[%s199 + $0x1f8] sm:$0xff] %v1279
      %1602 = vst [vmem:[%s199 + $0x200] sm:$0xff] %v1284
      %1603 = vst [vmem:[%s199 + $0x208] sm:$0xff] %v1287
      %1604 = vst [vmem:[%s199 + $0x210] sm:$0xff] %v1292
      %1605 = vst [vmem:[%s199 + $0x218] sm:$0xff] %v1295
      %1606 = vst [vmem:[%s199 + $0x220] sm:$0xff] %v1300
      %1607 = vst [vmem:[%s199 + $0x228] sm:$0xff] %v1303
      %1608 = vst [vmem:[%s199 + $0x230] sm:$0xff] %v1308
      %1609 = vst [vmem:[%s199 + $0x238] sm:$0xff] %v1311
      %1610 = vst [vmem:[%s199 + $0x240] sm:$0xff] %v1316
      %1611 = vst [vmem:[%s199 + $0x248] sm:$0xff] %v1319
      %1612 = vst [vmem:[%s199 + $0x250] sm:$0xff] %v1324
      %1613 = vst [vmem:[%s199 + $0x258] sm:$0xff] %v1327
      %1614 = vst [vmem:[%s199 + $0x260] sm:$0xff] %v1332
      %1615 = vst [vmem:[%s199 + $0x268] sm:$0xff] %v1335
      %1616 = vst [vmem:[%s199 + $0x270] sm:$0xff] %v1340
      %1617 = vst [vmem:[%s199 + $0x278] sm:$0xff] %v1343
      %1618 = vst [vmem:[%s199 + $0x280] sm:$0xff] %v1348
      %1619 = vst [vmem:[%s199 + $0x288] sm:$0xff] %v1351
      %1620 = vst [vmem:[%s199 + $0x290] sm:$0xff] %v1356
      %1621 = vst [vmem:[%s199 + $0x298] sm:$0xff] %v1359
      %1622 = vst [vmem:[%s199 + $0x2a0] sm:$0xff] %v1364
      %1623 = vst [vmem:[%s199 + $0x2a8] sm:$0xff] %v1367
      %1624 = vst [vmem:[%s199 + $0x2b0] sm:$0xff] %v1372
      %1625 = vst [vmem:[%s199 + $0x2b8] sm:$0xff] %v1375
      %1626 = vst [vmem:[%s199 + $0x2c0] sm:$0xff] %v1380
      %1627 = vst [vmem:[%s199 + $0x2c8] sm:$0xff] %v1383
      %1628 = vst [vmem:[%s199 + $0x2d0] sm:$0xff] %v1388
      %1629 = vst [vmem:[%s199 + $0x2d8] sm:$0xff] %v1391
      %1630 = vst [vmem:[%s199 + $0x2e0] sm:$0xff] %v1396
      %1631 = vst [vmem:[%s199 + $0x2e8] sm:$0xff] %v1399
      %1632 = vst [vmem:[%s199 + $0x2f0] sm:$0xff] %v1404
      %1633 = vst [vmem:[%s199 + $0x2f8] sm:$0xff] %v1407
      %1634 = vst [vmem:[%s199 + $0x300] sm:$0xff] %v1412
      %1635 = vst [vmem:[%s199 + $0x308] sm:$0xff] %v1415
      %1636 = vst [vmem:[%s199 + $0x310] sm:$0xff] %v1420
      %1637 = vst [vmem:[%s199 + $0x318] sm:$0xff] %v1423
      %1638 = vst [vmem:[%s199 + $0x320] sm:$0xff] %v1428
      %1639 = vst [vmem:[%s199 + $0x328] sm:$0xff] %v1431
      %1640 = vst [vmem:[%s199 + $0x330] sm:$0xff] %v1436
      %1641 = vst [vmem:[%s199 + $0x338] sm:$0xff] %v1439
      %1642 = vst [vmem:[%s199 + $0x340] sm:$0xff] %v1444
      %1643 = vst [vmem:[%s199 + $0x348] sm:$0xff] %v1447
      %1644 = vst [vmem:[%s199 + $0x350] sm:$0xff] %v1452
      %1645 = vst [vmem:[%s199 + $0x358] sm:$0xff] %v1455
      %1646 = vst [vmem:[%s199 + $0x360] sm:$0xff] %v1460
      %1647 = vst [vmem:[%s199 + $0x368] sm:$0xff] %v1463
      %1648 = vst [vmem:[%s199 + $0x370] sm:$0xff] %v1468
      %1649 = vst [vmem:[%s199 + $0x378] sm:$0xff] %v1471
      %1650 = vst [vmem:[%s199 + $0x380] sm:$0xff] %v1476
      %1651 = vst [vmem:[%s199 + $0x388] sm:$0xff] %v1479
      %1652 = vst [vmem:[%s199 + $0x390] sm:$0xff] %v1484
      %1653 = vst [vmem:[%s199 + $0x398] sm:$0xff] %v1487
      %1654 = vst [vmem:[%s199 + $0x3a0] sm:$0xff] %v1492
      %1655 = vst [vmem:[%s199 + $0x3a8] sm:$0xff] %v1495
      %1656 = vst [vmem:[%s199 + $0x3b0] sm:$0xff] %v1500
      %1657 = vst [vmem:[%s199 + $0x3b8] sm:$0xff] %v1503
      %1658 = vst [vmem:[%s199 + $0x3c0] sm:$0xff] %v1508
      %1659 = vst [vmem:[%s199 + $0x3c8] sm:$0xff] %v1511
      %1660 = vst [vmem:[%s199 + $0x3d0] sm:$0xff] %v1516
      %1661 = vst [vmem:[%s199 + $0x3d8] sm:$0xff] %v1519
      %1662 = vst [vmem:[%s199 + $0x3e0] sm:$0xff] %v1524
      %1663 = vst [vmem:[%s199 + $0x3e8] sm:$0xff] %v1527
      %1664 = vst [vmem:[%s199 + $0x3f0] sm:$0xff] %v1532
      %1665 = vst [vmem:[%s199 + $0x3f8] sm:$0xff] %v1535
      %s1666 = smul.u32 128, %s15
      %p1667 = scmp.lt.s32.totalorder %s1666, 255
      %s1668 = scalar_select %p1667, %s1666, 255
      %s1669 = smul.addr %s1668, 8
      %s1670 = scalar_lea.vmem %s4, %s1669
      // Predicated region
      $region37: #{netG_forward.8} parent=35 // pred_check
        %p1671 = pneg %p122
      $region38: #{netG_forward.8} parent=35 // pred_check_branch
        %1673 = sbr.rel (%p1671) target = $region40
      $region39: #{netG_forward.8} parent=35 // pred_region
        %s1674 = smul.u32 128, %s15
      $region40: #{netG_forward.8} parent=35 // pred_fallthru
        _
    $region36: #{netG_forward.8} parent=5 // pred_fallthru
      _
    %p1675 = scmp.le.s32.totalorder 2, %s10
    // Predicated region
    $region41: #{netG_forward.8} parent=5 // pred_check
      %p1676 = pneg %p1675
    $region42: #{netG_forward.8} parent=5 // pred_check_branch
      %1678 = sbr.rel (%p1676) target = $region44
    $region43: #{netG_forward.8} parent=5 // pred_region
      %s1679 = ssub.s32 %s10, 2
      // Predicated region
      $region45: #{netG_forward.8} parent=43 // pred_check
        %p1680 = pneg %p128
      $region46: #{netG_forward.8} parent=43 // pred_check_branch
        %1682 = sbr.rel (%p1680) target = $region48
      $region47: #{netG_forward.8} parent=43 // pred_region
        %s1683 = smul.u32 128, %s16
        %p1684 = scmp.lt.s32.totalorder %s1683, 255
        %s1685 = scalar_select %p1684, %s1683, 255
        %s1686 = smul.addr %s1685, 8
        %s1687 = scalar_lea.vmem %s4, %s1686
      $region48: #{netG_forward.8} parent=43 // pred_fallthru
        _
    $region44: #{netG_forward.8} parent=5 // pred_fallthru
      _
  $region6: #{netG_forward.8} parent=0 // loop_footer
    %s14 = sadd.s32 1, %s10
  $region7: #{netG_forward.8} parent=0 // loop_footer_branch
    %9 = sbr.rel target = $region3
  $region8: #{netG_forward.8} parent=0 // loop_exit
    _

// kernel: netG_forward.9
$region0: #{netG_forward.9}
  #allocation0 [shape = 'u32[]', space=smem, size = 0x4, offset = 0x4, fixed_abs, tag = 'smem constant byte address 0x4 - core index']
  #allocation1 [shape = 'u32[144,128]{1,0:T(1,128)}', space=vmem, size = 0x12000, scoped, tag = 'internal scratch']
  %s0 = inlined_call_operand.vmem [shape: f32[8,8192], index: 0, kind: input, shape index: {}]
  %s1 = inlined_call_operand.vmem [shape: f32[8,1], index: 1, kind: input, shape index: {}]
  %s2 = inlined_call_operand.vmem [shape: f32[8,1], index: 2, kind: input, shape index: {}]
  %s3 = inlined_call_operand.vmem [shape: f32[16,8], index: 3, kind: input, shape index: {}]
  %s4 = inlined_call_operand.vmem [shape: f32[16,8192], index: 4, kind: output, shape index: {}]
  %s5 = sld [smem:[#allocation0]]
  $region68: #{netG_forward.9} parent=0
    _
  %s7 = ssub.s32 1, %s5
  %s8 = scalar_select 0, %s7, %s5
  $region1: #{netG_forward.9} parent=0
    #allocation2 [shape = 'u8[524288]{0}', space=vmem, size = 0x80000, scoped, tag = 'output window, operand 0']
    loop: start=0, step=1, limit=4
    $region2: #{netG_forward.9} parent=1 // loop_pre_header
      _
    $region3: #{netG_forward.9} parent=1 // loop_header
      %s10 = sphi 0, %s14
      %p11 = scmp.ge.s32.totalorder %s10, 4
      %s20 = sphi 0, %s22
      %s23 = sphi 0, %s20
      %s24 = sphi 0, %s23
      %s40 = sphi 0, %s24
      %s44 = sphi 0, %s44
      %s46 = sphi 0, %s44
      %s47 = sphi 0, %s46
      %s61 = sphi 0, %s47
      %s65 = sphi 0, %s65
      %s67 = sphi 0, %s65
      %s68 = sphi 0, %s67
      %s82 = sphi 0, %s68
      %s86 = sphi 0, %s86
      %s88 = sphi 0, %s86
      %s89 = sphi 0, %s88
      %s103 = sphi 0, %s89
      %s109 = sphi 0, %s111
      %s112 = sphi 0, %s109
      %s113 = sphi 0, %s112
      %s129 = sphi 0, %s113
    $region4: #{netG_forward.9} parent=1 // loop_header_branch
      %13 = sbr.rel (%p11) target = $region8
    $region5: #{netG_forward.9} parent=1 // loop_body
      %s15 = ssub.s32 %s10, 1
      %s16 = ssub.s32 %s10, 2
      %s17 = sadd.s32 %s10, 1
      %s18 = ssub.s32 %s10, %s17
      %p19 = scmp.eq.s32.totalorder %s18, 0
      %s21 = sadd.s32 %s20, 1
      %s22 = scalar_select %p19, %s20, %s21
      %p25 = pneg %p19
      %p26 = scmp.eq.s32.totalorder %s10, 1
      %p27 = por %p25, %p26
      %p28 = scmp.ne.s32.totalorder %s20, %s23
      %p29 = scmp.eq.s32.totalorder %s10, 0
      %p30 = por %p28, %p29
      %p31 = scmp.ne.s32.totalorder %s20, %s23
      %p32 = scmp.eq.s32.totalorder %s15, 1
      %p33 = por %p31, %p32
      %p34 = scmp.ne.s32.totalorder %s23, %s24
      %p35 = scmp.eq.s32.totalorder %s15, 0
      %p36 = por %p34, %p35
      %p37 = scmp.ne.s32.totalorder %s23, %s24
      %p38 = scmp.eq.s32.totalorder %s16, 1
      %p39 = por %p37, %p38
      %p41 = scmp.ne.s32.totalorder %s24, %s40
      %p42 = scmp.eq.s32.totalorder %s16, 0
      %p43 = por %p41, %p42
      %s45 = sadd.s32 %s44, 1
      %p48 = scmp.eq.s32.totalorder %s10, 1
      %p49 = scmp.ne.s32.totalorder %s44, %s46
      %p50 = scmp.eq.s32.totalorder %s10, 0
      %p51 = por %p49, %p50
      %p52 = scmp.ne.s32.totalorder %s44, %s46
      %p53 = scmp.eq.s32.totalorder %s15, 1
      %p54 = por %p52, %p53
      %p55 = scmp.ne.s32.totalorder %s46, %s47
      %p56 = scmp.eq.s32.totalorder %s15, 0
      %p57 = por %p55, %p56
      %p58 = scmp.ne.s32.totalorder %s46, %s47
      %p59 = scmp.eq.s32.totalorder %s16, 1
      %p60 = por %p58, %p59
      %p62 = scmp.ne.s32.totalorder %s47, %s61
      %p63 = scmp.eq.s32.totalorder %s16, 0
      %p64 = por %p62, %p63
      %s66 = sadd.s32 %s65, 1
      %p69 = scmp.eq.s32.totalorder %s10, 1
      %p70 = scmp.ne.s32.totalorder %s65, %s67
      %p71 = scmp.eq.s32.totalorder %s10, 0
      %p72 = por %p70, %p71
      %p73 = scmp.ne.s32.totalorder %s65, %s67
      %p74 = scmp.eq.s32.totalorder %s15, 1
      %p75 = por %p73, %p74
      %p76 = scmp.ne.s32.totalorder %s67, %s68
      %p77 = scmp.eq.s32.totalorder %s15, 0
      %p78 = por %p76, %p77
      %p79 = scmp.ne.s32.totalorder %s67, %s68
      %p80 = scmp.eq.s32.totalorder %s16, 1
      %p81 = por %p79, %p80
      %p83 = scmp.ne.s32.totalorder %s68, %s82
      %p84 = scmp.eq.s32.totalorder %s16, 0
      %p85 = por %p83, %p84
      %s87 = sadd.s32 %s86, 1
      %p90 = scmp.eq.s32.totalorder %s10, 1
      %p91 = scmp.ne.s32.totalorder %s86, %s88
      %p92 = scmp.eq.s32.totalorder %s10, 0
      %p93 = por %p91, %p92
      %p94 = scmp.ne.s32.totalorder %s86, %s88
      %p95 = scmp.eq.s32.totalorder %s15, 1
      %p96 = por %p94, %p95
      %p97 = scmp.ne.s32.totalorder %s88, %s89
      %p98 = scmp.eq.s32.totalorder %s15, 0
      %p99 = por %p97, %p98
      %p100 = scmp.ne.s32.totalorder %s88, %s89
      %p101 = scmp.eq.s32.totalorder %s16, 1
      %p102 = por %p100, %p101
      %p104 = scmp.ne.s32.totalorder %s89, %s103
      %p105 = scmp.eq.s32.totalorder %s16, 0
      %p106 = por %p104, %p105
      %s107 = ssub.s32 %s10, %s17
      %p108 = scmp.eq.s32.totalorder %s107, 0
      %s110 = sadd.s32 %s109, 1
      %s111 = scalar_select %p108, %s109, %s110
      %p114 = pneg %p108
      %p115 = scmp.eq.s32.totalorder %s10, 1
      %p116 = por %p114, %p115
      %p117 = scmp.ne.s32.totalorder %s109, %s112
      %p118 = scmp.eq.s32.totalorder %s10, 0
      %p119 = por %p117, %p118
      %p120 = scmp.ne.s32.totalorder %s109, %s112
      %p121 = scmp.eq.s32.totalorder %s15, 1
      %p122 = por %p120, %p121
      %p123 = scmp.ne.s32.totalorder %s112, %s113
      %p124 = scmp.eq.s32.totalorder %s15, 0
      %p125 = por %p123, %p124
      %p126 = scmp.ne.s32.totalorder %s112, %s113
      %p127 = scmp.eq.s32.totalorder %s16, 1
      %p128 = por %p126, %p127
      %p130 = scmp.ne.s32.totalorder %s113, %s129
      %p131 = scmp.eq.s32.totalorder %s16, 0
      %p132 = por %p130, %p131
      %p133 = scmp.le.s32.totalorder 1, %s10
      %p134 = scmp.lt.s32.totalorder %s10, 3
      %p135 = pnand %p133, %p134
      %p136 = pneg %p135
      // Predicated region
      $region9: #{netG_forward.9} parent=5 // pred_check
        _
      $region10: #{netG_forward.9} parent=5 // pred_check_branch
        %138 = sbr.rel (%p135) target = $region12
      $region11: #{netG_forward.9} parent=5 // pred_region
        %s139 = ssub.s32 %s10, 1
        // Predicated region
        $region13: #{netG_forward.9} parent=11 // pred_check
          %p140 = pneg %p57
        $region14: #{netG_forward.9} parent=11 // pred_check_branch
          %142 = sbr.rel (%p140) target = $region16
        $region15: #{netG_forward.9} parent=11 // pred_region
          _
        $region16: #{netG_forward.9} parent=11 // pred_fallthru
          _
        // Predicated region
        $region17: #{netG_forward.9} parent=11 // pred_check
          %p143 = pneg %p78
        $region18: #{netG_forward.9} parent=11 // pred_check_branch
          %145 = sbr.rel (%p143) target = $region20
        $region19: #{netG_forward.9} parent=11 // pred_region
          _
        $region20: #{netG_forward.9} parent=11 // pred_fallthru
          _
        // Predicated region
        $region21: #{netG_forward.9} parent=11 // pred_check
          %p146 = pneg %p99
        $region22: #{netG_forward.9} parent=11 // pred_check_branch
          %148 = sbr.rel (%p146) target = $region24
        $region23: #{netG_forward.9} parent=11 // pred_region
          _
        $region24: #{netG_forward.9} parent=11 // pred_fallthru
          _
      $region12: #{netG_forward.9} parent=5 // pred_fallthru
        _
      %p149 = scmp.lt.s32.totalorder %s10, 2
      // Predicated region
      $region25: #{netG_forward.9} parent=5 // pred_check
        %p150 = pneg %p149
      $region26: #{netG_forward.9} parent=5 // pred_check_branch
        %152 = sbr.rel (%p150) target = $region28
      $region27: #{netG_forward.9} parent=5 // pred_region
        // Predicated region
        $region29: #{netG_forward.9} parent=27 // pred_check
          %p153 = pneg %p30
        $region30: #{netG_forward.9} parent=27 // pred_check_branch
          %155 = sbr.rel (%p153) target = $region32
        $region31: #{netG_forward.9} parent=27 // pred_region
          %s156 = smul.u32 32, %s10
          %p157 = scmp.lt.s32.totalorder %s156, 63
          %s158 = scalar_select %p157, %s156, 63
          %s159 = smul.addr %s158, 8
          %s160 = scalar_lea.vmem %s0, %s159
          %s161 = smul.u32 32, %s10
        $region32: #{netG_forward.9} parent=27 // pred_fallthru
          _
      $region28: #{netG_forward.9} parent=5 // pred_fallthru
        _
      %p162 = scmp.le.s32.totalorder 1, %s10
      %p163 = scmp.lt.s32.totalorder %s10, 3
      %p164 = pnand %p162, %p163
      %p165 = pneg %p164
      // Predicated region
      $region33: #{netG_forward.9} parent=5 // pred_check
        _
      $region34: #{netG_forward.9} parent=5 // pred_check_branch
        %167 = sbr.rel (%p164) target = $region36
      $region35: #{netG_forward.9} parent=5 // pred_region
        %s168 = ssub.s32 %s10, 1
        %s169 = smul.u32 32, %s15
        %p170 = scmp.lt.s32.totalorder %s169, 63
        %s171 = scalar_select %p170, %s169, 63
        %s172 = smul.addr %s171, 8
        %s173 = scalar_lea.vmem %s0, %s172
        %p174 = pneg %p36
        %p175 = pneg %p33
        %p176 = pneg %p57
        %p177 = pneg %p54
        %p178 = pneg %p78
        %p179 = pneg %p75
        %p180 = pneg %p99
        %p181 = pneg %p96
        %p182 = pneg %p125
        %p183 = pneg %p122
        %s184 = sand.u32 %s112, 1
        %s185 = sand.u32 %s112, 1
        %s186 = smul.addr %s185, 512
        %s187 = scalar_lea.vmem [#allocation2], %s186
        %s188 = smul.u32 32, %s15
        %p189 = scmp.lt.s32.totalorder %s188, 63
        %s190 = scalar_select %p189, %s188, 63
        %s191 = smul.addr %s190, 8
        %s192 = scalar_lea.vmem %s0, %s191
        %s193 = smul.u32 32, %s15
        %s194 = smul.u32 32, %s15
        %v195 = vld [vmem:[%s192] sm:$0xff]
        %v196 = vld [vmem:[%s192 + $0x8] sm:$0xff]
        %v197 = vld [vmem:[%s192 + $0x10] sm:$0xff]
        %v198 = vld [vmem:[%s192 + $0x18] sm:$0xff]
        %v199 = vld [vmem:[%s192 + $0x20] sm:$0xff]
        %v200 = vld [vmem:[%s192 + $0x28] sm:$0xff]
        %v201 = vld [vmem:[%s192 + $0x30] sm:$0xff]
        %v202 = vld [vmem:[%s192 + $0x38] sm:$0xff]
        %v203 = vld [vmem:[%s192 + $0x40] sm:$0xff]
        %v204 = vld [vmem:[%s192 + $0x48] sm:$0xff]
        %v205 = vld [vmem:[%s192 + $0x50] sm:$0xff]
        %v206 = vld [vmem:[%s192 + $0x58] sm:$0xff]
        %v207 = vld [vmem:[%s192 + $0x60] sm:$0xff]
        %v208 = vld [vmem:[%s192 + $0x68] sm:$0xff]
        %v209 = vld [vmem:[%s192 + $0x70] sm:$0xff]
        %v210 = vld [vmem:[%s192 + $0x78] sm:$0xff]
        %v211 = vld [vmem:[%s192 + $0x80] sm:$0xff]
        %v212 = vld [vmem:[%s192 + $0x88] sm:$0xff]
        %v213 = vld [vmem:[%s192 + $0x90] sm:$0xff]
        %v214 = vld [vmem:[%s192 + $0x98] sm:$0xff]
        %v215 = vld [vmem:[%s192 + $0xa0] sm:$0xff]
        %v216 = vld [vmem:[%s192 + $0xa8] sm:$0xff]
        %v217 = vld [vmem:[%s192 + $0xb0] sm:$0xff]
        %v218 = vld [vmem:[%s192 + $0xb8] sm:$0xff]
        %v219 = vld [vmem:[%s192 + $0xc0] sm:$0xff]
        %v220 = vld [vmem:[%s192 + $0xc8] sm:$0xff]
        %v221 = vld [vmem:[%s192 + $0xd0] sm:$0xff]
        %v222 = vld [vmem:[%s192 + $0xd8] sm:$0xff]
        %v223 = vld [vmem:[%s192 + $0xe0] sm:$0xff]
        %v224 = vld [vmem:[%s192 + $0xe8] sm:$0xff]
        %v225 = vld [vmem:[%s192 + $0xf0] sm:$0xff]
        %v226 = vld [vmem:[%s192 + $0xf8] sm:$0xff]
        %v227 = vld [vmem:[%s1] sm:$0xff]
        %229 = vset.pattern.permute.xlu0 0
        %230 = vperm.xlu0 %229, %v227
        %v231 = vpop.permute.xlu0 %230
        %v233 = vmul.f32 %v195, %v231
        %v234 = vmul.f32 %v196, %v231
        %v235 = vmul.f32 %v197, %v231
        %v236 = vmul.f32 %v198, %v231
        %v237 = vmul.f32 %v199, %v231
        %v238 = vmul.f32 %v200, %v231
        %v239 = vmul.f32 %v201, %v231
        %v240 = vmul.f32 %v202, %v231
        %v241 = vmul.f32 %v203, %v231
        %v242 = vmul.f32 %v204, %v231
        %v243 = vmul.f32 %v205, %v231
        %v244 = vmul.f32 %v206, %v231
        %v245 = vmul.f32 %v207, %v231
        %v246 = vmul.f32 %v208, %v231
        %v247 = vmul.f32 %v209, %v231
        %v248 = vmul.f32 %v210, %v231
        %v249 = vmul.f32 %v211, %v231
        %v250 = vmul.f32 %v212, %v231
        %v251 = vmul.f32 %v213, %v231
        %v252 = vmul.f32 %v214, %v231
        %v253 = vmul.f32 %v215, %v231
        %v254 = vmul.f32 %v216, %v231
        %v255 = vmul.f32 %v217, %v231
        %v256 = vmul.f32 %v218, %v231
        %v257 = vmul.f32 %v219, %v231
        %v258 = vmul.f32 %v220, %v231
        %v259 = vmul.f32 %v221, %v231
        %v260 = vmul.f32 %v222, %v231
        %v261 = vmul.f32 %v223, %v231
        %v262 = vmul.f32 %v224, %v231
        %v263 = vmul.f32 %v225, %v231
        %v264 = vmul.f32 %v226, %v231
        %v265 = vld [vmem:[%s2] sm:$0xff]
        %267 = vset.pattern.permute.xlu0 0
        %268 = vperm.xlu0 %267, %v265
        %v269 = vpop.permute.xlu0 %268
        %v271 = vadd.f32 %v233, %v269
        %v272 = vadd.f32 %v234, %v269
        %v273 = vadd.f32 %v235, %v269
        %v274 = vadd.f32 %v236, %v269
        %v275 = vadd.f32 %v237, %v269
        %v276 = vadd.f32 %v238, %v269
        %v277 = vadd.f32 %v239, %v269
        %v278 = vadd.f32 %v240, %v269
        %v279 = vadd.f32 %v241, %v269
        %v280 = vadd.f32 %v242, %v269
        %v281 = vadd.f32 %v243, %v269
        %v282 = vadd.f32 %v244, %v269
        %v283 = vadd.f32 %v245, %v269
        %v284 = vadd.f32 %v246, %v269
        %v285 = vadd.f32 %v247, %v269
        %v286 = vadd.f32 %v248, %v269
        %v287 = vadd.f32 %v249, %v269
        %v288 = vadd.f32 %v250, %v269
        %v289 = vadd.f32 %v251, %v269
        %v290 = vadd.f32 %v252, %v269
        %v291 = vadd.f32 %v253, %v269
        %v292 = vadd.f32 %v254, %v269
        %v293 = vadd.f32 %v255, %v269
        %v294 = vadd.f32 %v256, %v269
        %v295 = vadd.f32 %v257, %v269
        %v296 = vadd.f32 %v258, %v269
        %v297 = vadd.f32 %v259, %v269
        %v298 = vadd.f32 %v260, %v269
        %v299 = vadd.f32 %v261, %v269
        %v300 = vadd.f32 %v262, %v269
        %v301 = vadd.f32 %v263, %v269
        %v302 = vadd.f32 %v264, %v269
        %v303 = vmax.f32 %v271, 0.0
        %v304 = vmax.f32 %v272, 0.0
        %v305 = vmax.f32 %v273, 0.0
        %v306 = vmax.f32 %v274, 0.0
        %v307 = vmax.f32 %v275, 0.0
        %v308 = vmax.f32 %v276, 0.0
        %v309 = vmax.f32 %v277, 0.0
        %v310 = vmax.f32 %v278, 0.0
        %v311 = vmax.f32 %v279, 0.0
        %v312 = vmax.f32 %v280, 0.0
        %v313 = vmax.f32 %v281, 0.0
        %v314 = vmax.f32 %v282, 0.0
        %v315 = vmax.f32 %v283, 0.0
        %v316 = vmax.f32 %v284, 0.0
        %v317 = vmax.f32 %v285, 0.0
        %v318 = vmax.f32 %v286, 0.0
        %v319 = vmax.f32 %v287, 0.0
        %v320 = vmax.f32 %v288, 0.0
        %v321 = vmax.f32 %v289, 0.0
        %v322 = vmax.f32 %v290, 0.0
        %v323 = vmax.f32 %v291, 0.0
        %v324 = vmax.f32 %v292, 0.0
        %v325 = vmax.f32 %v293, 0.0
        %v326 = vmax.f32 %v294, 0.0
        %v327 = vmax.f32 %v295, 0.0
        %v328 = vmax.f32 %v296, 0.0
        %v329 = vmax.f32 %v297, 0.0
        %v330 = vmax.f32 %v298, 0.0
        %v331 = vmax.f32 %v299, 0.0
        %v332 = vmax.f32 %v300, 0.0
        %v333 = vmax.f32 %v301, 0.0
        %v334 = vmax.f32 %v302, 0.0
        %v335 = vld [vmem:[%s3] sm:$0xff]
        %v336 = vld [vmem:[%s3 + $0x8] sm:$0xff]
        %vm337 = vcmask 64512
        %v339 = vsel %vm337, %v335, 0
        %v342 = vsel %vm337, %v336, 0
        %344 = vmatprep.subr.mxu0 %v304
        %345 = vmatpush1.msra.mxu0 %v303
        %346 = vmatprep.subr.mxu0 0.0
        %347 = vmatpush1.msra.mxu0 0.0
        %348 = vmatprep.subr.mxu0 0.0
        %349 = vmatpush1.msra.mxu0 0.0
        %350 = vmatprep.subr.mxu0 0.0
        %351 = vmatpush1.msra.mxu0 0.0
        %352 = vmatprep.subr.mxu0 0.0
        %353 = vmatpush1.msra.mxu0 0.0
        %354 = vmatprep.subr.mxu0 0.0
        %355 = vmatpush1.msra.mxu0 0.0
        %356 = vmatprep.subr.mxu0 0.0
        %357 = vmatpush1.msra.mxu0 0.0
        %358 = vmatprep.subr.mxu0 0.0
        %359 = vmatpush1.msra.mxu0 0.0
        %360 = vmatprep.subr.mxu0 0.0
        %361 = vmatpush1.msra.mxu0 0.0
        %362 = vmatprep.subr.mxu0 0.0
        %363 = vmatpush1.msra.mxu0 0.0
        %364 = vmatprep.subr.mxu0 0.0
        %365 = vmatpush1.msra.mxu0 0.0
        %366 = vmatprep.subr.mxu0 0.0
        %367 = vmatpush1.msra.mxu0 0.0
        %368 = vmatprep.subr.mxu0 0.0
        %369 = vmatpush1.msra.mxu0 0.0
        %370 = vmatprep.subr.mxu0 0.0
        %371 = vmatpush1.msra.mxu0 0.0
        %372 = vmatprep.subr.mxu0 0.0
        %373 = vmatpush1.msra.mxu0 0.0
        %374 = vmatprep.subr.mxu0 0.0
        %375 = vmatpush1.msra.mxu0 0.0
        %376 = vmatprep.subr.mxu0 0.0
        %377 = vmatpush1.msra.mxu0 0.0
        %378 = vmatprep.subr.mxu0 0.0
        %379 = vmatpush1.msra.mxu0 0.0
        %380 = vmatprep.subr.mxu0 0.0
        %381 = vmatpush1.msra.mxu0 0.0
        %382 = vmatprep.subr.mxu0 0.0
        %383 = vmatpush1.msra.mxu0 0.0
        %384 = vmatprep.subr.mxu0 0.0
        %385 = vmatpush1.msra.mxu0 0.0
        %386 = vmatprep.subr.mxu0 0.0
        %387 = vmatpush1.msra.mxu0 0.0
        %388 = vmatprep.subr.mxu0 0.0
        %389 = vmatpush1.msra.mxu0 0.0
        %390 = vmatprep.subr.mxu0 0.0
        %391 = vmatpush1.msra.mxu0 0.0
        %392 = vmatprep.subr.mxu0 0.0
        %393 = vmatpush1.msra.mxu0 0.0
        %394 = vmatprep.subr.mxu0 0.0
        %395 = vmatpush1.msra.mxu0 0.0
        %396 = vmatprep.subr.mxu0 0.0
        %397 = vmatpush1.msra.mxu0 0.0
        %398 = vmatprep.subr.mxu0 0.0
        %399 = vmatpush1.msra.mxu0 0.0
        %400 = vmatprep.subr.mxu0 0.0
        %401 = vmatpush1.msra.mxu0 0.0
        %402 = vmatprep.subr.mxu0 0.0
        %403 = vmatpush1.msra.mxu0 0.0
        %404 = vmatprep.subr.mxu0 0.0
        %405 = vmatpush1.msra.mxu0 0.0
        %406 = vmatprep.subr.mxu0 0.0
        %407 = vmatpush1.msra.mxu0 0.0
        %408 = vmatprep.mubr.f32.mxu0 0.0
        %409 = vmatmul.mubr.f32.gmra.mrb[0].mxu0 %v339
        %v410 = vpop.f32.mrb[0].mxu0
        %v411 = vadd.f32 0.0, %v410
        %v412 = vpop.f32.mrb[0].mxu0
        %v413 = vadd.f32 0.0, %v412
        %414 = vmatprep.mubr.f32.mxu0 0.0
        %415 = vmatmul.mubr.f32.gmra.mrb[0].mxu0 %v342
        %v416 = vpop.f32.mrb[0].mxu0
        %v417 = vadd.f32 0.0, %v416
        %v418 = vpop.f32.mrb[0].mxu0
        %v419 = vadd.f32 0.0, %v418
        %420 = vdwg.mxu0
        %421 = vmatprep.subr.mxu0 %v306
        %422 = vmatpush1.msra.mxu0 %v305
        %423 = vmatprep.subr.mxu0 0.0
        %424 = vmatpush1.msra.mxu0 0.0
        %425 = vmatprep.subr.mxu0 0.0
        %426 = vmatpush1.msra.mxu0 0.0
        %427 = vmatprep.subr.mxu0 0.0
        %428 = vmatpush1.msra.mxu0 0.0
        %429 = vmatprep.subr.mxu0 0.0
        %430 = vmatpush1.msra.mxu0 0.0
        %431 = vmatprep.subr.mxu0 0.0
        %432 = vmatpush1.msra.mxu0 0.0
        %433 = vmatprep.subr.mxu0 0.0
        %434 = vmatpush1.msra.mxu0 0.0
        %435 = vmatprep.subr.mxu0 0.0
        %436 = vmatpush1.msra.mxu0 0.0
        %437 = vmatprep.subr.mxu0 0.0
        %438 = vmatpush1.msra.mxu0 0.0
        %439 = vmatprep.subr.mxu0 0.0
        %440 = vmatpush1.msra.mxu0 0.0
        %441 = vmatprep.subr.mxu0 0.0
        %442 = vmatpush1.msra.mxu0 0.0
        %443 = vmatprep.subr.mxu0 0.0
        %444 = vmatpush1.msra.mxu0 0.0
        %445 = vmatprep.subr.mxu0 0.0
        %446 = vmatpush1.msra.mxu0 0.0
        %447 = vmatprep.subr.mxu0 0.0
        %448 = vmatpush1.msra.mxu0 0.0
        %449 = vmatprep.subr.mxu0 0.0
        %450 = vmatpush1.msra.mxu0 0.0
        %451 = vmatprep.subr.mxu0 0.0
        %452 = vmatpush1.msra.mxu0 0.0
        %453 = vmatprep.subr.mxu0 0.0
        %454 = vmatpush1.msra.mxu0 0.0
        %455 = vmatprep.subr.mxu0 0.0
        %456 = vmatpush1.msra.mxu0 0.0
        %457 = vmatprep.subr.mxu0 0.0
        %458 = vmatpush1.msra.mxu0 0.0
        %459 = vmatprep.subr.mxu0 0.0
        %460 = vmatpush1.msra.mxu0 0.0
        %461 = vmatprep.subr.mxu0 0.0
        %462 = vmatpush1.msra.mxu0 0.0
        %463 = vmatprep.subr.mxu0 0.0
        %464 = vmatpush1.msra.mxu0 0.0
        %465 = vmatprep.subr.mxu0 0.0
        %466 = vmatpush1.msra.mxu0 0.0
        %467 = vmatprep.subr.mxu0 0.0
        %468 = vmatpush1.msra.mxu0 0.0
        %469 = vmatprep.subr.mxu0 0.0
        %470 = vmatpush1.msra.mxu0 0.0
        %471 = vmatprep.subr.mxu0 0.0
        %472 = vmatpush1.msra.mxu0 0.0
        %473 = vmatprep.subr.mxu0 0.0
        %474 = vmatpush1.msra.mxu0 0.0
        %475 = vmatprep.subr.mxu0 0.0
        %476 = vmatpush1.msra.mxu0 0.0
        %477 = vmatprep.subr.mxu0 0.0
        %478 = vmatpush1.msra.mxu0 0.0
        %479 = vmatprep.subr.mxu0 0.0
        %480 = vmatpush1.msra.mxu0 0.0
        %481 = vmatprep.subr.mxu0 0.0
        %482 = vmatpush1.msra.mxu0 0.0
        %483 = vmatprep.subr.mxu0 0.0
        %484 = vmatpush1.msra.mxu0 0.0
        %485 = vmatprep.mubr.f32.mxu0 0.0
        %486 = vmatmul.mubr.f32.gmra.mrb[0].mxu0 %v339
        %v487 = vpop.f32.mrb[0].mxu0
        %v488 = vadd.f32 0.0, %v487
        %v489 = vpop.f32.mrb[0].mxu0
        %v490 = vadd.f32 0.0, %v489
        %491 = vmatprep.mubr.f32.mxu0 0.0
        %492 = vmatmul.mubr.f32.gmra.mrb[0].mxu0 %v342
        %v493 = vpop.f32.mrb[0].mxu0
        %v494 = vadd.f32 0.0, %v493
        %v495 = vpop.f32.mrb[0].mxu0
        %v496 = vadd.f32 0.0, %v495
        %497 = vdwg.mxu0
        %498 = vmatprep.subr.mxu0 %v308
        %499 = vmatpush1.msra.mxu0 %v307
        %500 = vmatprep.subr.mxu0 0.0
        %501 = vmatpush1.msra.mxu0 0.0
        %502 = vmatprep.subr.mxu0 0.0
        %503 = vmatpush1.msra.mxu0 0.0
        %504 = vmatprep.subr.mxu0 0.0
        %505 = vmatpush1.msra.mxu0 0.0
        %506 = vmatprep.subr.mxu0 0.0
        %507 = vmatpush1.msra.mxu0 0.0
        %508 = vmatprep.subr.mxu0 0.0
        %509 = vmatpush1.msra.mxu0 0.0
        %510 = vmatprep.subr.mxu0 0.0
        %511 = vmatpush1.msra.mxu0 0.0
        %512 = vmatprep.subr.mxu0 0.0
        %513 = vmatpush1.msra.mxu0 0.0
        %514 = vmatprep.subr.mxu0 0.0
        %515 = vmatpush1.msra.mxu0 0.0
        %516 = vmatprep.subr.mxu0 0.0
        %517 = vmatpush1.msra.mxu0 0.0
        %518 = vmatprep.subr.mxu0 0.0
        %519 = vmatpush1.msra.mxu0 0.0
        %520 = vmatprep.subr.mxu0 0.0
        %521 = vmatpush1.msra.mxu0 0.0
        %522 = vmatprep.subr.mxu0 0.0
        %523 = vmatpush1.msra.mxu0 0.0
        %524 = vmatprep.subr.mxu0 0.0
        %525 = vmatpush1.msra.mxu0 0.0
        %526 = vmatprep.subr.mxu0 0.0
        %527 = vmatpush1.msra.mxu0 0.0
        %528 = vmatprep.subr.mxu0 0.0
        %529 = vmatpush1.msra.mxu0 0.0
        %530 = vmatprep.subr.mxu0 0.0
        %531 = vmatpush1.msra.mxu0 0.0
        %532 = vmatprep.subr.mxu0 0.0
        %533 = vmatpush1.msra.mxu0 0.0
        %534 = vmatprep.subr.mxu0 0.0
        %535 = vmatpush1.msra.mxu0 0.0
        %536 = vmatprep.subr.mxu0 0.0
        %537 = vmatpush1.msra.mxu0 0.0
        %538 = vmatprep.subr.mxu0 0.0
        %539 = vmatpush1.msra.mxu0 0.0
        %540 = vmatprep.subr.mxu0 0.0
        %541 = vmatpush1.msra.mxu0 0.0
        %542 = vmatprep.subr.mxu0 0.0
        %543 = vmatpush1.msra.mxu0 0.0
        %544 = vmatprep.subr.mxu0 0.0
        %545 = vmatpush1.msra.mxu0 0.0
        %546 = vmatprep.subr.mxu0 0.0
        %547 = vmatpush1.msra.mxu0 0.0
        %548 = vmatprep.subr.mxu0 0.0
        %549 = vmatpush1.msra.mxu0 0.0
        %550 = vmatprep.subr.mxu0 0.0
        %551 = vmatpush1.msra.mxu0 0.0
        %552 = vmatprep.subr.mxu0 0.0
        %553 = vmatpush1.msra.mxu0 0.0
        %554 = vmatprep.subr.mxu0 0.0
        %555 = vmatpush1.msra.mxu0 0.0
        %556 = vmatprep.subr.mxu0 0.0
        %557 = vmatpush1.msra.mxu0 0.0
        %558 = vmatprep.subr.mxu0 0.0
        %559 = vmatpush1.msra.mxu0 0.0
        %560 = vmatprep.subr.mxu0 0.0
        %561 = vmatpush1.msra.mxu0 0.0
        %562 = vmatprep.mubr.f32.mxu0 0.0
        %563 = vmatmul.mubr.f32.gmra.mrb[0].mxu0 %v339
        %v564 = vpop.f32.mrb[0].mxu0
        %v565 = vadd.f32 0.0, %v564
        %v566 = vpop.f32.mrb[0].mxu0
        %v567 = vadd.f32 0.0, %v566
        %568 = vmatprep.mubr.f32.mxu0 0.0
        %569 = vmatmul.mubr.f32.gmra.mrb[0].mxu0 %v342
        %v570 = vpop.f32.mrb[0].mxu0
        %v571 = vadd.f32 0.0, %v570
        %v572 = vpop.f32.mrb[0].mxu0
        %v573 = vadd.f32 0.0, %v572
        %574 = vdwg.mxu0
        %575 = vmatprep.subr.mxu0 %v310
        %576 = vmatpush1.msra.mxu0 %v309
        %577 = vmatprep.subr.mxu0 0.0
        %578 = vmatpush1.msra.mxu0 0.0
        %579 = vmatprep.subr.mxu0 0.0
        %580 = vmatpush1.msra.mxu0 0.0
        %581 = vmatprep.subr.mxu0 0.0
        %582 = vmatpush1.msra.mxu0 0.0
        %583 = vmatprep.subr.mxu0 0.0
        %584 = vmatpush1.msra.mxu0 0.0
        %585 = vmatprep.subr.mxu0 0.0
        %586 = vmatpush1.msra.mxu0 0.0
        %587 = vmatprep.subr.mxu0 0.0
        %588 = vmatpush1.msra.mxu0 0.0
        %589 = vmatprep.subr.mxu0 0.0
        %590 = vmatpush1.msra.mxu0 0.0
        %591 = vmatprep.subr.mxu0 0.0
        %592 = vmatpush1.msra.mxu0 0.0
        %593 = vmatprep.subr.mxu0 0.0
        %594 = vmatpush1.msra.mxu0 0.0
        %595 = vmatprep.subr.mxu0 0.0
        %596 = vmatpush1.msra.mxu0 0.0
        %597 = vmatprep.subr.mxu0 0.0
        %598 = vmatpush1.msra.mxu0 0.0
        %599 = vmatprep.subr.mxu0 0.0
        %600 = vmatpush1.msra.mxu0 0.0
        %601 = vmatprep.subr.mxu0 0.0
        %602 = vmatpush1.msra.mxu0 0.0
        %603 = vmatprep.subr.mxu0 0.0
        %604 = vmatpush1.msra.mxu0 0.0
        %605 = vmatprep.subr.mxu0 0.0
        %606 = vmatpush1.msra.mxu0 0.0
        %607 = vmatprep.subr.mxu0 0.0
        %608 = vmatpush1.msra.mxu0 0.0
        %609 = vmatprep.subr.mxu0 0.0
        %610 = vmatpush1.msra.mxu0 0.0
        %611 = vmatprep.subr.mxu0 0.0
        %612 = vmatpush1.msra.mxu0 0.0
        %613 = vmatprep.subr.mxu0 0.0
        %614 = vmatpush1.msra.mxu0 0.0
        %615 = vmatprep.subr.mxu0 0.0
        %616 = vmatpush1.msra.mxu0 0.0
        %617 = vmatprep.subr.mxu0 0.0
        %618 = vmatpush1.msra.mxu0 0.0
        %619 = vmatprep.subr.mxu0 0.0
        %620 = vmatpush1.msra.mxu0 0.0
        %621 = vmatprep.subr.mxu0 0.0
        %622 = vmatpush1.msra.mxu0 0.0
        %623 = vmatprep.subr.mxu0 0.0
        %624 = vmatpush1.msra.mxu0 0.0
        %625 = vmatprep.subr.mxu0 0.0
        %626 = vmatpush1.msra.mxu0 0.0
        %627 = vmatprep.subr.mxu0 0.0
        %628 = vmatpush1.msra.mxu0 0.0
        %629 = vmatprep.subr.mxu0 0.0
        %630 = vmatpush1.msra.mxu0 0.0
        %631 = vmatprep.subr.mxu0 0.0
        %632 = vmatpush1.msra.mxu0 0.0
        %633 = vmatprep.subr.mxu0 0.0
        %634 = vmatpush1.msra.mxu0 0.0
        %635 = vmatprep.subr.mxu0 0.0
        %636 = vmatpush1.msra.mxu0 0.0
        %637 = vmatprep.subr.mxu0 0.0
        %638 = vmatpush1.msra.mxu0 0.0
        %639 = vmatprep.mubr.f32.mxu0 0.0
        %640 = vmatmul.mubr.f32.gmra.mrb[0].mxu0 %v339
        %v641 = vpop.f32.mrb[0].mxu0
        %v642 = vadd.f32 0.0, %v641
        %v643 = vpop.f32.mrb[0].mxu0
        %v644 = vadd.f32 0.0, %v643
        %645 = vmatprep.mubr.f32.mxu0 0.0
        %646 = vmatmul.mubr.f32.gmra.mrb[0].mxu0 %v342
        %v647 = vpop.f32.mrb[0].mxu0
        %v648 = vadd.f32 0.0, %v647
        %v649 = vpop.f32.mrb[0].mxu0
        %v650 = vadd.f32 0.0, %v649
        %651 = vdwg.mxu0
        %652 = vmatprep.subr.mxu0 %v312
        %653 = vmatpush1.msra.mxu0 %v311
        %654 = vmatprep.subr.mxu0 0.0
        %655 = vmatpush1.msra.mxu0 0.0
        %656 = vmatprep.subr.mxu0 0.0
        %657 = vmatpush1.msra.mxu0 0.0
        %658 = vmatprep.subr.mxu0 0.0
        %659 = vmatpush1.msra.mxu0 0.0
        %660 = vmatprep.subr.mxu0 0.0
        %661 = vmatpush1.msra.mxu0 0.0
        %662 = vmatprep.subr.mxu0 0.0
        %663 = vmatpush1.msra.mxu0 0.0
        %664 = vmatprep.subr.mxu0 0.0
        %665 = vmatpush1.msra.mxu0 0.0
        %666 = vmatprep.subr.mxu0 0.0
        %667 = vmatpush1.msra.mxu0 0.0
        %668 = vmatprep.subr.mxu0 0.0
        %669 = vmatpush1.msra.mxu0 0.0
        %670 = vmatprep.subr.mxu0 0.0
        %671 = vmatpush1.msra.mxu0 0.0
        %672 = vmatprep.subr.mxu0 0.0
        %673 = vmatpush1.msra.mxu0 0.0
        %674 = vmatprep.subr.mxu0 0.0
        %675 = vmatpush1.msra.mxu0 0.0
        %676 = vmatprep.subr.mxu0 0.0
        %677 = vmatpush1.msra.mxu0 0.0
        %678 = vmatprep.subr.mxu0 0.0
        %679 = vmatpush1.msra.mxu0 0.0
        %680 = vmatprep.subr.mxu0 0.0
        %681 = vmatpush1.msra.mxu0 0.0
        %682 = vmatprep.subr.mxu0 0.0
        %683 = vmatpush1.msra.mxu0 0.0
        %684 = vmatprep.subr.mxu0 0.0
        %685 = vmatpush1.msra.mxu0 0.0
        %686 = vmatprep.subr.mxu0 0.0
        %687 = vmatpush1.msra.mxu0 0.0
        %688 = vmatprep.subr.mxu0 0.0
        %689 = vmatpush1.msra.mxu0 0.0
        %690 = vmatprep.subr.mxu0 0.0
        %691 = vmatpush1.msra.mxu0 0.0
        %692 = vmatprep.subr.mxu0 0.0
        %693 = vmatpush1.msra.mxu0 0.0
        %694 = vmatprep.subr.mxu0 0.0
        %695 = vmatpush1.msra.mxu0 0.0
        %696 = vmatprep.subr.mxu0 0.0
        %697 = vmatpush1.msra.mxu0 0.0
        %698 = vmatprep.subr.mxu0 0.0
        %699 = vmatpush1.msra.mxu0 0.0
        %700 = vmatprep.subr.mxu0 0.0
        %701 = vmatpush1.msra.mxu0 0.0
        %702 = vmatprep.subr.mxu0 0.0
        %703 = vmatpush1.msra.mxu0 0.0
        %704 = vmatprep.subr.mxu0 0.0
        %705 = vmatpush1.msra.mxu0 0.0
        %706 = vmatprep.subr.mxu0 0.0
        %707 = vmatpush1.msra.mxu0 0.0
        %708 = vmatprep.subr.mxu0 0.0
        %709 = vmatpush1.msra.mxu0 0.0
        %710 = vmatprep.subr.mxu0 0.0
        %711 = vmatpush1.msra.mxu0 0.0
        %712 = vmatprep.subr.mxu0 0.0
        %713 = vmatpush1.msra.mxu0 0.0
        %714 = vmatprep.subr.mxu0 0.0
        %715 = vmatpush1.msra.mxu0 0.0
        %716 = vmatprep.mubr.f32.mxu0 0.0
        %717 = vmatmul.mubr.f32.gmra.mrb[0].mxu0 %v339
        %v718 = vpop.f32.mrb[0].mxu0
        %v719 = vadd.f32 0.0, %v718
        %v720 = vpop.f32.mrb[0].mxu0
        %v721 = vadd.f32 0.0, %v720
        %722 = vmatprep.mubr.f32.mxu0 0.0
        %723 = vmatmul.mubr.f32.gmra.mrb[0].mxu0 %v342
        %v724 = vpop.f32.mrb[0].mxu0
        %v725 = vadd.f32 0.0, %v724
        %v726 = vpop.f32.mrb[0].mxu0
        %v727 = vadd.f32 0.0, %v726
        %728 = vdwg.mxu0
        %729 = vmatprep.subr.mxu0 %v314
        %730 = vmatpush1.msra.mxu0 %v313
        %731 = vmatprep.subr.mxu0 0.0
        %732 = vmatpush1.msra.mxu0 0.0
        %733 = vmatprep.subr.mxu0 0.0
        %734 = vmatpush1.msra.mxu0 0.0
        %735 = vmatprep.subr.mxu0 0.0
        %736 = vmatpush1.msra.mxu0 0.0
        %737 = vmatprep.subr.mxu0 0.0
        %738 = vmatpush1.msra.mxu0 0.0
        %739 = vmatprep.subr.mxu0 0.0
        %740 = vmatpush1.msra.mxu0 0.0
        %741 = vmatprep.subr.mxu0 0.0
        %742 = vmatpush1.msra.mxu0 0.0
        %743 = vmatprep.subr.mxu0 0.0
        %744 = vmatpush1.msra.mxu0 0.0
        %745 = vmatprep.subr.mxu0 0.0
        %746 = vmatpush1.msra.mxu0 0.0
        %747 = vmatprep.subr.mxu0 0.0
        %748 = vmatpush1.msra.mxu0 0.0
        %749 = vmatprep.subr.mxu0 0.0
        %750 = vmatpush1.msra.mxu0 0.0
        %751 = vmatprep.subr.mxu0 0.0
        %752 = vmatpush1.msra.mxu0 0.0
        %753 = vmatprep.subr.mxu0 0.0
        %754 = vmatpush1.msra.mxu0 0.0
        %755 = vmatprep.subr.mxu0 0.0
        %756 = vmatpush1.msra.mxu0 0.0
        %757 = vmatprep.subr.mxu0 0.0
        %758 = vmatpush1.msra.mxu0 0.0
        %759 = vmatprep.subr.mxu0 0.0
        %760 = vmatpush1.msra.mxu0 0.0
        %761 = vmatprep.subr.mxu0 0.0
        %762 = vmatpush1.msra.mxu0 0.0
        %763 = vmatprep.subr.mxu0 0.0
        %764 = vmatpush1.msra.mxu0 0.0
        %765 = vmatprep.subr.mxu0 0.0
        %766 = vmatpush1.msra.mxu0 0.0
        %767 = vmatprep.subr.mxu0 0.0
        %768 = vmatpush1.msra.mxu0 0.0
        %769 = vmatprep.subr.mxu0 0.0
        %770 = vmatpush1.msra.mxu0 0.0
        %771 = vmatprep.subr.mxu0 0.0
        %772 = vmatpush1.msra.mxu0 0.0
        %773 = vmatprep.subr.mxu0 0.0
        %774 = vmatpush1.msra.mxu0 0.0
        %775 = vmatprep.subr.mxu0 0.0
        %776 = vmatpush1.msra.mxu0 0.0
        %777 = vmatprep.subr.mxu0 0.0
        %778 = vmatpush1.msra.mxu0 0.0
        %779 = vmatprep.subr.mxu0 0.0
        %780 = vmatpush1.msra.mxu0 0.0
        %781 = vmatprep.subr.mxu0 0.0
        %782 = vmatpush1.msra.mxu0 0.0
        %783 = vmatprep.subr.mxu0 0.0
        %784 = vmatpush1.msra.mxu0 0.0
        %785 = vmatprep.subr.mxu0 0.0
        %786 = vmatpush1.msra.mxu0 0.0
        %787 = vmatprep.subr.mxu0 0.0
        %788 = vmatpush1.msra.mxu0 0.0
        %789 = vmatprep.subr.mxu0 0.0
        %790 = vmatpush1.msra.mxu0 0.0
        %791 = vmatprep.subr.mxu0 0.0
        %792 = vmatpush1.msra.mxu0 0.0
        %793 = vmatprep.mubr.f32.mxu0 0.0
        %794 = vmatmul.mubr.f32.gmra.mrb[0].mxu0 %v339
        %v795 = vpop.f32.mrb[0].mxu0
        %v796 = vadd.f32 0.0, %v795
        %v797 = vpop.f32.mrb[0].mxu0
        %v798 = vadd.f32 0.0, %v797
        %799 = vmatprep.mubr.f32.mxu0 0.0
        %800 = vmatmul.mubr.f32.gmra.mrb[0].mxu0 %v342
        %v801 = vpop.f32.mrb[0].mxu0
        %v802 = vadd.f32 0.0, %v801
        %v803 = vpop.f32.mrb[0].mxu0
        %v804 = vadd.f32 0.0, %v803
        %805 = vdwg.mxu0
        %806 = vmatprep.subr.mxu0 %v316
        %807 = vmatpush1.msra.mxu0 %v315
        %808 = vmatprep.subr.mxu0 0.0
        %809 = vmatpush1.msra.mxu0 0.0
        %810 = vmatprep.subr.mxu0 0.0
        %811 = vmatpush1.msra.mxu0 0.0
        %812 = vmatprep.subr.mxu0 0.0
        %813 = vmatpush1.msra.mxu0 0.0
        %814 = vmatprep.subr.mxu0 0.0
        %815 = vmatpush1.msra.mxu0 0.0
        %816 = vmatprep.subr.mxu0 0.0
        %817 = vmatpush1.msra.mxu0 0.0
        %818 = vmatprep.subr.mxu0 0.0
        %819 = vmatpush1.msra.mxu0 0.0
        %820 = vmatprep.subr.mxu0 0.0
        %821 = vmatpush1.msra.mxu0 0.0
        %822 = vmatprep.subr.mxu0 0.0
        %823 = vmatpush1.msra.mxu0 0.0
        %824 = vmatprep.subr.mxu0 0.0
        %825 = vmatpush1.msra.mxu0 0.0
        %826 = vmatprep.subr.mxu0 0.0
        %827 = vmatpush1.msra.mxu0 0.0
        %828 = vmatprep.subr.mxu0 0.0
        %829 = vmatpush1.msra.mxu0 0.0
        %830 = vmatprep.subr.mxu0 0.0
        %831 = vmatpush1.msra.mxu0 0.0
        %832 = vmatprep.subr.mxu0 0.0
        %833 = vmatpush1.msra.mxu0 0.0
        %834 = vmatprep.subr.mxu0 0.0
        %835 = vmatpush1.msra.mxu0 0.0
        %836 = vmatprep.subr.mxu0 0.0
        %837 = vmatpush1.msra.mxu0 0.0
        %838 = vmatprep.subr.mxu0 0.0
        %839 = vmatpush1.msra.mxu0 0.0
        %840 = vmatprep.subr.mxu0 0.0
        %841 = vmatpush1.msra.mxu0 0.0
        %842 = vmatprep.subr.mxu0 0.0
        %843 = vmatpush1.msra.mxu0 0.0
        %844 = vmatprep.subr.mxu0 0.0
        %845 = vmatpush1.msra.mxu0 0.0
        %846 = vmatprep.subr.mxu0 0.0
        %847 = vmatpush1.msra.mxu0 0.0
        %848 = vmatprep.subr.mxu0 0.0
        %849 = vmatpush1.msra.mxu0 0.0
        %850 = vmatprep.subr.mxu0 0.0
        %851 = vmatpush1.msra.mxu0 0.0
        %852 = vmatprep.subr.mxu0 0.0
        %853 = vmatpush1.msra.mxu0 0.0
        %854 = vmatprep.subr.mxu0 0.0
        %855 = vmatpush1.msra.mxu0 0.0
        %856 = vmatprep.subr.mxu0 0.0
        %857 = vmatpush1.msra.mxu0 0.0
        %858 = vmatprep.subr.mxu0 0.0
        %859 = vmatpush1.msra.mxu0 0.0
        %860 = vmatprep.subr.mxu0 0.0
        %861 = vmatpush1.msra.mxu0 0.0
        %862 = vmatprep.subr.mxu0 0.0
        %863 = vmatpush1.msra.mxu0 0.0
        %864 = vmatprep.subr.mxu0 0.0
        %865 = vmatpush1.msra.mxu0 0.0
        %866 = vmatprep.subr.mxu0 0.0
        %867 = vmatpush1.msra.mxu0 0.0
        %868 = vmatprep.subr.mxu0 0.0
        %869 = vmatpush1.msra.mxu0 0.0
        %870 = vmatprep.mubr.f32.mxu0 0.0
        %871 = vmatmul.mubr.f32.gmra.mrb[0].mxu0 %v339
        %v872 = vpop.f32.mrb[0].mxu0
        %v873 = vadd.f32 0.0, %v872
        %v874 = vpop.f32.mrb[0].mxu0
        %v875 = vadd.f32 0.0, %v874
        %876 = vmatprep.mubr.f32.mxu0 0.0
        %877 = vmatmul.mubr.f32.gmra.mrb[0].mxu0 %v342
        %v878 = vpop.f32.mrb[0].mxu0
        %v879 = vadd.f32 0.0, %v878
        %v880 = vpop.f32.mrb[0].mxu0
        %v881 = vadd.f32 0.0, %v880
        %882 = vdwg.mxu0
        %883 = vmatprep.subr.mxu0 %v318
        %884 = vmatpush1.msra.mxu0 %v317
        %885 = vmatprep.subr.mxu0 0.0
        %886 = vmatpush1.msra.mxu0 0.0
        %887 = vmatprep.subr.mxu0 0.0
        %888 = vmatpush1.msra.mxu0 0.0
        %889 = vmatprep.subr.mxu0 0.0
        %890 = vmatpush1.msra.mxu0 0.0
        %891 = vmatprep.subr.mxu0 0.0
        %892 = vmatpush1.msra.mxu0 0.0
        %893 = vmatprep.subr.mxu0 0.0
        %894 = vmatpush1.msra.mxu0 0.0
        %895 = vmatprep.subr.mxu0 0.0
        %896 = vmatpush1.msra.mxu0 0.0
        %897 = vmatprep.subr.mxu0 0.0
        %898 = vmatpush1.msra.mxu0 0.0
        %899 = vmatprep.subr.mxu0 0.0
        %900 = vmatpush1.msra.mxu0 0.0
        %901 = vmatprep.subr.mxu0 0.0
        %902 = vmatpush1.msra.mxu0 0.0
        %903 = vmatprep.subr.mxu0 0.0
        %904 = vmatpush1.msra.mxu0 0.0
        %905 = vmatprep.subr.mxu0 0.0
        %906 = vmatpush1.msra.mxu0 0.0
        %907 = vmatprep.subr.mxu0 0.0
        %908 = vmatpush1.msra.mxu0 0.0
        %909 = vmatprep.subr.mxu0 0.0
        %910 = vmatpush1.msra.mxu0 0.0
        %911 = vmatprep.subr.mxu0 0.0
        %912 = vmatpush1.msra.mxu0 0.0
        %913 = vmatprep.subr.mxu0 0.0
        %914 = vmatpush1.msra.mxu0 0.0
        %915 = vmatprep.subr.mxu0 0.0
        %916 = vmatpush1.msra.mxu0 0.0
        %917 = vmatprep.subr.mxu0 0.0
        %918 = vmatpush1.msra.mxu0 0.0
        %919 = vmatprep.subr.mxu0 0.0
        %920 = vmatpush1.msra.mxu0 0.0
        %921 = vmatprep.subr.mxu0 0.0
        %922 = vmatpush1.msra.mxu0 0.0
        %923 = vmatprep.subr.mxu0 0.0
        %924 = vmatpush1.msra.mxu0 0.0
        %925 = vmatprep.subr.mxu0 0.0
        %926 = vmatpush1.msra.mxu0 0.0
        %927 = vmatprep.subr.mxu0 0.0
        %928 = vmatpush1.msra.mxu0 0.0
        %929 = vmatprep.subr.mxu0 0.0
        %930 = vmatpush1.msra.mxu0 0.0
        %931 = vmatprep.subr.mxu0 0.0
        %932 = vmatpush1.msra.mxu0 0.0
        %933 = vmatprep.subr.mxu0 0.0
        %934 = vmatpush1.msra.mxu0 0.0
        %935 = vmatprep.subr.mxu0 0.0
        %936 = vmatpush1.msra.mxu0 0.0
        %937 = vmatprep.subr.mxu0 0.0
        %938 = vmatpush1.msra.mxu0 0.0
        %939 = vmatprep.subr.mxu0 0.0
        %940 = vmatpush1.msra.mxu0 0.0
        %941 = vmatprep.subr.mxu0 0.0
        %942 = vmatpush1.msra.mxu0 0.0
        %943 = vmatprep.subr.mxu0 0.0
        %944 = vmatpush1.msra.mxu0 0.0
        %945 = vmatprep.subr.mxu0 0.0
        %946 = vmatpush1.msra.mxu0 0.0
        %947 = vmatprep.mubr.f32.mxu0 0.0
        %948 = vmatmul.mubr.f32.gmra.mrb[0].mxu0 %v339
        %v949 = vpop.f32.mrb[0].mxu0
        %v950 = vadd.f32 0.0, %v949
        %v951 = vpop.f32.mrb[0].mxu0
        %v952 = vadd.f32 0.0, %v951
        %953 = vmatprep.mubr.f32.mxu0 0.0
        %954 = vmatmul.mubr.f32.gmra.mrb[0].mxu0 %v342
        %v955 = vpop.f32.mrb[0].mxu0
        %v956 = vadd.f32 0.0, %v955
        %v957 = vpop.f32.mrb[0].mxu0
        %v958 = vadd.f32 0.0, %v957
        %959 = vdwg.mxu0
        %960 = vmatprep.subr.mxu0 %v320
        %961 = vmatpush1.msra.mxu0 %v319
        %962 = vmatprep.subr.mxu0 0.0
        %963 = vmatpush1.msra.mxu0 0.0
        %964 = vmatprep.subr.mxu0 0.0
        %965 = vmatpush1.msra.mxu0 0.0
        %966 = vmatprep.subr.mxu0 0.0
        %967 = vmatpush1.msra.mxu0 0.0
        %968 = vmatprep.subr.mxu0 0.0
        %969 = vmatpush1.msra.mxu0 0.0
        %970 = vmatprep.subr.mxu0 0.0
        %971 = vmatpush1.msra.mxu0 0.0
        %972 = vmatprep.subr.mxu0 0.0
        %973 = vmatpush1.msra.mxu0 0.0
        %974 = vmatprep.subr.mxu0 0.0
        %975 = vmatpush1.msra.mxu0 0.0
        %976 = vmatprep.subr.mxu0 0.0
        %977 = vmatpush1.msra.mxu0 0.0
        %978 = vmatprep.subr.mxu0 0.0
        %979 = vmatpush1.msra.mxu0 0.0
        %980 = vmatprep.subr.mxu0 0.0
        %981 = vmatpush1.msra.mxu0 0.0
        %982 = vmatprep.subr.mxu0 0.0
        %983 = vmatpush1.msra.mxu0 0.0
        %984 = vmatprep.subr.mxu0 0.0
        %985 = vmatpush1.msra.mxu0 0.0
        %986 = vmatprep.subr.mxu0 0.0
        %987 = vmatpush1.msra.mxu0 0.0
        %988 = vmatprep.subr.mxu0 0.0
        %989 = vmatpush1.msra.mxu0 0.0
        %990 = vmatprep.subr.mxu0 0.0
        %991 = vmatpush1.msra.mxu0 0.0
        %992 = vmatprep.subr.mxu0 0.0
        %993 = vmatpush1.msra.mxu0 0.0
        %994 = vmatprep.subr.mxu0 0.0
        %995 = vmatpush1.msra.mxu0 0.0
        %996 = vmatprep.subr.mxu0 0.0
        %997 = vmatpush1.msra.mxu0 0.0
        %998 = vmatprep.subr.mxu0 0.0
        %999 = vmatpush1.msra.mxu0 0.0
        %1000 = vmatprep.subr.mxu0 0.0
        %1001 = vmatpush1.msra.mxu0 0.0
        %1002 = vmatprep.subr.mxu0 0.0
        %1003 = vmatpush1.msra.mxu0 0.0
        %1004 = vmatprep.subr.mxu0 0.0
        %1005 = vmatpush1.msra.mxu0 0.0
        %1006 = vmatprep.subr.mxu0 0.0
        %1007 = vmatpush1.msra.mxu0 0.0
        %1008 = vmatprep.subr.mxu0 0.0
        %1009 = vmatpush1.msra.mxu0 0.0
        %1010 = vmatprep.subr.mxu0 0.0
        %1011 = vmatpush1.msra.mxu0 0.0
        %1012 = vmatprep.subr.mxu0 0.0
        %1013 = vmatpush1.msra.mxu0 0.0
        %1014 = vmatprep.subr.mxu0 0.0
        %1015 = vmatpush1.msra.mxu0 0.0
        %1016 = vmatprep.subr.mxu0 0.0
        %1017 = vmatpush1.msra.mxu0 0.0
        %1018 = vmatprep.subr.mxu0 0.0
        %1019 = vmatpush1.msra.mxu0 0.0
        %1020 = vmatprep.subr.mxu0 0.0
        %1021 = vmatpush1.msra.mxu0 0.0
        %1022 = vmatprep.subr.mxu0 0.0
        %1023 = vmatpush1.msra.mxu0 0.0
        %1024 = vmatprep.mubr.f32.mxu0 0.0
        %1025 = vmatmul.mubr.f32.gmra.mrb[0].mxu0 %v339
        %v1026 = vpop.f32.mrb[0].mxu0
        %v1027 = vadd.f32 0.0, %v1026
        %v1028 = vpop.f32.mrb[0].mxu0
        %v1029 = vadd.f32 0.0, %v1028
        %1030 = vmatprep.mubr.f32.mxu0 0.0
        %1031 = vmatmul.mubr.f32.gmra.mrb[0].mxu0 %v342
        %v1032 = vpop.f32.mrb[0].mxu0
        %v1033 = vadd.f32 0.0, %v1032
        %v1034 = vpop.f32.mrb[0].mxu0
        %v1035 = vadd.f32 0.0, %v1034
        %1036 = vdwg.mxu0
        %1037 = vmatprep.subr.mxu0 %v322
        %1038 = vmatpush1.msra.mxu0 %v321
        %1039 = vmatprep.subr.mxu0 0.0
        %1040 = vmatpush1.msra.mxu0 0.0
        %1041 = vmatprep.subr.mxu0 0.0
        %1042 = vmatpush1.msra.mxu0 0.0
        %1043 = vmatprep.subr.mxu0 0.0
        %1044 = vmatpush1.msra.mxu0 0.0
        %1045 = vmatprep.subr.mxu0 0.0
        %1046 = vmatpush1.msra.mxu0 0.0
        %1047 = vmatprep.subr.mxu0 0.0
        %1048 = vmatpush1.msra.mxu0 0.0
        %1049 = vmatprep.subr.mxu0 0.0
        %1050 = vmatpush1.msra.mxu0 0.0
        %1051 = vmatprep.subr.mxu0 0.0
        %1052 = vmatpush1.msra.mxu0 0.0
        %1053 = vmatprep.subr.mxu0 0.0
        %1054 = vmatpush1.msra.mxu0 0.0
        %1055 = vmatprep.subr.mxu0 0.0
        %1056 = vmatpush1.msra.mxu0 0.0
        %1057 = vmatprep.subr.mxu0 0.0
        %1058 = vmatpush1.msra.mxu0 0.0
        %1059 = vmatprep.subr.mxu0 0.0
        %1060 = vmatpush1.msra.mxu0 0.0
        %1061 = vmatprep.subr.mxu0 0.0
        %1062 = vmatpush1.msra.mxu0 0.0
        %1063 = vmatprep.subr.mxu0 0.0
        %1064 = vmatpush1.msra.mxu0 0.0
        %1065 = vmatprep.subr.mxu0 0.0
        %1066 = vmatpush1.msra.mxu0 0.0
        %1067 = vmatprep.subr.mxu0 0.0
        %1068 = vmatpush1.msra.mxu0 0.0
        %1069 = vmatprep.subr.mxu0 0.0
        %1070 = vmatpush1.msra.mxu0 0.0
        %1071 = vmatprep.subr.mxu0 0.0
        %1072 = vmatpush1.msra.mxu0 0.0
        %1073 = vmatprep.subr.mxu0 0.0
        %1074 = vmatpush1.msra.mxu0 0.0
        %1075 = vmatprep.subr.mxu0 0.0
        %1076 = vmatpush1.msra.mxu0 0.0
        %1077 = vmatprep.subr.mxu0 0.0
        %1078 = vmatpush1.msra.mxu0 0.0
        %1079 = vmatprep.subr.mxu0 0.0
        %1080 = vmatpush1.msra.mxu0 0.0
        %1081 = vmatprep.subr.mxu0 0.0
        %1082 = vmatpush1.msra.mxu0 0.0
        %1083 = vmatprep.subr.mxu0 0.0
        %1084 = vmatpush1.msra.mxu0 0.0
        %1085 = vmatprep.subr.mxu0 0.0
        %1086 = vmatpush1.msra.mxu0 0.0
        %1087 = vmatprep.subr.mxu0 0.0
        %1088 = vmatpush1.msra.mxu0 0.0
        %1089 = vmatprep.subr.mxu0 0.0
        %1090 = vmatpush1.msra.mxu0 0.0
        %1091 = vmatprep.subr.mxu0 0.0
        %1092 = vmatpush1.msra.mxu0 0.0
        %1093 = vmatprep.subr.mxu0 0.0
        %1094 = vmatpush1.msra.mxu0 0.0
        %1095 = vmatprep.subr.mxu0 0.0
        %1096 = vmatpush1.msra.mxu0 0.0
        %1097 = vmatprep.subr.mxu0 0.0
        %1098 = vmatpush1.msra.mxu0 0.0
        %1099 = vmatprep.subr.mxu0 0.0
        %1100 = vmatpush1.msra.mxu0 0.0
        %1101 = vmatprep.mubr.f32.mxu0 0.0
        %1102 = vmatmul.mubr.f32.gmra.mrb[0].mxu0 %v339
        %v1103 = vpop.f32.mrb[0].mxu0
        %v1104 = vadd.f32 0.0, %v1103
        %v1105 = vpop.f32.mrb[0].mxu0
        %v1106 = vadd.f32 0.0, %v1105
        %1107 = vmatprep.mubr.f32.mxu0 0.0
        %1108 = vmatmul.mubr.f32.gmra.mrb[0].mxu0 %v342
        %v1109 = vpop.f32.mrb[0].mxu0
        %v1110 = vadd.f32 0.0, %v1109
        %v1111 = vpop.f32.mrb[0].mxu0
        %v1112 = vadd.f32 0.0, %v1111
        %1113 = vdwg.mxu0
        %1114 = vmatprep.subr.mxu0 %v324
        %1115 = vmatpush1.msra.mxu0 %v323
        %1116 = vmatprep.subr.mxu0 0.0
        %1117 = vmatpush1.msra.mxu0 0.0
        %1118 = vmatprep.subr.mxu0 0.0
        %1119 = vmatpush1.msra.mxu0 0.0
        %1120 = vmatprep.subr.mxu0 0.0
        %1121 = vmatpush1.msra.mxu0 0.0
        %1122 = vmatprep.subr.mxu0 0.0
        %1123 = vmatpush1.msra.mxu0 0.0
        %1124 = vmatprep.subr.mxu0 0.0
        %1125 = vmatpush1.msra.mxu0 0.0
        %1126 = vmatprep.subr.mxu0 0.0
        %1127 = vmatpush1.msra.mxu0 0.0
        %1128 = vmatprep.subr.mxu0 0.0
        %1129 = vmatpush1.msra.mxu0 0.0
        %1130 = vmatprep.subr.mxu0 0.0
        %1131 = vmatpush1.msra.mxu0 0.0
        %1132 = vmatprep.subr.mxu0 0.0
        %1133 = vmatpush1.msra.mxu0 0.0
        %1134 = vmatprep.subr.mxu0 0.0
        %1135 = vmatpush1.msra.mxu0 0.0
        %1136 = vmatprep.subr.mxu0 0.0
        %1137 = vmatpush1.msra.mxu0 0.0
        %1138 = vmatprep.subr.mxu0 0.0
        %1139 = vmatpush1.msra.mxu0 0.0
        %1140 = vmatprep.subr.mxu0 0.0
        %1141 = vmatpush1.msra.mxu0 0.0
        %1142 = vmatprep.subr.mxu0 0.0
        %1143 = vmatpush1.msra.mxu0 0.0
        %1144 = vmatprep.subr.mxu0 0.0
        %1145 = vmatpush1.msra.mxu0 0.0
        %1146 = vmatprep.subr.mxu0 0.0
        %1147 = vmatpush1.msra.mxu0 0.0
        %1148 = vmatprep.subr.mxu0 0.0
        %1149 = vmatpush1.msra.mxu0 0.0
        %1150 = vmatprep.subr.mxu0 0.0
        %1151 = vmatpush1.msra.mxu0 0.0
        %1152 = vmatprep.subr.mxu0 0.0
        %1153 = vmatpush1.msra.mxu0 0.0
        %1154 = vmatprep.subr.mxu0 0.0
        %1155 = vmatpush1.msra.mxu0 0.0
        %1156 = vmatprep.subr.mxu0 0.0
        %1157 = vmatpush1.msra.mxu0 0.0
        %1158 = vmatprep.subr.mxu0 0.0
        %1159 = vmatpush1.msra.mxu0 0.0
        %1160 = vmatprep.subr.mxu0 0.0
        %1161 = vmatpush1.msra.mxu0 0.0
        %1162 = vmatprep.subr.mxu0 0.0
        %1163 = vmatpush1.msra.mxu0 0.0
        %1164 = vmatprep.subr.mxu0 0.0
        %1165 = vmatpush1.msra.mxu0 0.0
        %1166 = vmatprep.subr.mxu0 0.0
        %1167 = vmatpush1.msra.mxu0 0.0
        %1168 = vmatprep.subr.mxu0 0.0
        %1169 = vmatpush1.msra.mxu0 0.0
        %1170 = vmatprep.subr.mxu0 0.0
        %1171 = vmatpush1.msra.mxu0 0.0
        %1172 = vmatprep.subr.mxu0 0.0
        %1173 = vmatpush1.msra.mxu0 0.0
        %1174 = vmatprep.subr.mxu0 0.0
        %1175 = vmatpush1.msra.mxu0 0.0
        %1176 = vmatprep.subr.mxu0 0.0
        %1177 = vmatpush1.msra.mxu0 0.0
        %1178 = vmatprep.mubr.f32.mxu0 0.0
        %1179 = vmatmul.mubr.f32.gmra.mrb[0].mxu0 %v339
        %v1180 = vpop.f32.mrb[0].mxu0
        %v1181 = vadd.f32 0.0, %v1180
        %v1182 = vpop.f32.mrb[0].mxu0
        %v1183 = vadd.f32 0.0, %v1182
        %1184 = vmatprep.mubr.f32.mxu0 0.0
        %1185 = vmatmul.mubr.f32.gmra.mrb[0].mxu0 %v342
        %v1186 = vpop.f32.mrb[0].mxu0
        %v1187 = vadd.f32 0.0, %v1186
        %v1188 = vpop.f32.mrb[0].mxu0
        %v1189 = vadd.f32 0.0, %v1188
        %1190 = vdwg.mxu0
        %1191 = vmatprep.subr.mxu0 %v326
        %1192 = vmatpush1.msra.mxu0 %v325
        %1193 = vmatprep.subr.mxu0 0.0
        %1194 = vmatpush1.msra.mxu0 0.0
        %1195 = vmatprep.subr.mxu0 0.0
        %1196 = vmatpush1.msra.mxu0 0.0
        %1197 = vmatprep.subr.mxu0 0.0
        %1198 = vmatpush1.msra.mxu0 0.0
        %1199 = vmatprep.subr.mxu0 0.0
        %1200 = vmatpush1.msra.mxu0 0.0
        %1201 = vmatprep.subr.mxu0 0.0
        %1202 = vmatpush1.msra.mxu0 0.0
        %1203 = vmatprep.subr.mxu0 0.0
        %1204 = vmatpush1.msra.mxu0 0.0
        %1205 = vmatprep.subr.mxu0 0.0
        %1206 = vmatpush1.msra.mxu0 0.0
        %1207 = vmatprep.subr.mxu0 0.0
        %1208 = vmatpush1.msra.mxu0 0.0
        %1209 = vmatprep.subr.mxu0 0.0
        %1210 = vmatpush1.msra.mxu0 0.0
        %1211 = vmatprep.subr.mxu0 0.0
        %1212 = vmatpush1.msra.mxu0 0.0
        %1213 = vmatprep.subr.mxu0 0.0
        %1214 = vmatpush1.msra.mxu0 0.0
        %1215 = vmatprep.subr.mxu0 0.0
        %1216 = vmatpush1.msra.mxu0 0.0
        %1217 = vmatprep.subr.mxu0 0.0
        %1218 = vmatpush1.msra.mxu0 0.0
        %1219 = vmatprep.subr.mxu0 0.0
        %1220 = vmatpush1.msra.mxu0 0.0
        %1221 = vmatprep.subr.mxu0 0.0
        %1222 = vmatpush1.msra.mxu0 0.0
        %1223 = vmatprep.subr.mxu0 0.0
        %1224 = vmatpush1.msra.mxu0 0.0
        %1225 = vmatprep.subr.mxu0 0.0
        %1226 = vmatpush1.msra.mxu0 0.0
        %1227 = vmatprep.subr.mxu0 0.0
        %1228 = vmatpush1.msra.mxu0 0.0
        %1229 = vmatprep.subr.mxu0 0.0
        %1230 = vmatpush1.msra.mxu0 0.0
        %1231 = vmatprep.subr.mxu0 0.0
        %1232 = vmatpush1.msra.mxu0 0.0
        %1233 = vmatprep.subr.mxu0 0.0
        %1234 = vmatpush1.msra.mxu0 0.0
        %1235 = vmatprep.subr.mxu0 0.0
        %1236 = vmatpush1.msra.mxu0 0.0
        %1237 = vmatprep.subr.mxu0 0.0
        %1238 = vmatpush1.msra.mxu0 0.0
        %1239 = vmatprep.subr.mxu0 0.0
        %1240 = vmatpush1.msra.mxu0 0.0
        %1241 = vmatprep.subr.mxu0 0.0
        %1242 = vmatpush1.msra.mxu0 0.0
        %1243 = vmatprep.subr.mxu0 0.0
        %1244 = vmatpush1.msra.mxu0 0.0
        %1245 = vmatprep.subr.mxu0 0.0
        %1246 = vmatpush1.msra.mxu0 0.0
        %1247 = vmatprep.subr.mxu0 0.0
        %1248 = vmatpush1.msra.mxu0 0.0
        %1249 = vmatprep.subr.mxu0 0.0
        %1250 = vmatpush1.msra.mxu0 0.0
        %1251 = vmatprep.subr.mxu0 0.0
        %1252 = vmatpush1.msra.mxu0 0.0
        %1253 = vmatprep.subr.mxu0 0.0
        %1254 = vmatpush1.msra.mxu0 0.0
        %1255 = vmatprep.mubr.f32.mxu0 0.0
        %1256 = vmatmul.mubr.f32.gmra.mrb[0].mxu0 %v339
        %v1257 = vpop.f32.mrb[0].mxu0
        %v1258 = vadd.f32 0.0, %v1257
        %v1259 = vpop.f32.mrb[0].mxu0
        %v1260 = vadd.f32 0.0, %v1259
        %1261 = vmatprep.mubr.f32.mxu0 0.0
        %1262 = vmatmul.mubr.f32.gmra.mrb[0].mxu0 %v342
        %v1263 = vpop.f32.mrb[0].mxu0
        %v1264 = vadd.f32 0.0, %v1263
        %v1265 = vpop.f32.mrb[0].mxu0
        %v1266 = vadd.f32 0.0, %v1265
        %1267 = vdwg.mxu0
        %1268 = vmatprep.subr.mxu0 %v328
        %1269 = vmatpush1.msra.mxu0 %v327
        %1270 = vmatprep.subr.mxu0 0.0
        %1271 = vmatpush1.msra.mxu0 0.0
        %1272 = vmatprep.subr.mxu0 0.0
        %1273 = vmatpush1.msra.mxu0 0.0
        %1274 = vmatprep.subr.mxu0 0.0
        %1275 = vmatpush1.msra.mxu0 0.0
        %1276 = vmatprep.subr.mxu0 0.0
        %1277 = vmatpush1.msra.mxu0 0.0
        %1278 = vmatprep.subr.mxu0 0.0
        %1279 = vmatpush1.msra.mxu0 0.0
        %1280 = vmatprep.subr.mxu0 0.0
        %1281 = vmatpush1.msra.mxu0 0.0
        %1282 = vmatprep.subr.mxu0 0.0
        %1283 = vmatpush1.msra.mxu0 0.0
        %1284 = vmatprep.subr.mxu0 0.0
        %1285 = vmatpush1.msra.mxu0 0.0
        %1286 = vmatprep.subr.mxu0 0.0
        %1287 = vmatpush1.msra.mxu0 0.0
        %1288 = vmatprep.subr.mxu0 0.0
        %1289 = vmatpush1.msra.mxu0 0.0
        %1290 = vmatprep.subr.mxu0 0.0
        %1291 = vmatpush1.msra.mxu0 0.0
        %1292 = vmatprep.subr.mxu0 0.0
        %1293 = vmatpush1.msra.mxu0 0.0
        %1294 = vmatprep.subr.mxu0 0.0
        %1295 = vmatpush1.msra.mxu0 0.0
        %1296 = vmatprep.subr.mxu0 0.0
        %1297 = vmatpush1.msra.mxu0 0.0
        %1298 = vmatprep.subr.mxu0 0.0
        %1299 = vmatpush1.msra.mxu0 0.0
        %1300 = vmatprep.subr.mxu0 0.0
        %1301 = vmatpush1.msra.mxu0 0.0
        %1302 = vmatprep.subr.mxu0 0.0
        %1303 = vmatpush1.msra.mxu0 0.0
        %1304 = vmatprep.subr.mxu0 0.0
        %1305 = vmatpush1.msra.mxu0 0.0
        %1306 = vmatprep.subr.mxu0 0.0
        %1307 = vmatpush1.msra.mxu0 0.0
        %1308 = vmatprep.subr.mxu0 0.0
        %1309 = vmatpush1.msra.mxu0 0.0
        %1310 = vmatprep.subr.mxu0 0.0
        %1311 = vmatpush1.msra.mxu0 0.0
        %1312 = vmatprep.subr.mxu0 0.0
        %1313 = vmatpush1.msra.mxu0 0.0
        %1314 = vmatprep.subr.mxu0 0.0
        %1315 = vmatpush1.msra.mxu0 0.0
        %1316 = vmatprep.subr.mxu0 0.0
        %1317 = vmatpush1.msra.mxu0 0.0
        %1318 = vmatprep.subr.mxu0 0.0
        %1319 = vmatpush1.msra.mxu0 0.0
        %1320 = vmatprep.subr.mxu0 0.0
        %1321 = vmatpush1.msra.mxu0 0.0
        %1322 = vmatprep.subr.mxu0 0.0
        %1323 = vmatpush1.msra.mxu0 0.0
        %1324 = vmatprep.subr.mxu0 0.0
        %1325 = vmatpush1.msra.mxu0 0.0
        %1326 = vmatprep.subr.mxu0 0.0
        %1327 = vmatpush1.msra.mxu0 0.0
        %1328 = vmatprep.subr.mxu0 0.0
        %1329 = vmatpush1.msra.mxu0 0.0
        %1330 = vmatprep.subr.mxu0 0.0
        %1331 = vmatpush1.msra.mxu0 0.0
        %1332 = vmatprep.mubr.f32.mxu0 0.0
        %1333 = vmatmul.mubr.f32.gmra.mrb[0].mxu0 %v339
        %v1334 = vpop.f32.mrb[0].mxu0
        %v1335 = vadd.f32 0.0, %v1334
        %v1336 = vpop.f32.mrb[0].mxu0
        %v1337 = vadd.f32 0.0, %v1336
        %1338 = vmatprep.mubr.f32.mxu0 0.0
        %1339 = vmatmul.mubr.f32.gmra.mrb[0].mxu0 %v342
        %v1340 = vpop.f32.mrb[0].mxu0
        %v1341 = vadd.f32 0.0, %v1340
        %v1342 = vpop.f32.mrb[0].mxu0
        %v1343 = vadd.f32 0.0, %v1342
        %1344 = vdwg.mxu0
        %1345 = vmatprep.subr.mxu0 %v330
        %1346 = vmatpush1.msra.mxu0 %v329
        %1347 = vmatprep.subr.mxu0 0.0
        %1348 = vmatpush1.msra.mxu0 0.0
        %1349 = vmatprep.subr.mxu0 0.0
        %1350 = vmatpush1.msra.mxu0 0.0
        %1351 = vmatprep.subr.mxu0 0.0
        %1352 = vmatpush1.msra.mxu0 0.0
        %1353 = vmatprep.subr.mxu0 0.0
        %1354 = vmatpush1.msra.mxu0 0.0
        %1355 = vmatprep.subr.mxu0 0.0
        %1356 = vmatpush1.msra.mxu0 0.0
        %1357 = vmatprep.subr.mxu0 0.0
        %1358 = vmatpush1.msra.mxu0 0.0
        %1359 = vmatprep.subr.mxu0 0.0
        %1360 = vmatpush1.msra.mxu0 0.0
        %1361 = vmatprep.subr.mxu0 0.0
        %1362 = vmatpush1.msra.mxu0 0.0
        %1363 = vmatprep.subr.mxu0 0.0
        %1364 = vmatpush1.msra.mxu0 0.0
        %1365 = vmatprep.subr.mxu0 0.0
        %1366 = vmatpush1.msra.mxu0 0.0
        %1367 = vmatprep.subr.mxu0 0.0
        %1368 = vmatpush1.msra.mxu0 0.0
        %1369 = vmatprep.subr.mxu0 0.0
        %1370 = vmatpush1.msra.mxu0 0.0
        %1371 = vmatprep.subr.mxu0 0.0
        %1372 = vmatpush1.msra.mxu0 0.0
        %1373 = vmatprep.subr.mxu0 0.0
        %1374 = vmatpush1.msra.mxu0 0.0
        %1375 = vmatprep.subr.mxu0 0.0
        %1376 = vmatpush1.msra.mxu0 0.0
        %1377 = vmatprep.subr.mxu0 0.0
        %1378 = vmatpush1.msra.mxu0 0.0
        %1379 = vmatprep.subr.mxu0 0.0
        %1380 = vmatpush1.msra.mxu0 0.0
        %1381 = vmatprep.subr.mxu0 0.0
        %1382 = vmatpush1.msra.mxu0 0.0
        %1383 = vmatprep.subr.mxu0 0.0
        %1384 = vmatpush1.msra.mxu0 0.0
        %1385 = vmatprep.subr.mxu0 0.0
        %1386 = vmatpush1.msra.mxu0 0.0
        %1387 = vmatprep.subr.mxu0 0.0
        %1388 = vmatpush1.msra.mxu0 0.0
        %1389 = vmatprep.subr.mxu0 0.0
        %1390 = vmatpush1.msra.mxu0 0.0
        %1391 = vmatprep.subr.mxu0 0.0
        %1392 = vmatpush1.msra.mxu0 0.0
        %1393 = vmatprep.subr.mxu0 0.0
        %1394 = vmatpush1.msra.mxu0 0.0
        %1395 = vmatprep.subr.mxu0 0.0
        %1396 = vmatpush1.msra.mxu0 0.0
        %1397 = vmatprep.subr.mxu0 0.0
        %1398 = vmatpush1.msra.mxu0 0.0
        %1399 = vmatprep.subr.mxu0 0.0
        %1400 = vmatpush1.msra.mxu0 0.0
        %1401 = vmatprep.subr.mxu0 0.0
        %1402 = vmatpush1.msra.mxu0 0.0
        %1403 = vmatprep.subr.mxu0 0.0
        %1404 = vmatpush1.msra.mxu0 0.0
        %1405 = vmatprep.subr.mxu0 0.0
        %1406 = vmatpush1.msra.mxu0 0.0
        %1407 = vmatprep.subr.mxu0 0.0
        %1408 = vmatpush1.msra.mxu0 0.0
        %1409 = vmatprep.mubr.f32.mxu0 0.0
        %1410 = vmatmul.mubr.f32.gmra.mrb[0].mxu0 %v339
        %v1411 = vpop.f32.mrb[0].mxu0
        %v1412 = vadd.f32 0.0, %v1411
        %v1413 = vpop.f32.mrb[0].mxu0
        %v1414 = vadd.f32 0.0, %v1413
        %1415 = vmatprep.mubr.f32.mxu0 0.0
        %1416 = vmatmul.mubr.f32.gmra.mrb[0].mxu0 %v342
        %v1417 = vpop.f32.mrb[0].mxu0
        %v1418 = vadd.f32 0.0, %v1417
        %v1419 = vpop.f32.mrb[0].mxu0
        %v1420 = vadd.f32 0.0, %v1419
        %1421 = vdwg.mxu0
        %1422 = vmatprep.subr.mxu0 %v332
        %1423 = vmatpush1.msra.mxu0 %v331
        %1424 = vmatprep.subr.mxu0 0.0
        %1425 = vmatpush1.msra.mxu0 0.0
        %1426 = vmatprep.subr.mxu0 0.0
        %1427 = vmatpush1.msra.mxu0 0.0
        %1428 = vmatprep.subr.mxu0 0.0
        %1429 = vmatpush1.msra.mxu0 0.0
        %1430 = vmatprep.subr.mxu0 0.0
        %1431 = vmatpush1.msra.mxu0 0.0
        %1432 = vmatprep.subr.mxu0 0.0
        %1433 = vmatpush1.msra.mxu0 0.0
        %1434 = vmatprep.subr.mxu0 0.0
        %1435 = vmatpush1.msra.mxu0 0.0
        %1436 = vmatprep.subr.mxu0 0.0
        %1437 = vmatpush1.msra.mxu0 0.0
        %1438 = vmatprep.subr.mxu0 0.0
        %1439 = vmatpush1.msra.mxu0 0.0
        %1440 = vmatprep.subr.mxu0 0.0
        %1441 = vmatpush1.msra.mxu0 0.0
        %1442 = vmatprep.subr.mxu0 0.0
        %1443 = vmatpush1.msra.mxu0 0.0
        %1444 = vmatprep.subr.mxu0 0.0
        %1445 = vmatpush1.msra.mxu0 0.0
        %1446 = vmatprep.subr.mxu0 0.0
        %1447 = vmatpush1.msra.mxu0 0.0
        %1448 = vmatprep.subr.mxu0 0.0
        %1449 = vmatpush1.msra.mxu0 0.0
        %1450 = vmatprep.subr.mxu0 0.0
        %1451 = vmatpush1.msra.mxu0 0.0
        %1452 = vmatprep.subr.mxu0 0.0
        %1453 = vmatpush1.msra.mxu0 0.0
        %1454 = vmatprep.subr.mxu0 0.0
        %1455 = vmatpush1.msra.mxu0 0.0
        %1456 = vmatprep.subr.mxu0 0.0
        %1457 = vmatpush1.msra.mxu0 0.0
        %1458 = vmatprep.subr.mxu0 0.0
        %1459 = vmatpush1.msra.mxu0 0.0
        %1460 = vmatprep.subr.mxu0 0.0
        %1461 = vmatpush1.msra.mxu0 0.0
        %1462 = vmatprep.subr.mxu0 0.0
        %1463 = vmatpush1.msra.mxu0 0.0
        %1464 = vmatprep.subr.mxu0 0.0
        %1465 = vmatpush1.msra.mxu0 0.0
        %1466 = vmatprep.subr.mxu0 0.0
        %1467 = vmatpush1.msra.mxu0 0.0
        %1468 = vmatprep.subr.mxu0 0.0
        %1469 = vmatpush1.msra.mxu0 0.0
        %1470 = vmatprep.subr.mxu0 0.0
        %1471 = vmatpush1.msra.mxu0 0.0
        %1472 = vmatprep.subr.mxu0 0.0
        %1473 = vmatpush1.msra.mxu0 0.0
        %1474 = vmatprep.subr.mxu0 0.0
        %1475 = vmatpush1.msra.mxu0 0.0
        %1476 = vmatprep.subr.mxu0 0.0
        %1477 = vmatpush1.msra.mxu0 0.0
        %1478 = vmatprep.subr.mxu0 0.0
        %1479 = vmatpush1.msra.mxu0 0.0
        %1480 = vmatprep.subr.mxu0 0.0
        %1481 = vmatpush1.msra.mxu0 0.0
        %1482 = vmatprep.subr.mxu0 0.0
        %1483 = vmatpush1.msra.mxu0 0.0
        %1484 = vmatprep.subr.mxu0 0.0
        %1485 = vmatpush1.msra.mxu0 0.0
        %1486 = vmatprep.mubr.f32.mxu0 0.0
        %1487 = vmatmul.mubr.f32.gmra.mrb[0].mxu0 %v339
        %v1488 = vpop.f32.mrb[0].mxu0
        %v1489 = vadd.f32 0.0, %v1488
        %v1490 = vpop.f32.mrb[0].mxu0
        %v1491 = vadd.f32 0.0, %v1490
        %1492 = vmatprep.mubr.f32.mxu0 0.0
        %1493 = vmatmul.mubr.f32.gmra.mrb[0].mxu0 %v342
        %v1494 = vpop.f32.mrb[0].mxu0
        %v1495 = vadd.f32 0.0, %v1494
        %v1496 = vpop.f32.mrb[0].mxu0
        %v1497 = vadd.f32 0.0, %v1496
        %1498 = vdwg.mxu0
        %1499 = vmatprep.subr.mxu0 %v334
        %1500 = vmatpush1.msra.mxu0 %v333
        %1501 = vmatprep.subr.mxu0 0.0
        %1502 = vmatpush1.msra.mxu0 0.0
        %1503 = vmatprep.subr.mxu0 0.0
        %1504 = vmatpush1.msra.mxu0 0.0
        %1505 = vmatprep.subr.mxu0 0.0
        %1506 = vmatpush1.msra.mxu0 0.0
        %1507 = vmatprep.subr.mxu0 0.0
        %1508 = vmatpush1.msra.mxu0 0.0
        %1509 = vmatprep.subr.mxu0 0.0
        %1510 = vmatpush1.msra.mxu0 0.0
        %1511 = vmatprep.subr.mxu0 0.0
        %1512 = vmatpush1.msra.mxu0 0.0
        %1513 = vmatprep.subr.mxu0 0.0
        %1514 = vmatpush1.msra.mxu0 0.0
        %1515 = vmatprep.subr.mxu0 0.0
        %1516 = vmatpush1.msra.mxu0 0.0
        %1517 = vmatprep.subr.mxu0 0.0
        %1518 = vmatpush1.msra.mxu0 0.0
        %1519 = vmatprep.subr.mxu0 0.0
        %1520 = vmatpush1.msra.mxu0 0.0
        %1521 = vmatprep.subr.mxu0 0.0
        %1522 = vmatpush1.msra.mxu0 0.0
        %1523 = vmatprep.subr.mxu0 0.0
        %1524 = vmatpush1.msra.mxu0 0.0
        %1525 = vmatprep.subr.mxu0 0.0
        %1526 = vmatpush1.msra.mxu0 0.0
        %1527 = vmatprep.subr.mxu0 0.0
        %1528 = vmatpush1.msra.mxu0 0.0
        %1529 = vmatprep.subr.mxu0 0.0
        %1530 = vmatpush1.msra.mxu0 0.0
        %1531 = vmatprep.subr.mxu0 0.0
        %1532 = vmatpush1.msra.mxu0 0.0
        %1533 = vmatprep.subr.mxu0 0.0
        %1534 = vmatpush1.msra.mxu0 0.0
        %1535 = vmatprep.subr.mxu0 0.0
        %1536 = vmatpush1.msra.mxu0 0.0
        %1537 = vmatprep.subr.mxu0 0.0
        %1538 = vmatpush1.msra.mxu0 0.0
        %1539 = vmatprep.subr.mxu0 0.0
        %1540 = vmatpush1.msra.mxu0 0.0
        %1541 = vmatprep.subr.mxu0 0.0
        %1542 = vmatpush1.msra.mxu0 0.0
        %1543 = vmatprep.subr.mxu0 0.0
        %1544 = vmatpush1.msra.mxu0 0.0
        %1545 = vmatprep.subr.mxu0 0.0
        %1546 = vmatpush1.msra.mxu0 0.0
        %1547 = vmatprep.subr.mxu0 0.0
        %1548 = vmatpush1.msra.mxu0 0.0
        %1549 = vmatprep.subr.mxu0 0.0
        %1550 = vmatpush1.msra.mxu0 0.0
        %1551 = vmatprep.subr.mxu0 0.0
        %1552 = vmatpush1.msra.mxu0 0.0
        %1553 = vmatprep.subr.mxu0 0.0
        %1554 = vmatpush1.msra.mxu0 0.0
        %1555 = vmatprep.subr.mxu0 0.0
        %1556 = vmatpush1.msra.mxu0 0.0
        %1557 = vmatprep.subr.mxu0 0.0
        %1558 = vmatpush1.msra.mxu0 0.0
        %1559 = vmatprep.subr.mxu0 0.0
        %1560 = vmatpush1.msra.mxu0 0.0
        %1561 = vmatprep.subr.mxu0 0.0
        %1562 = vmatpush1.msra.mxu0 0.0
        %1563 = vmatprep.mubr.f32.mxu0 0.0
        %1564 = vmatmul.mubr.f32.gmra.mrb[0].mxu0 %v339
        %v1565 = vpop.f32.mrb[0].mxu0
        %v1566 = vadd.f32 0.0, %v1565
        %v1567 = vpop.f32.mrb[0].mxu0
        %v1568 = vadd.f32 0.0, %v1567
        %1569 = vmatprep.mubr.f32.mxu0 0.0
        %1570 = vmatmul.mubr.f32.gmra.mrb[0].mxu0 %v342
        %v1571 = vpop.f32.mrb[0].mxu0
        %v1572 = vadd.f32 0.0, %v1571
        %v1573 = vpop.f32.mrb[0].mxu0
        %v1574 = vadd.f32 0.0, %v1573
        %1575 = vdwg.mxu0
        %1576 = vst [vmem:[%s187] sm:$0xff] %v411
        %1577 = vst [vmem:[%s187 + $0x8] sm:$0xff] %v413
        %1578 = vst [vmem:[%s187 + $0x10] sm:$0xff] %v488
        %1579 = vst [vmem:[%s187 + $0x18] sm:$0xff] %v490
        %1580 = vst [vmem:[%s187 + $0x20] sm:$0xff] %v565
        %1581 = vst [vmem:[%s187 + $0x28] sm:$0xff] %v567
        %1582 = vst [vmem:[%s187 + $0x30] sm:$0xff] %v642
        %1583 = vst [vmem:[%s187 + $0x38] sm:$0xff] %v644
        %1584 = vst [vmem:[%s187 + $0x40] sm:$0xff] %v719
        %1585 = vst [vmem:[%s187 + $0x48] sm:$0xff] %v721
        %1586 = vst [vmem:[%s187 + $0x50] sm:$0xff] %v796
        %1587 = vst [vmem:[%s187 + $0x58] sm:$0xff] %v798
        %1588 = vst [vmem:[%s187 + $0x60] sm:$0xff] %v873
        %1589 = vst [vmem:[%s187 + $0x68] sm:$0xff] %v875
        %1590 = vst [vmem:[%s187 + $0x70] sm:$0xff] %v950
        %1591 = vst [vmem:[%s187 + $0x78] sm:$0xff] %v952
        %1592 = vst [vmem:[%s187 + $0x80] sm:$0xff] %v1027
        %1593 = vst [vmem:[%s187 + $0x88] sm:$0xff] %v1029
        %1594 = vst [vmem:[%s187 + $0x90] sm:$0xff] %v1104
        %1595 = vst [vmem:[%s187 + $0x98] sm:$0xff] %v1106
        %1596 = vst [vmem:[%s187 + $0xa0] sm:$0xff] %v1181
        %1597 = vst [vmem:[%s187 + $0xa8] sm:$0xff] %v1183
        %1598 = vst [vmem:[%s187 + $0xb0] sm:$0xff] %v1258
        %1599 = vst [vmem:[%s187 + $0xb8] sm:$0xff] %v1260
        %1600 = vst [vmem:[%s187 + $0xc0] sm:$0xff] %v1335
        %1601 = vst [vmem:[%s187 + $0xc8] sm:$0xff] %v1337
        %1602 = vst [vmem:[%s187 + $0xd0] sm:$0xff] %v1412
        %1603 = vst [vmem:[%s187 + $0xd8] sm:$0xff] %v1414
        %1604 = vst [vmem:[%s187 + $0xe0] sm:$0xff] %v1489
        %1605 = vst [vmem:[%s187 + $0xe8] sm:$0xff] %v1491
        %1606 = vst [vmem:[%s187 + $0xf0] sm:$0xff] %v1566
        %1607 = vst [vmem:[%s187 + $0xf8] sm:$0xff] %v1568
        %1608 = vst [vmem:[%s187 + $0x100] sm:$0xff] %v417
        %1609 = vst [vmem:[%s187 + $0x108] sm:$0xff] %v419
        %1610 = vst [vmem:[%s187 + $0x110] sm:$0xff] %v494
        %1611 = vst [vmem:[%s187 + $0x118] sm:$0xff] %v496
        %1612 = vst [vmem:[%s187 + $0x120] sm:$0xff] %v571
        %1613 = vst [vmem:[%s187 + $0x128] sm:$0xff] %v573
        %1614 = vst [vmem:[%s187 + $0x130] sm:$0xff] %v648
        %1615 = vst [vmem:[%s187 + $0x138] sm:$0xff] %v650
        %1616 = vst [vmem:[%s187 + $0x140] sm:$0xff] %v725
        %1617 = vst [vmem:[%s187 + $0x148] sm:$0xff] %v727
        %1618 = vst [vmem:[%s187 + $0x150] sm:$0xff] %v802
        %1619 = vst [vmem:[%s187 + $0x158] sm:$0xff] %v804
        %1620 = vst [vmem:[%s187 + $0x160] sm:$0xff] %v879
        %1621 = vst [vmem:[%s187 + $0x168] sm:$0xff] %v881
        %1622 = vst [vmem:[%s187 + $0x170] sm:$0xff] %v956
        %1623 = vst [vmem:[%s187 + $0x178] sm:$0xff] %v958
        %1624 = vst [vmem:[%s187 + $0x180] sm:$0xff] %v1033
        %1625 = vst [vmem:[%s187 + $0x188] sm:$0xff] %v1035
        %1626 = vst [vmem:[%s187 + $0x190] sm:$0xff] %v1110
        %1627 = vst [vmem:[%s187 + $0x198] sm:$0xff] %v1112
        %1628 = vst [vmem:[%s187 + $0x1a0] sm:$0xff] %v1187
        %1629 = vst [vmem:[%s187 + $0x1a8] sm:$0xff] %v1189
        %1630 = vst [vmem:[%s187 + $0x1b0] sm:$0xff] %v1264
        %1631 = vst [vmem:[%s187 + $0x1b8] sm:$0xff] %v1266
        %1632 = vst [vmem:[%s187 + $0x1c0] sm:$0xff] %v1341
        %1633 = vst [vmem:[%s187 + $0x1c8] sm:$0xff] %v1343
        %1634 = vst [vmem:[%s187 + $0x1d0] sm:$0xff] %v1418
        %1635 = vst [vmem:[%s187 + $0x1d8] sm:$0xff] %v1420
        %1636 = vst [vmem:[%s187 + $0x1e0] sm:$0xff] %v1495
        %1637 = vst [vmem:[%s187 + $0x1e8] sm:$0xff] %v1497
        %1638 = vst [vmem:[%s187 + $0x1f0] sm:$0xff] %v1572
        %1639 = vst [vmem:[%s187 + $0x1f8] sm:$0xff] %v1574
        %s1640 = sand.u32 %s112, 1
        %s1641 = sand.u32 %s112, 1
        %s1642 = smul.addr %s1641, 512
        %s1643 = scalar_lea.vmem [#allocation2], %s1642
        // Predicated region
        $region37: #{netG_forward.9} parent=35 // pred_check
          %p1644 = pneg %p122
        $region38: #{netG_forward.9} parent=35 // pred_check_branch
          %1646 = sbr.rel (%p1644) target = $region40
        $region39: #{netG_forward.9} parent=35 // pred_region
          %s1647 = smul.u32 32, %s15
          %s1648 = smul.addr %s1647, 8
          %s1649 = scalar_lea.vmem %s4, %s1648
          // Predicated region
          $region41: #{netG_forward.9} parent=39 // pred_check
            _
          $region42: #{netG_forward.9} parent=39 // pred_check_branch
            %1651 = sbr.rel (0) target = $region44
          $region43: #{netG_forward.9} parent=39 // pred_region
            // Predicated region
            $region45: #{netG_forward.9} parent=43 // pred_check
              _
            $region46: #{netG_forward.9} parent=43 // pred_check_branch
              %1653 = sbr.rel (0) target = $region48
            $region47: #{netG_forward.9} parent=43 // pred_region
              loop: start=0, step=1, limit=1
              $region49: #{netG_forward.9} parent=47 // loop_pre_header
                _
              $region50: #{netG_forward.9} parent=47 // loop_header
                %s1655 = sphi 0, %s1659
                %p1656 = scmp.ge.s32.totalorder %s1655, 1
                %s1660 = sphi %s1643, %s1643
                %s1661 = sphi %s1649, %s1649
              $region51: #{netG_forward.9} parent=47 // loop_header_branch
                %1658 = sbr.rel (%p1656) target = $region55
              $region52: #{netG_forward.9} parent=47 // loop_body
                %v1662 = vld [vmem:[%s1660] sm:$0xff]
                %1663 = vst [vmem:[%s1661] sm:$0xff] %v1662
                %v1664 = vld [vmem:[%s1660 + $0x8] sm:$0xff]
                %1665 = vst [vmem:[%s1661 + $0x8] sm:$0xff] %v1664
                %v1666 = vld [vmem:[%s1660 + $0x10] sm:$0xff]
                %1667 = vst [vmem:[%s1661 + $0x10] sm:$0xff] %v1666
                %v1668 = vld [vmem:[%s1660 + $0x18] sm:$0xff]
                %1669 = vst [vmem:[%s1661 + $0x18] sm:$0xff] %v1668
                %v1670 = vld [vmem:[%s1660 + $0x20] sm:$0xff]
                %1671 = vst [vmem:[%s1661 + $0x20] sm:$0xff] %v1670
                %v1672 = vld [vmem:[%s1660 + $0x28] sm:$0xff]
                %1673 = vst [vmem:[%s1661 + $0x28] sm:$0xff] %v1672
                %v1674 = vld [vmem:[%s1660 + $0x30] sm:$0xff]
                %1675 = vst [vmem:[%s1661 + $0x30] sm:$0xff] %v1674
                %v1676 = vld [vmem:[%s1660 + $0x38] sm:$0xff]
                %1677 = vst [vmem:[%s1661 + $0x38] sm:$0xff] %v1676
                %v1678 = vld [vmem:[%s1660 + $0x40] sm:$0xff]
                %1679 = vst [vmem:[%s1661 + $0x40] sm:$0xff] %v1678
                %v1680 = vld [vmem:[%s1660 + $0x48] sm:$0xff]
                %1681 = vst [vmem:[%s1661 + $0x48] sm:$0xff] %v1680
                %v1682 = vld [vmem:[%s1660 + $0x50] sm:$0xff]
                %1683 = vst [vmem:[%s1661 + $0x50] sm:$0xff] %v1682
                %v1684 = vld [vmem:[%s1660 + $0x58] sm:$0xff]
                %1685 = vst [vmem:[%s1661 + $0x58] sm:$0xff] %v1684
                %v1686 = vld [vmem:[%s1660 + $0x60] sm:$0xff]
                %1687 = vst [vmem:[%s1661 + $0x60] sm:$0xff] %v1686
                %v1688 = vld [vmem:[%s1660 + $0x68] sm:$0xff]
                %1689 = vst [vmem:[%s1661 + $0x68] sm:$0xff] %v1688
                %v1690 = vld [vmem:[%s1660 + $0x70] sm:$0xff]
                %1691 = vst [vmem:[%s1661 + $0x70] sm:$0xff] %v1690
                %v1692 = vld [vmem:[%s1660 + $0x78] sm:$0xff]
                %1693 = vst [vmem:[%s1661 + $0x78] sm:$0xff] %v1692
                %v1694 = vld [vmem:[%s1660 + $0x80] sm:$0xff]
                %1695 = vst [vmem:[%s1661 + $0x80] sm:$0xff] %v1694
                %v1696 = vld [vmem:[%s1660 + $0x88] sm:$0xff]
                %1697 = vst [vmem:[%s1661 + $0x88] sm:$0xff] %v1696
                %v1698 = vld [vmem:[%s1660 + $0x90] sm:$0xff]
                %1699 = vst [vmem:[%s1661 + $0x90] sm:$0xff] %v1698
                %v1700 = vld [vmem:[%s1660 + $0x98] sm:$0xff]
                %1701 = vst [vmem:[%s1661 + $0x98] sm:$0xff] %v1700
                %v1702 = vld [vmem:[%s1660 + $0xa0] sm:$0xff]
                %1703 = vst [vmem:[%s1661 + $0xa0] sm:$0xff] %v1702
                %v1704 = vld [vmem:[%s1660 + $0xa8] sm:$0xff]
                %1705 = vst [vmem:[%s1661 + $0xa8] sm:$0xff] %v1704
                %v1706 = vld [vmem:[%s1660 + $0xb0] sm:$0xff]
                %1707 = vst [vmem:[%s1661 + $0xb0] sm:$0xff] %v1706
                %v1708 = vld [vmem:[%s1660 + $0xb8] sm:$0xff]
                %1709 = vst [vmem:[%s1661 + $0xb8] sm:$0xff] %v1708
                %v1710 = vld [vmem:[%s1660 + $0xc0] sm:$0xff]
                %1711 = vst [vmem:[%s1661 + $0xc0] sm:$0xff] %v1710
                %v1712 = vld [vmem:[%s1660 + $0xc8] sm:$0xff]
                %1713 = vst [vmem:[%s1661 + $0xc8] sm:$0xff] %v1712
                %v1714 = vld [vmem:[%s1660 + $0xd0] sm:$0xff]
                %1715 = vst [vmem:[%s1661 + $0xd0] sm:$0xff] %v1714
                %v1716 = vld [vmem:[%s1660 + $0xd8] sm:$0xff]
                %1717 = vst [vmem:[%s1661 + $0xd8] sm:$0xff] %v1716
                %v1718 = vld [vmem:[%s1660 + $0xe0] sm:$0xff]
                %1719 = vst [vmem:[%s1661 + $0xe0] sm:$0xff] %v1718
                %v1720 = vld [vmem:[%s1660 + $0xe8] sm:$0xff]
                %1721 = vst [vmem:[%s1661 + $0xe8] sm:$0xff] %v1720
                %v1722 = vld [vmem:[%s1660 + $0xf0] sm:$0xff]
                %1723 = vst [vmem:[%s1661 + $0xf0] sm:$0xff] %v1722
                %v1724 = vld [vmem:[%s1660 + $0xf8] sm:$0xff]
                %1725 = vst [vmem:[%s1661 + $0xf8] sm:$0xff] %v1724
                %v1726 = vld [vmem:[%s1660 + $0x100] sm:$0xff]
                %1727 = vst [vmem:[%s1661 + $0x200] sm:$0xff] %v1726
                %v1728 = vld [vmem:[%s1660 + $0x108] sm:$0xff]
                %1729 = vst [vmem:[%s1661 + $0x208] sm:$0xff] %v1728
                %v1730 = vld [vmem:[%s1660 + $0x110] sm:$0xff]
                %1731 = vst [vmem:[%s1661 + $0x210] sm:$0xff] %v1730
                %v1732 = vld [vmem:[%s1660 + $0x118] sm:$0xff]
                %1733 = vst [vmem:[%s1661 + $0x218] sm:$0xff] %v1732
                %v1734 = vld [vmem:[%s1660 + $0x120] sm:$0xff]
                %1735 = vst [vmem:[%s1661 + $0x220] sm:$0xff] %v1734
                %v1736 = vld [vmem:[%s1660 + $0x128] sm:$0xff]
                %1737 = vst [vmem:[%s1661 + $0x228] sm:$0xff] %v1736
                %v1738 = vld [vmem:[%s1660 + $0x130] sm:$0xff]
                %1739 = vst [vmem:[%s1661 + $0x230] sm:$0xff] %v1738
                %v1740 = vld [vmem:[%s1660 + $0x138] sm:$0xff]
                %1741 = vst [vmem:[%s1661 + $0x238] sm:$0xff] %v1740
                %v1742 = vld [vmem:[%s1660 + $0x140] sm:$0xff]
                %1743 = vst [vmem:[%s1661 + $0x240] sm:$0xff] %v1742
                %v1744 = vld [vmem:[%s1660 + $0x148] sm:$0xff]
                %1745 = vst [vmem:[%s1661 + $0x248] sm:$0xff] %v1744
                %v1746 = vld [vmem:[%s1660 + $0x150] sm:$0xff]
                %1747 = vst [vmem:[%s1661 + $0x250] sm:$0xff] %v1746
                %v1748 = vld [vmem:[%s1660 + $0x158] sm:$0xff]
                %1749 = vst [vmem:[%s1661 + $0x258] sm:$0xff] %v1748
                %v1750 = vld [vmem:[%s1660 + $0x160] sm:$0xff]
                %1751 = vst [vmem:[%s1661 + $0x260] sm:$0xff] %v1750
                %v1752 = vld [vmem:[%s1660 + $0x168] sm:$0xff]
                %1753 = vst [vmem:[%s1661 + $0x268] sm:$0xff] %v1752
                %v1754 = vld [vmem:[%s1660 + $0x170] sm:$0xff]
                %1755 = vst [vmem:[%s1661 + $0x270] sm:$0xff] %v1754
                %v1756 = vld [vmem:[%s1660 + $0x178] sm:$0xff]
                %1757 = vst [vmem:[%s1661 + $0x278] sm:$0xff] %v1756
                %v1758 = vld [vmem:[%s1660 + $0x180] sm:$0xff]
                %1759 = vst [vmem:[%s1661 + $0x280] sm:$0xff] %v1758
                %v1760 = vld [vmem:[%s1660 + $0x188] sm:$0xff]
                %1761 = vst [vmem:[%s1661 + $0x288] sm:$0xff] %v1760
                %v1762 = vld [vmem:[%s1660 + $0x190] sm:$0xff]
                %1763 = vst [vmem:[%s1661 + $0x290] sm:$0xff] %v1762
                %v1764 = vld [vmem:[%s1660 + $0x198] sm:$0xff]
                %1765 = vst [vmem:[%s1661 + $0x298] sm:$0xff] %v1764
                %v1766 = vld [vmem:[%s1660 + $0x1a0] sm:$0xff]
                %1767 = vst [vmem:[%s1661 + $0x2a0] sm:$0xff] %v1766
                %v1768 = vld [vmem:[%s1660 + $0x1a8] sm:$0xff]
                %1769 = vst [vmem:[%s1661 + $0x2a8] sm:$0xff] %v1768
                %v1770 = vld [vmem:[%s1660 + $0x1b0] sm:$0xff]
                %1771 = vst [vmem:[%s1661 + $0x2b0] sm:$0xff] %v1770
                %v1772 = vld [vmem:[%s1660 + $0x1b8] sm:$0xff]
                %1773 = vst [vmem:[%s1661 + $0x2b8] sm:$0xff] %v1772
                %v1774 = vld [vmem:[%s1660 + $0x1c0] sm:$0xff]
                %1775 = vst [vmem:[%s1661 + $0x2c0] sm:$0xff] %v1774
                %v1776 = vld [vmem:[%s1660 + $0x1c8] sm:$0xff]
                %1777 = vst [vmem:[%s1661 + $0x2c8] sm:$0xff] %v1776
                %v1778 = vld [vmem:[%s1660 + $0x1d0] sm:$0xff]
                %1779 = vst [vmem:[%s1661 + $0x2d0] sm:$0xff] %v1778
                %v1780 = vld [vmem:[%s1660 + $0x1d8] sm:$0xff]
                %1781 = vst [vmem:[%s1661 + $0x2d8] sm:$0xff] %v1780
                %v1782 = vld [vmem:[%s1660 + $0x1e0] sm:$0xff]
                %1783 = vst [vmem:[%s1661 + $0x2e0] sm:$0xff] %v1782
                %v1784 = vld [vmem:[%s1660 + $0x1e8] sm:$0xff]
                %1785 = vst [vmem:[%s1661 + $0x2e8] sm:$0xff] %v1784
                %v1786 = vld [vmem:[%s1660 + $0x1f0] sm:$0xff]
                %1787 = vst [vmem:[%s1661 + $0x2f0] sm:$0xff] %v1786
                %v1788 = vld [vmem:[%s1660 + $0x1f8] sm:$0xff]
                %1789 = vst [vmem:[%s1661 + $0x2f8] sm:$0xff] %v1788
              $region53: #{netG_forward.9} parent=47 // loop_footer
                %s1659 = sadd.s32 1, %s1655
              $region54: #{netG_forward.9} parent=47 // loop_footer_branch
                %1654 = sbr.rel target = $region50
              $region55: #{netG_forward.9} parent=47 // loop_exit
                _
            $region48: #{netG_forward.9} parent=43 // pred_fallthru
              _
            // Predicated region
            $region56: #{netG_forward.9} parent=43 // pred_check
              _
            $region57: #{netG_forward.9} parent=43 // pred_check_branch
              %1791 = sbr.rel target = $region59
            $region58: #{netG_forward.9} parent=43 // pred_region
              _
            $region59: #{netG_forward.9} parent=43 // pred_fallthru
              _
          $region44: #{netG_forward.9} parent=39 // pred_fallthru
            _
          %1792 = vnop
        $region40: #{netG_forward.9} parent=35 // pred_fallthru
          _
      $region36: #{netG_forward.9} parent=5 // pred_fallthru
        _
      %p1793 = scmp.le.s32.totalorder 2, %s10
      // Predicated region
      $region60: #{netG_forward.9} parent=5 // pred_check
        %p1794 = pneg %p1793
      $region61: #{netG_forward.9} parent=5 // pred_check_branch
        %1796 = sbr.rel (%p1794) target = $region63
      $region62: #{netG_forward.9} parent=5 // pred_region
        %s1797 = ssub.s32 %s10, 2
        // Predicated region
        $region64: #{netG_forward.9} parent=62 // pred_check
          %p1798 = pneg %p128
        $region65: #{netG_forward.9} parent=62 // pred_check_branch
          %1800 = sbr.rel (%p1798) target = $region67
        $region66: #{netG_forward.9} parent=62 // pred_region
          %s1801 = sand.u32 %s113, 1
          %s1802 = sand.u32 %s113, 1
          %s1803 = smul.addr %s1802, 512
          %s1804 = scalar_lea.vmem [#allocation2], %s1803
        $region67: #{netG_forward.9} parent=62 // pred_fallthru
          _
      $region63: #{netG_forward.9} parent=5 // pred_fallthru
        _
    $region6: #{netG_forward.9} parent=1 // loop_footer
      %s14 = sadd.s32 1, %s10
    $region7: #{netG_forward.9} parent=1 // loop_footer_branch
      %9 = sbr.rel target = $region3
    $region8: #{netG_forward.9} parent=1 // loop_exit
      _

// kernel: squeeze.151
$region0: #{squeeze.151}
  %s0 = inlined_call_operand.vmem [shape: f32[8192], index: 0, kind: input, shape index: {}]
  %s1 = inlined_call_operand.vmem [shape: f32[2,64,64,1], index: 1, kind: output, shape index: {}]
  %v2 = vld [vmem:[%s0] sm:$0xff]
  %vm3 = vcmask 523264
  %4 = vst.msk [vmem:[%s1] ss:$2 sm:$0xff] %vm3, %v2
  %s5 = scalar_lea.vmem %s0, 8
  %v6 = vld [vmem:[%s5] sm:$0xff]
  %vm7 = vcmask 523264
  %s8 = scalar_lea.vmem %s1, 16
  %9 = vst.msk [vmem:[%s8] ss:$2 sm:$0xff] %vm7, %v6
  %s10 = scalar_lea.vmem %s0, 16
  %v11 = vld [vmem:[%s10] sm:$0xff]
  %vm12 = vcmask 523264
  %s13 = scalar_lea.vmem %s1, 32
  %14 = vst.msk [vmem:[%s13] ss:$2 sm:$0xff] %vm12, %v11
  %s15 = scalar_lea.vmem %s0, 24
  %v16 = vld [vmem:[%s15] sm:$0xff]
  %vm17 = vcmask 523264
  %s18 = scalar_lea.vmem %s1, 48
  %19 = vst.msk [vmem:[%s18] ss:$2 sm:$0xff] %vm17, %v16
  %s20 = scalar_lea.vmem %s0, 32
  %v21 = vld [vmem:[%s20] sm:$0xff]
  %vm22 = vcmask 523264
  %s23 = scalar_lea.vmem %s1, 64
  %24 = vst.msk [vmem:[%s23] ss:$2 sm:$0xff] %vm22, %v21
  %s25 = scalar_lea.vmem %s0, 40
  %v26 = vld [vmem:[%s25] sm:$0xff]
  %vm27 = vcmask 523264
  %s28 = scalar_lea.vmem %s1, 80
  %29 = vst.msk [vmem:[%s28] ss:$2 sm:$0xff] %vm27, %v26
  %s30 = scalar_lea.vmem %s0, 48
  %v31 = vld [vmem:[%s30] sm:$0xff]
  %vm32 = vcmask 523264
  %s33 = scalar_lea.vmem %s1, 96
  %34 = vst.msk [vmem:[%s33] ss:$2 sm:$0xff] %vm32, %v31
  %s35 = scalar_lea.vmem %s0, 56
  %v36 = vld [vmem:[%s35] sm:$0xff]
  %vm37 = vcmask 523264
  %s38 = scalar_lea.vmem %s1, 112
  %39 = vst.msk [vmem:[%s38] ss:$2 sm:$0xff] %vm37, %v36
  %v40 = vld [vmem:[%s0] sm:$0xff]
  %41 = vrot.lane.b32.xlu0 %v40, 64
  %v42 = vpop.permute.xlu0 %41
  %vm43 = vcmask 523264
  %s44 = scalar_lea.vmem %s1, 1
  %45 = vst.msk [vmem:[%s44] ss:$2 sm:$0xff] %vm43, %v42
  %s46 = scalar_lea.vmem %s0, 16
  %v47 = vld [vmem:[%s46] sm:$0xff]
  %48 = vrot.lane.b32.xlu0 %v47, 64
  %v49 = vpop.permute.xlu0 %48
  %vm50 = vcmask 523264
  %s51 = scalar_lea.vmem %s1, 33
  %52 = vst.msk [vmem:[%s51] ss:$2 sm:$0xff] %vm50, %v49
  %s53 = scalar_lea.vmem %s0, 32
  %v54 = vld [vmem:[%s53] sm:$0xff]
  %55 = vrot.lane.b32.xlu0 %v54, 64
  %v56 = vpop.permute.xlu0 %55
  %vm57 = vcmask 523264
  %s58 = scalar_lea.vmem %s1, 65
  %59 = vst.msk [vmem:[%s58] ss:$2 sm:$0xff] %vm57, %v56
  %s60 = scalar_lea.vmem %s0, 48
  %v61 = vld [vmem:[%s60] sm:$0xff]
  %62 = vrot.lane.b32.xlu0 %v61, 64
  %v63 = vpop.permute.xlu0 %62
  %vm64 = vcmask 523264
  %s65 = scalar_lea.vmem %s1, 97
  %66 = vst.msk [vmem:[%s65] ss:$2 sm:$0xff] %vm64, %v63
  %s67 = scalar_lea.vmem %s0, 8
  %v68 = vld [vmem:[%s67] sm:$0xff]
  %69 = vrot.lane.b32.xlu0 %v68, 64
  %v70 = vpop.permute.xlu0 %69
  %vm71 = vcmask 523264
  %s72 = scalar_lea.vmem %s1, 17
  %73 = vst.msk [vmem:[%s72] ss:$2 sm:$0xff] %vm71, %v70
  %s74 = scalar_lea.vmem %s0, 24
  %v75 = vld [vmem:[%s74] sm:$0xff]
  %76 = vrot.lane.b32.xlu0 %v75, 64
  %v77 = vpop.permute.xlu0 %76
  %vm78 = vcmask 523264
  %s79 = scalar_lea.vmem %s1, 49
  %80 = vst.msk [vmem:[%s79] ss:$2 sm:$0xff] %vm78, %v77
  %s81 = scalar_lea.vmem %s0, 40
  %v82 = vld [vmem:[%s81] sm:$0xff]
  %83 = vrot.lane.b32.xlu0 %v82, 64
  %v84 = vpop.permute.xlu0 %83
  %vm85 = vcmask 523264
  %s86 = scalar_lea.vmem %s1, 81
  %87 = vst.msk [vmem:[%s86] ss:$2 sm:$0xff] %vm85, %v84
  %s88 = scalar_lea.vmem %s0, 56
  %v89 = vld [vmem:[%s88] sm:$0xff]
  %90 = vrot.lane.b32.xlu0 %v89, 64
  %v91 = vpop.permute.xlu0 %90
  %vm92 = vcmask 523264
  %s93 = scalar_lea.vmem %s1, 113
  %94 = vst.msk [vmem:[%s93] ss:$2 sm:$0xff] %vm92, %v91

</llo_original>
